<compile_context>
chip_gen: v6e
topology: v6e:2x2x1
jax: 0.10.0
libtpu: 0.0.40
codegen_flags: <defaults>
</compile_context>

<pallas_src>
import functools
import numpy as np

import jax
import jax.numpy as jnp
from jax.experimental import pallas as pl
from jax.experimental.pallas import tpu as pltpu


def _round_up(x, m):
    return (x + m - 1) // m * m


# ----------------------------- 1) log-mel kernel -----------------------------

def _logmel_kernel(f_ref, trig_ref, mel2_ref, o_ref):
    # trig = [window*cos | window*sin] (n_fft, 2*n_freq padded to 128) -> one MXU
    # pass gives re and im; mel2 stacks the mel filterbank for both halves so
    # (re^2 + im^2) @ fb == (y*y) @ mel2.  Output is lane-dense (rows, 128).
    y = jnp.dot(f_ref[...], trig_ref[...], preferred_element_type=jnp.float32)
    q = y * y
    m = jnp.dot(q, mel2_ref[...], preferred_element_type=jnp.float32)
    o_ref[...] = jnp.log(m + 1e-8)


def logmel_call(frames, trig, mel2):
    R, n_fft = frames.shape
    Kc = trig.shape[1]
    TR = 256                                   # row tile (double-buffered pipeline)
    if R < TR:
        TR = _round_up(R, 8)
    Rp = _round_up(R, TR)
    if Rp != R:
        frames = jnp.pad(frames, ((0, Rp - R), (0, 0)))
    out = pl.pallas_call(
        _logmel_kernel,
        out_shape=jax.ShapeDtypeStruct((Rp, 128), jnp.float32),
        grid=(Rp // TR,),
        in_specs=[
            pl.BlockSpec((TR, n_fft), lambda i: (i, 0)),
            pl.BlockSpec((n_fft, Kc), lambda i: (0, 0)),
            pl.BlockSpec((Kc, 128), lambda i: (0, 0)),
        ],
        out_specs=pl.BlockSpec((TR, 128), lambda i: (i, 0)),
        compiler_params=pltpu.CompilerParams(dimension_semantics=("parallel",)),
    )(frames, trig, mel2)
    return out[:R]


# ----------------------------- 2) front-end kernel -----------------------------

def _frontend_kernel(lm_ref, wt_ref, bt_ref, ww_ref, bw_ref, sh_ref, o_ref,
                     *, Wo, n_mels, Ct, Cw):
    Ts = lm_ref.shape[1]
    base = lm_ref[0]                                   # (Ts, 128) f32, mels on lanes [0, n_mels)
    lane = jax.lax.broadcasted_iota(jnp.int32, (Ts, 128), 1)

    # im2col patch built in VMEM: lane group [dt*n_mels, (dt+1)*n_mels) holds the
    # log-mel row at time offset dt (output row r covers conv time r-3).
    patch = jnp.zeros((Ts, 128), jnp.float32)
    for dt in range(8):
        sh_rows = pltpu.roll(base, shift=(3 - dt) % Ts, axis=0)
        placed = pltpu.roll(sh_rows, shift=dt * n_mels, axis=1) if dt else sh_rows
        sel = (lane >= dt * n_mels) & (lane < (dt + 1) * n_mels)
        patch = jnp.where(sel, placed, patch)
    patch = patch.astype(jnp.bfloat16)

    # --- timbral block: packed matmuls, 4 conv heights per matmul ---
    bt = bt_ref[...]                                   # hoisted (tiled bias, BN scale folded)
    acc = jnp.zeros((Ts, 128), jnp.float32)            # 0-init == implicit ReLU
    for mm in range(wt_ref.shape[0]):
        y = jnp.dot(patch, wt_ref[mm], preferred_element_type=jnp.float32) + bt
        acc = jnp.maximum(acc, y)
    # max over the 4 height groups of Ct lanes: roll-max lane tree.
    acc = jnp.maximum(acc, pltpu.roll(acc, shift=64, axis=1))
    acc = jnp.maximum(acc, pltpu.roll(acc, shift=32, axis=1))   # lane l: max for channel l % Ct

    # --- temporal block: ONE block-diagonal matmul, 16 mel groups of Cw lanes ---
    yw = jnp.dot(patch, ww_ref[...], preferred_element_type=jnp.float32) + bw_ref[...]
    yw = jnp.maximum(yw, 0.0)
    yw = jnp.maximum(yw, pltpu.roll(yw, shift=64, axis=1))
    yw = jnp.maximum(yw, pltpu.roll(yw, shift=32, axis=1))
    yw = jnp.maximum(yw, pltpu.roll(yw, shift=16, axis=1))
    yw = jnp.maximum(yw, pltpu.roll(yw, shift=8, axis=1))       # lane l: max for channel l % Cw

    # channel concat on lanes [0, Ct+Cw) + BN shifts, rows outside the valid
    # window masked to 0 (this is the zero padding the mid-end relies on).
    fe = jnp.where(lane < Ct, acc, jnp.where(lane < Ct + Cw, yw, 0.0)) + sh_ref[...]
    rows = jax.lax.broadcasted_iota(jnp.int32, (Ts, 1), 0)
    rvalid = (rows >= 3) & (rows < 3 + Wo)
    o_ref[0] = jnp.where(rvalid, fe, 0.0)


def frontend_call(lm_slab, Wtim, btim, Wtem, btem, shC, *, Wo, n_mels, Ct, Cw):
    B, Ts, _ = lm_slab.shape
    kern = functools.partial(_frontend_kernel, Wo=Wo, n_mels=n_mels, Ct=Ct, Cw=Cw)
    return pl.pallas_call(
        kern,
        out_shape=jax.ShapeDtypeStruct((B, Ts, 128), jnp.float32),
        grid=(B,),
        in_specs=[
            pl.BlockSpec((1, Ts, 128), lambda b: (b, 0, 0)),
            pl.BlockSpec(Wtim.shape, lambda b: (0, 0, 0)),
            pl.BlockSpec((1, 128), lambda b: (0, 0)),
            pl.BlockSpec(Wtem.shape, lambda b: (0, 0)),
            pl.BlockSpec((1, 128), lambda b: (0, 0)),
            pl.BlockSpec((1, 128), lambda b: (0, 0)),
        ],
        out_specs=pl.BlockSpec((1, Ts, 128), lambda b: (b, 0, 0)),
        compiler_params=pltpu.CompilerParams(dimension_semantics=("parallel",)),
    )(lm_slab, Wtim, btim, Wtem, btem, shC)


# ----------------------------- 3) mid-end + pooling kernel -----------------------------

def _midpool_kernel(fe_ref, w1_ref, b1_ref, t1_ref, w2_ref, b2_ref, s2_ref, t2_ref,
                    w3_ref, b3_ref, o_ref, *, T):
    Ts = fe_ref.shape[1]
    rows = jax.lax.broadcasted_iota(jnp.int32, (Ts, 1), 0)
    valid = (rows >= 3) & (rows < 3 + T)
    neg = jnp.float32(-1e30)
    inv_T = jnp.float32(1.0 / T)

    def conv7(x, w_ref, bias):
        # 'same' Conv1d(k=7) as ONE im2col matmul: 7 rolled slabs lane-concatenated.
        taps = [pltpu.roll(x, shift=(3 - j) % Ts, axis=0) for j in range(7)]
        patch = jnp.concatenate(taps, axis=1).astype(jnp.bfloat16)     # (Ts, 896)
        return jnp.dot(patch, w_ref[...], preferred_element_type=jnp.float32) + bias

    def pool_into(p, g):
        # interleaved pooling: write each piece's max/mean as soon as produced.
        o_ref[0, g:g + 1, :] = jnp.max(jnp.where(valid, p, neg), axis=0, keepdims=True)
        o_ref[0, g + 4:g + 5, :] = jnp.sum(p, axis=0, keepdims=True) * inv_T

    slab0 = fe_ref[0]                                    # (Ts, 128), zero outside valid rows
    pool_into(slab0, 0)
    # conv1 -> relu -> BN1 (scale folded into w1/b1, shift added after relu)
    a1 = conv7(slab0, w1_ref, b1_ref[...])
    bn1 = jnp.where(valid, jnp.maximum(a1, 0.0) + t1_ref[...], 0.0)
    pool_into(bn1, 1)
    # conv2 -> relu ; BN2 affine ; residual
    a2 = conv7(bn1, w2_ref, b2_ref[...])
    c2 = jnp.where(valid, jnp.maximum(a2, 0.0), 0.0)
    bn2 = jnp.where(valid, c2 * s2_ref[...] + t2_ref[...], 0.0)
    res2 = c2 + bn1
    pool_into(res2, 2)
    # conv3 -> relu ; residual  (batch_norm3 unused by the torch forward)
    a3 = conv7(bn2, w3_ref, b3_ref[...])
    res3 = res2 + jnp.where(valid, jnp.maximum(a3, 0.0), 0.0)
    pool_into(res3, 3)


def midpool_call(fe_slab, KP, *, T):
    B, Ts, _ = fe_slab.shape
    kern = functools.partial(_midpool_kernel, T=T)
    w_spec = pl.BlockSpec((7 * 128, 128), lambda b: (0, 0))
    v_spec = pl.BlockSpec((1, 128), lambda b: (0, 0))
    return pl.pallas_call(
        kern,
        out_shape=jax.ShapeDtypeStruct((B, 8, 128), jnp.float32),
        grid=(B,),
        in_specs=[pl.BlockSpec((1, Ts, 128), lambda b: (b, 0, 0)),
                  w_spec, v_spec, v_spec,
                  w_spec, v_spec, v_spec, v_spec,
                  w_spec, v_spec],
        out_specs=pl.BlockSpec((1, 8, 128), lambda b: (b, 0, 0)),
        compiler_params=pltpu.CompilerParams(dimension_semantics=("parallel",)),
    )(fe_slab, KP["W1f"], KP["b1f"], KP["t1s"],
      KP["W2f"], KP["b2r"], KP["s2r"], KP["t2r"],
      KP["W3f"], KP["b3r"])


# ----------------------------- 4) dense head kernel -----------------------------

def _head_kernel(p_ref, w1_ref, b1_ref, w2_ref, b2_ref, o_ref):
    d1 = jnp.dot(p_ref[...], w1_ref[...], preferred_element_type=jnp.float32) + b1_ref[...]
    d1 = jnp.maximum(d1, 0.0)                            # relu(dense1), BN(flat) folded
    y = jnp.dot(d1, w2_ref[...], preferred_element_type=jnp.float32) + b2_ref[...]
    o_ref[...] = jax.nn.sigmoid(y)


def head_call(pooled, Wd1e, bd1, Wd2, bd2):
    B = pooled.shape[0]
    return pl.pallas_call(
        _head_kernel,
        out_shape=jax.ShapeDtypeStruct((B, 128), jnp.float32),
    )(pooled, Wd1e, bd1, Wd2, bd2)


# ----------------------------- forward pass -----------------------------

def musicnn_forward(x, KP, cfg):
    B, S = x.shape
    n_fft, hop, n_mels = cfg["n_fft"], cfg["hop"], cfg["n_mels"]
    k_w = cfg["k_w"]
    Ct, Cw = cfg["Ct"], cfg["Cw"]

    # ---- log-mel spectrogram ----
    # TODO(synk): the STFT reflect pad + overlapping-frame gather is an irregular
    # strided gather with no rectangular BlockSpec form; it stays in plain JAX.
    pad = n_fft // 2
    xp = jnp.pad(x.astype(jnp.float32), ((0, 0), (pad, pad)), mode="reflect")
    T = 1 + S // hop
    idx = jnp.arange(T)[:, None] * hop + jnp.arange(n_fft)[None, :]
    frames = xp[:, idx].reshape(B * T, n_fft)
    lm = logmel_call(frames, KP["trig"], KP["mel2"])     # (B*T, 128), mels on lanes [0, n_mels)
    lm = lm.reshape(B, T, 128)

    # ---- front-end (conv output width; both blocks produce the same width) ----
    Wo = T + 2 * 3 - 8 + 1
    pad_w = (k_w - 1) // 2
    assert Wo == T + 2 * pad_w - k_w + 1
    Ts = _round_up(T + 6, 8)                             # 3 left zeros + >=3 right zeros
    slab = jnp.pad(lm, ((0, 0), (3, Ts - T - 3), (0, 0)))  # zero pad == conv zero padding
    fe_slab = frontend_call(slab, KP["Wtim"], KP["btim"], KP["Wtem"], KP["btem"], KP["shC"],
                            Wo=Wo, n_mels=n_mels, Ct=Ct, Cw=Cw)   # (B, Ts, 128)

    # ---- mid-end + temporal pooling (gridded over batch) ----
    pooled = midpool_call(fe_slab, KP, T=Wo)             # (B, 8, 128) lane-aligned pooled groups

    # ---- back-end dense head, batched over B ----
    out = head_call(pooled.reshape(B, 8 * 128), KP["Wd1e"], KP["bd1r"], KP["Wd2p"], KP["bd2p"])
    return out[:, :50]


# ----------------------------- parameters -----------------------------

def mel_filterbank(n_freqs, n_mels, sample_rate):
    # torchaudio melscale_fbanks: mel_scale='htk', norm='slaney', f_min=0, f_max=sr/2
    all_freqs = np.linspace(0.0, sample_rate / 2.0, n_freqs)
    hz2mel = lambda f: 2595.0 * np.log10(1.0 + f / 700.0)
    mel2hz = lambda m: 700.0 * (10.0 ** (m / 2595.0) - 1.0)
    m_pts = np.linspace(hz2mel(0.0), hz2mel(sample_rate / 2.0), n_mels + 2)
    f_pts = mel2hz(m_pts)
    f_diff = np.diff(f_pts)
    slopes = f_pts[None, :] - all_freqs[:, None]
    down = -slopes[:, :-2] / f_diff[:-1]
    up = slopes[:, 2:] / f_diff[1:]
    fb = np.maximum(0.0, np.minimum(down, up))
    enorm = 2.0 / (f_pts[2:n_mels + 2] - f_pts[:n_mels])
    return (fb * enorm[None, :]).astype(np.float32)      # (n_freqs, n_mels)


def init_linear(key, shape, fan_in):
    kw, kb = jax.random.split(key)
    bound = 1.0 / np.sqrt(fan_in)
    W = jax.random.uniform(kw, shape, jnp.float32, -bound, bound)
    b = jax.random.uniform(kb, (shape[-1],), jnp.float32, -bound, bound)
    return W, b


def init_bn(key, n):
    kg, kb = jax.random.split(key)
    gamma = jax.random.uniform(kg, (n,), jnp.float32, 0.8, 1.2)
    beta = jax.random.uniform(kb, (n,), jnp.float32, -0.1, 0.1)
    eps = 1e-5
    scale = gamma / jnp.sqrt(1.0 + eps)   # running_mean=0, running_var=1 (fresh module, eval)
    return scale, beta


def make_params(key, cfg):
    ks = list(jax.random.split(key, 16))
    Ct, Cw, F = cfg["Ct"], cfg["Cw"], cfg["F"]
    Cf = Ct + Cw
    C_mid = Cf + 3 * F
    P = {}
    P["Wt"], P["bt"] = init_linear(ks[0], (cfg["k_h"] * 8, Ct), cfg["k_h"] * 8)
    P["bn_t_s"], P["bn_t_t"] = init_bn(ks[1], Ct)
    P["Ww"], P["bw"] = init_linear(ks[2], (cfg["k_w"], Cw), cfg["k_w"])
    P["bn_w_s"], P["bn_w_t"] = init_bn(ks[3], Cw)
    P["W1"], P["b1"] = init_linear(ks[4], (7, Cf, F), Cf * 7)
    P["bn1_s"], P["bn1_t"] = init_bn(ks[5], F)
    P["W2"], P["b2"] = init_linear(ks[6], (7, F, F), F * 7)
    P["bn2_s"], P["bn2_t"] = init_bn(ks[7], F)
    P["W3"], P["b3"] = init_linear(ks[8], (7, F, F), F * 7)
    P["bn_flat_s"], P["bn_flat_t"] = init_bn(ks[9], 2 * C_mid)
    P["Wd1"], P["bd1"] = init_linear(ks[10], (2 * C_mid, 200), 2 * C_mid)
    P["bn_d_s"], P["bn_d_t"] = init_bn(ks[11], 200)
    P["Wd2"], P["bd2"] = init_linear(ks[12], (200, 50), 200)
    return P


def _row128(v):
    v = np.asarray(v, np.float32).reshape(-1)
    out = np.zeros((1, 128), np.float32)
    out[0, :v.shape[0]] = v
    return jnp.asarray(out)


def prepare_kernel_params(P, cfg):
    """Host-side packing: fold eval-mode BN affines into weights (gamma>0 under
    this init so the relu/scale commutation is valid; real checkpoints would
    need the full running-stats fold), fold the hann window into the DFT
    matrix, and pack conv taps / heights / mel rows into the MXU K and N
    dimensions so every kernel runs a small number of large matmuls."""
    KP = {}
    n_fft = cfg["n_fft"]
    n_freq = n_fft // 2 + 1
    n_mels = cfg["n_mels"]
    Ct, Cw, F = cfg["Ct"], cfg["Cw"], cfg["F"]
    k_h, k_w = cfg["k_h"], cfg["k_w"]
    Cf = Ct + Cw
    Ho = n_mels - k_h + 1
    pad_w = (k_w - 1) // 2
    assert 8 * n_mels == 128 and 4 * Ct == 128 and n_mels * Cw == 128

    # ---- log-mel: [window*cos | window*sin], compacted to 2*n_freq columns ----
    Kc = _round_up(2 * n_freq, 128)
    n = np.arange(n_fft)[:, None]
    k = np.arange(n_freq)[None, :]
    ang = 2.0 * np.pi * n * k / n_fft
    win = 0.5 - 0.5 * np.cos(2.0 * np.pi * np.arange(n_fft) / n_fft)
    trig = np.zeros((n_fft, Kc), np.float32)
    trig[:, :n_freq] = win[:, None] * np.cos(ang)
    trig[:, n_freq:2 * n_freq] = win[:, None] * np.sin(ang)
    KP["trig"] = jnp.asarray(trig)
    fb = mel_filterbank(n_freq, n_mels, cfg["sr"])
    mel2 = np.zeros((Kc, 128), np.float32)               # fb stacked for the cos and sin halves
    mel2[:n_freq, :n_mels] = fb
    mel2[n_freq:2 * n_freq, :n_mels] = fb
    KP["mel2"] = jnp.asarray(mel2)

    # ---- front-end: timbral heights packed 4-per-matmul on 32-lane groups ----
    Wt = np.asarray(P["Wt"]); bt = np.asarray(P["bt"])
    st = np.asarray(P["bn_t_s"]); tt = np.asarray(P["bn_t_t"])
    Ww = np.asarray(P["Ww"]); bw = np.asarray(P["bw"])
    sw = np.asarray(P["bn_w_s"]); tw = np.asarray(P["bn_w_t"])

    n_mm = -(-Ho // 4)
    Wtim = np.zeros((n_mm, 8 * n_mels, 128), np.float32)
    for mm in range(n_mm):
        for g in range(4):
            h = min(4 * mm + g, Ho - 1)                  # duplicate last height (max-safe)
            for kh in range(k_h):
                for dt in range(8):
                    Wtim[mm, dt * n_mels + (h + kh), g * Ct:(g + 1) * Ct] = Wt[kh * 8 + dt, :] * st
    KP["Wtim"] = jnp.asarray(Wtim, dtype=jnp.bfloat16)
    KP["btim"] = jnp.asarray(np.tile(bt * st, 4).reshape(1, 128))

    # temporal: 16 mel rows block-diagonal on 8-lane groups, one matmul.
    Wtem = np.zeros((8 * n_mels, 128), np.float32)
    for m in range(n_mels):
        for kw in range(k_w):
            dt = 3 - pad_w + kw                          # temporal taps live at patch offsets 2..5
            Wtem[dt * n_mels + m, m * Cw:(m + 1) * Cw] = Ww[kw, :] * sw
    KP["Wtem"] = jnp.asarray(Wtem, dtype=jnp.bfloat16)
    KP["btem"] = jnp.asarray(np.tile(bw * sw, n_mels).reshape(1, 128))

    shC = np.zeros((1, 128), np.float32)
    shC[0, :Ct] = tt
    shC[0, Ct:Ct + Cw] = tw
    KP["shC"] = jnp.asarray(shC)

    # ---- mid-end: Conv1d(k=7) weights flattened to (7*128, 128) im2col form ----
    def conv_flat(W, cin_real, scale=None):
        Wn = np.asarray(W, np.float32)
        if scale is not None:
            Wn = Wn * np.asarray(scale)[None, None, :]
        out = np.zeros((7 * 128, 128), np.float32)
        for j in range(7):
            out[j * 128: j * 128 + cin_real, :F] = Wn[j]
        return out

    KP["W1f"] = jnp.asarray(conv_flat(P["W1"], Cf, P["bn1_s"]), dtype=jnp.bfloat16)
    KP["b1f"] = _row128(np.asarray(P["b1"]) * np.asarray(P["bn1_s"]))
    KP["t1s"] = _row128(P["bn1_t"])
    KP["W2f"] = jnp.asarray(conv_flat(P["W2"], F), dtype=jnp.bfloat16)
    KP["b2r"] = _row128(P["b2"])
    KP["s2r"] = _row128(P["bn2_s"])
    KP["t2r"] = _row128(P["bn2_t"])
    KP["W3f"] = jnp.asarray(conv_flat(P["W3"], F), dtype=jnp.bfloat16)
    KP["b3r"] = _row128(P["b3"])

    # ---- back-end: BN(flat) folded into dense1, bn_dense folded into dense2.
    # dense1 rows are re-laid-out to the lane-aligned (8 groups x 128) pooled
    # layout [max: slab0,bn1,res2,res3 | mean: same] the mid-pool kernel emits.
    sB = np.asarray(P["bn_flat_s"]); tB = np.asarray(P["bn_flat_t"])
    Wd1 = np.asarray(P["Wd1"]); bd1 = np.asarray(P["bd1"])
    Wd1f = Wd1 * sB[:, None]
    bd1f = tB @ Wd1 + bd1
    sizes = [Cf, F, F, F, Cf, F, F, F]
    offs = np.concatenate([[0], np.cumsum(sizes)[:-1]])
    Wd1e = np.zeros((8 * 128, 200), np.float32)
    for g in range(8):
        o = int(offs[g]); s = sizes[g]
        Wd1e[g * 128: g * 128 + s, :] = Wd1f[o:o + s, :]
    KP["Wd1e"] = jnp.asarray(Wd1e)
    KP["bd1r"] = jnp.asarray(bd1f.reshape(1, 200).astype(np.float32))

    sD = np.asarray(P["bn_d_s"]); tD = np.asarray(P["bn_d_t"])
    Wd2 = np.asarray(P["Wd2"]); bd2 = np.asarray(P["bd2"])
    wd2 = Wd2 * sD[:, None]
    bd2f = tD @ Wd2 + bd2
    Wd2p = np.zeros((200, 128), np.float32)
    Wd2p[:, :50] = wd2
    bd2p = np.zeros((1, 128), np.float32)
    bd2p[0, :50] = bd2f
    KP["Wd2p"] = jnp.asarray(Wd2p)
    KP["bd2p"] = jnp.asarray(bd2p)
    return KP


# ----------------------------- main -----------------------------

if __name__ == "__main__":
    # Small config consistent with Musicnn(args, y_input_dim=16, filter_factor=0.25,
    #   pool_type='temporal', timbral_k_height=0.5, temporal_k_width=4),
    # args = (sr=8000, n_fft=64, hop_length=32, n_mels=16).
    cfg = dict(
        sr=8000, n_fft=64, hop=32, n_mels=16,
        k_h=int(16 * 0.5),                 # timbral filter height = 8
        k_w=4,                             # temporal filter width
        Ct=int(0.25 * 128),                # timbral out channels = 32
        Cw=int(0.25 * 32),                 # temporal out channels = 8
        F=64,                              # MidEnd num_of_filters (module default)
    )

    key = jax.random.PRNGKey(0)
    kp, kx = jax.random.split(key)
    params = make_params(kp, cfg)
    kparams = prepare_kernel_params(params, cfg)

    B, n_samples = 2, 736                  # -> 24 mel frames, 23 front-end time steps
    x = jax.random.normal(kx, (B, n_samples), dtype=jnp.float32)

    fwd = jax.jit(functools.partial(musicnn_forward, cfg=cfg))
    out = jax.block_until_ready(fwd(x, kparams))
    assert out.shape == (B, 50), out.shape
    assert bool(jnp.all(jnp.isfinite(out))) and bool(jnp.all((out >= 0) & (out <= 1)))
    print("KERNEL_OK")
</pallas_src>

<mosaic_0001>
module attributes {stable_mosaic.version = 11 : i64} {
  func.func @_logmel_kernel(%arg0: i32, %arg1: memref<48x64xf32, #tpu.memory_space<vmem>>, %arg2: memref<64x128xf32, #tpu.memory_space<vmem>>, %arg3: memref<128x128xf32, #tpu.memory_space<vmem>>, %arg4: memref<48x128xf32, #tpu.memory_space<vmem>>) attributes {dimension_semantics = [#tpu.dimension_semantics<parallel>], iteration_bounds = array<i64: 1>, scalar_prefetch = 0 : i64, scratch_operands = 0 : i64, tpu.core_type = #tpu.core_type<tc>, window_params = [{transform_indices = @transform_0, window_bounds = array<i64: 48, 64>}, {pipeline_mode = #tpu.pipeline_mode<synchronous>, transform_indices = @transform_1, window_bounds = array<i64: 64, 128>}, {pipeline_mode = #tpu.pipeline_mode<synchronous>, transform_indices = @transform_2, window_bounds = array<i64: 128, 128>}, {transform_indices = @transform_3, window_bounds = array<i64: 48, 128>}]} {
    %c0 = arith.constant 0 : index
    %c0_0 = arith.constant 0 : index
    %0 = vector.load %arg1[%c0, %c0_0] : memref<48x64xf32, #tpu.memory_space<vmem>>, vector<48x64xf32>
    %c0_1 = arith.constant 0 : index
    %c0_2 = arith.constant 0 : index
    %1 = vector.load %arg2[%c0_1, %c0_2] : memref<64x128xf32, #tpu.memory_space<vmem>>, vector<64x128xf32>
    %cst = arith.constant dense<0.000000e+00> : vector<48x128xf32>
    %2 = tpu.matmul %0, %1, %cst {dimension_numbers = #tpu.dot_dimension_numbers<[1], [0], [0], [1], [0, 0, 1, 1], [], []>} : vector<48x64xf32>, vector<64x128xf32>, vector<48x128xf32> -> vector<48x128xf32>
    %3 = arith.mulf %2, %2 : vector<48x128xf32>
    %c0_3 = arith.constant 0 : index
    %c0_4 = arith.constant 0 : index
    %4 = vector.load %arg3[%c0_3, %c0_4] : memref<128x128xf32, #tpu.memory_space<vmem>>, vector<128x128xf32>
    %cst_5 = arith.constant dense<0.000000e+00> : vector<48x128xf32>
    %5 = tpu.matmul %3, %4, %cst_5 {dimension_numbers = #tpu.dot_dimension_numbers<[1], [0], [0], [1], [0, 0, 1, 1], [], []>} : vector<48x128xf32>, vector<128x128xf32>, vector<48x128xf32> -> vector<48x128xf32>
    %cst_6 = arith.constant 9.99999993E-9 : f32
    %6 = vector.broadcast %cst_6 : f32 to vector<48x128xf32>
    %7 = arith.addf %5, %6 : vector<48x128xf32>
    %8 = math.log %7 : vector<48x128xf32>
    %c0_7 = arith.constant 0 : index
    %c0_8 = arith.constant 0 : index
    %9 = vector.load %arg4[%c0_7, %c0_8] : memref<48x128xf32, #tpu.memory_space<vmem>>, vector<48x128xf32>
    tpu.vector_store %arg4[%c0_7, %c0_8], %8 {strides = array<i32>} : memref<48x128xf32, #tpu.memory_space<vmem>>, vector<48x128xf32>,
    return
  }
  func.func @transform_0(%arg0: i32) -> (i32, i32) {
    %c0_i32 = arith.constant 0 : i32
    %c0_i32_0 = arith.constant 0 : i32
    return %arg0, %c0_i32 : i32, i32
  }
  func.func @transform_1(%arg0: i32) -> (i32, i32) {
    %c0_i32 = arith.constant 0 : i32
    %c0_i32_0 = arith.constant 0 : i32
    %c0_i32_1 = arith.constant 0 : i32
    return %c0_i32, %c0_i32_0 : i32, i32
  }
  func.func @transform_2(%arg0: i32) -> (i32, i32) {
    %c0_i32 = arith.constant 0 : i32
    %c0_i32_0 = arith.constant 0 : i32
    %c0_i32_1 = arith.constant 0 : i32
    return %c0_i32, %c0_i32_0 : i32, i32
  }
  func.func @transform_3(%arg0: i32) -> (i32, i32) {
    %c0_i32 = arith.constant 0 : i32
    %c0_i32_0 = arith.constant 0 : i32
    return %arg0, %c0_i32 : i32, i32
  }
}

module attributes {stable_mosaic.version = 11 : i64} {
  func.func @_frontend_kernel(%arg0: i32, %arg1: memref<1x32x128xf32, #tpu.memory_space<vmem>>, %arg2: memref<3x128x128xbf16, #tpu.memory_space<vmem>>, %arg3: memref<1x128xf32, #tpu.memory_space<vmem>>, %arg4: memref<128x128xbf16, #tpu.memory_space<vmem>>, %arg5: memref<1x128xf32, #tpu.memory_space<vmem>>, %arg6: memref<1x128xf32, #tpu.memory_space<vmem>>, %arg7: memref<1x32x128xf32, #tpu.memory_space<vmem>>) attributes {dimension_semantics = [#tpu.dimension_semantics<parallel>], iteration_bounds = array<i64: 2>, scalar_prefetch = 0 : i64, scratch_operands = 0 : i64, tpu.core_type = #tpu.core_type<tc>, window_params = [{transform_indices = @transform_0, window_bounds = array<i64: 1, 32, 128>}, {pipeline_mode = #tpu.pipeline_mode<synchronous>, transform_indices = @transform_1, window_bounds = array<i64: 3, 128, 128>}, {pipeline_mode = #tpu.pipeline_mode<synchronous>, transform_indices = @transform_2, window_bounds = array<i64: 1, 128>}, {pipeline_mode = #tpu.pipeline_mode<synchronous>, transform_indices = @transform_3, window_bounds = array<i64: 128, 128>}, {pipeline_mode = #tpu.pipeline_mode<synchronous>, transform_indices = @transform_4, window_bounds = array<i64: 1, 128>}, {pipeline_mode = #tpu.pipeline_mode<synchronous>, transform_indices = @transform_5, window_bounds = array<i64: 1, 128>}, {transform_indices = @transform_6, window_bounds = array<i64: 1, 32, 128>}]} {
    %c0 = arith.constant 0 : index
    %c0_0 = arith.constant 0 : index
    %c0_1 = arith.constant 0 : index
    %0 = vector.load %arg1[%c0, %c0_0, %c0_1] : memref<1x32x128xf32, #tpu.memory_space<vmem>>, vector<1x32x128xf32>
    %1 = vector.shape_cast %0 : vector<1x32x128xf32> to vector<32x128xf32>
    %2 = tpu.iota {dimensions = array<i32: 1>} : vector<32x128xi32>
    %cst = arith.constant 0.000000e+00 : f32
    %3 = vector.broadcast %cst : f32 to vector<32x128xf32>
    %c3_i32 = arith.constant 3 : i32
    %4 = tpu.dynamic_rotate %1 by %c3_i32 dim 0 : vector<32x128xf32>, i32 -> vector<32x128xf32>
    %c0_i32 = arith.constant 0 : i32
    %5 = vector.broadcast %c0_i32 : i32 to vector<32x128xi32>
    %6 = arith.cmpi sge, %2, %5 : vector<32x128xi32>
    %c16_i32 = arith.constant 16 : i32
    %7 = vector.broadcast %c16_i32 : i32 to vector<32x128xi32>
    %8 = arith.cmpi slt, %2, %7 : vector<32x128xi32>
    %9 = arith.andi %6, %8 : vector<32x128xi1>
    %10 = arith.select %9, %4, %3 : vector<32x128xi1>, vector<32x128xf32>
    %c2_i32 = arith.constant 2 : i32
    %11 = tpu.dynamic_rotate %1 by %c2_i32 dim 0 : vector<32x128xf32>, i32 -> vector<32x128xf32>
    %c16_i32_2 = arith.constant 16 : i32
    %12 = tpu.dynamic_rotate %11 by %c16_i32_2 dim 1 : vector<32x128xf32>, i32 -> vector<32x128xf32>
    %c16_i32_3 = arith.constant 16 : i32
    %13 = vector.broadcast %c16_i32_3 : i32 to vector<32x128xi32>
    %14 = arith.cmpi sge, %2, %13 : vector<32x128xi32>
    %c32_i32 = arith.constant 32 : i32
    %15 = vector.broadcast %c32_i32 : i32 to vector<32x128xi32>
    %16 = arith.cmpi slt, %2, %15 : vector<32x128xi32>
    %17 = arith.andi %14, %16 : vector<32x128xi1>
    %18 = arith.select %17, %12, %10 : vector<32x128xi1>, vector<32x128xf32>
    %c1_i32 = arith.constant 1 : i32
    %19 = tpu.dynamic_rotate %1 by %c1_i32 dim 0 : vector<32x128xf32>, i32 -> vector<32x128xf32>
    %c32_i32_4 = arith.constant 32 : i32
    %20 = tpu.dynamic_rotate %19 by %c32_i32_4 dim 1 : vector<32x128xf32>, i32 -> vector<32x128xf32>
    %c32_i32_5 = arith.constant 32 : i32
    %21 = vector.broadcast %c32_i32_5 : i32 to vector<32x128xi32>
    %22 = arith.cmpi sge, %2, %21 : vector<32x128xi32>
    %c48_i32 = arith.constant 48 : i32
    %23 = vector.broadcast %c48_i32 : i32 to vector<32x128xi32>
    %24 = arith.cmpi slt, %2, %23 : vector<32x128xi32>
    %25 = arith.andi %22, %24 : vector<32x128xi1>
    %26 = arith.select %25, %20, %18 : vector<32x128xi1>, vector<32x128xf32>
    %c0_i32_6 = arith.constant 0 : i32
    %27 = tpu.dynamic_rotate %1 by %c0_i32_6 dim 0 : vector<32x128xf32>, i32 -> vector<32x128xf32>
    %c48_i32_7 = arith.constant 48 : i32
    %28 = tpu.dynamic_rotate %27 by %c48_i32_7 dim 1 : vector<32x128xf32>, i32 -> vector<32x128xf32>
    %c48_i32_8 = arith.constant 48 : i32
    %29 = vector.broadcast %c48_i32_8 : i32 to vector<32x128xi32>
    %30 = arith.cmpi sge, %2, %29 : vector<32x128xi32>
    %c64_i32 = arith.constant 64 : i32
    %31 = vector.broadcast %c64_i32 : i32 to vector<32x128xi32>
    %32 = arith.cmpi slt, %2, %31 : vector<32x128xi32>
    %33 = arith.andi %30, %32 : vector<32x128xi1>
    %34 = arith.select %33, %28, %26 : vector<32x128xi1>, vector<32x128xf32>
    %c31_i32 = arith.constant 31 : i32
    %35 = tpu.dynamic_rotate %1 by %c31_i32 dim 0 : vector<32x128xf32>, i32 -> vector<32x128xf32>
    %c64_i32_9 = arith.constant 64 : i32
    %36 = tpu.dynamic_rotate %35 by %c64_i32_9 dim 1 : vector<32x128xf32>, i32 -> vector<32x128xf32>
    %c64_i32_10 = arith.constant 64 : i32
    %37 = vector.broadcast %c64_i32_10 : i32 to vector<32x128xi32>
    %38 = arith.cmpi sge, %2, %37 : vector<32x128xi32>
    %c80_i32 = arith.constant 80 : i32
    %39 = vector.broadcast %c80_i32 : i32 to vector<32x128xi32>
    %40 = arith.cmpi slt, %2, %39 : vector<32x128xi32>
    %41 = arith.andi %38, %40 : vector<32x128xi1>
    %42 = arith.select %41, %36, %34 : vector<32x128xi1>, vector<32x128xf32>
    %c30_i32 = arith.constant 30 : i32
    %43 = tpu.dynamic_rotate %1 by %c30_i32 dim 0 : vector<32x128xf32>, i32 -> vector<32x128xf32>
    %c80_i32_11 = arith.constant 80 : i32
    %44 = tpu.dynamic_rotate %43 by %c80_i32_11 dim 1 : vector<32x128xf32>, i32 -> vector<32x128xf32>
    %c80_i32_12 = arith.constant 80 : i32
    %45 = vector.broadcast %c80_i32_12 : i32 to vector<32x128xi32>
    %46 = arith.cmpi sge, %2, %45 : vector<32x128xi32>
    %c96_i32 = arith.constant 96 : i32
    %47 = vector.broadcast %c96_i32 : i32 to vector<32x128xi32>
    %48 = arith.cmpi slt, %2, %47 : vector<32x128xi32>
    %49 = arith.andi %46, %48 : vector<32x128xi1>
    %50 = arith.select %49, %44, %42 : vector<32x128xi1>, vector<32x128xf32>
    %c29_i32 = arith.constant 29 : i32
    %51 = tpu.dynamic_rotate %1 by %c29_i32 dim 0 : vector<32x128xf32>, i32 -> vector<32x128xf32>
    %c96_i32_13 = arith.constant 96 : i32
    %52 = tpu.dynamic_rotate %51 by %c96_i32_13 dim 1 : vector<32x128xf32>, i32 -> vector<32x128xf32>
    %c96_i32_14 = arith.constant 96 : i32
    %53 = vector.broadcast %c96_i32_14 : i32 to vector<32x128xi32>
    %54 = arith.cmpi sge, %2, %53 : vector<32x128xi32>
    %c112_i32 = arith.constant 112 : i32
    %55 = vector.broadcast %c112_i32 : i32 to vector<32x128xi32>
    %56 = arith.cmpi slt, %2, %55 : vector<32x128xi32>
    %57 = arith.andi %54, %56 : vector<32x128xi1>
    %58 = arith.select %57, %52, %50 : vector<32x128xi1>, vector<32x128xf32>
    %c28_i32 = arith.constant 28 : i32
    %59 = tpu.dynamic_rotate %1 by %c28_i32 dim 0 : vector<32x128xf32>, i32 -> vector<32x128xf32>
    %c112_i32_15 = arith.constant 112 : i32
    %60 = tpu.dynamic_rotate %59 by %c112_i32_15 dim 1 : vector<32x128xf32>, i32 -> vector<32x128xf32>
    %c112_i32_16 = arith.constant 112 : i32
    %61 = vector.broadcast %c112_i32_16 : i32 to vector<32x128xi32>
    %62 = arith.cmpi sge, %2, %61 : vector<32x128xi32>
    %c128_i32 = arith.constant 128 : i32
    %63 = vector.broadcast %c128_i32 : i32 to vector<32x128xi32>
    %64 = arith.cmpi slt, %2, %63 : vector<32x128xi32>
    %65 = arith.andi %62, %64 : vector<32x128xi1>
    %66 = arith.select %65, %60, %58 : vector<32x128xi1>, vector<32x128xf32>
    %67 = arith.truncf %66 : vector<32x128xf32> to vector<32x128xbf16>
    %c0_17 = arith.constant 0 : index
    %c0_18 = arith.constant 0 : index
    %68 = vector.load %arg3[%c0_17, %c0_18] : memref<1x128xf32, #tpu.memory_space<vmem>>, vector<1x128xf32>
    %cst_19 = arith.constant 0.000000e+00 : f32
    %69 = vector.broadcast %cst_19 : f32 to vector<32x128xf32>
    %c0_20 = arith.constant 0 : index
    %c0_21 = arith.constant 0 : index
    %c0_22 = arith.constant 0 : index
    %70 = vector.load %arg2[%c0_20, %c0_21, %c0_22] : memref<3x128x128xbf16, #tpu.memory_space<vmem>>, vector<1x128x128xbf16>
    %71 = vector.shape_cast %70 : vector<1x128x128xbf16> to vector<128x128xbf16>
    %cst_23 = arith.constant dense<0.000000e+00> : vector<32x128xf32>
    %72 = tpu.matmul %67, %71, %cst_23 {dimension_numbers = #tpu.dot_dimension_numbers<[1], [0], [0], [1], [0, 0, 1, 1], [], []>} : vector<32x128xbf16>, vector<128x128xbf16>, vector<32x128xf32> -> vector<32x128xf32>
    %73 = vector.broadcast %68 : vector<1x128xf32> to vector<32x128xf32>
    %74 = arith.addf %72, %73 : vector<32x128xf32>
    %75 = arith.maximumf %69, %74 : vector<32x128xf32>
    %c1 = arith.constant 1 : index
    %c0_24 = arith.constant 0 : index
    %c0_25 = arith.constant 0 : index
    %76 = vector.load %arg2[%c1, %c0_24, %c0_25] : memref<3x128x128xbf16, #tpu.memory_space<vmem>>, vector<1x128x128xbf16>
    %77 = vector.shape_cast %76 : vector<1x128x128xbf16> to vector<128x128xbf16>
    %cst_26 = arith.constant dense<0.000000e+00> : vector<32x128xf32>
    %78 = tpu.matmul %67, %77, %cst_26 {dimension_numbers = #tpu.dot_dimension_numbers<[1], [0], [0], [1], [0, 0, 1, 1], [], []>} : vector<32x128xbf16>, vector<128x128xbf16>, vector<32x128xf32> -> vector<32x128xf32>
    %79 = vector.broadcast %68 : vector<1x128xf32> to vector<32x128xf32>
    %80 = arith.addf %78, %79 : vector<32x128xf32>
    %81 = arith.maximumf %75, %80 : vector<32x128xf32>
    %c2 = arith.constant 2 : index
    %c0_27 = arith.constant 0 : index
    %c0_28 = arith.constant 0 : index
    %82 = vector.load %arg2[%c2, %c0_27, %c0_28] : memref<3x128x128xbf16, #tpu.memory_space<vmem>>, vector<1x128x128xbf16>
    %83 = vector.shape_cast %82 : vector<1x128x128xbf16> to vector<128x128xbf16>
    %cst_29 = arith.constant dense<0.000000e+00> : vector<32x128xf32>
    %84 = tpu.matmul %67, %83, %cst_29 {dimension_numbers = #tpu.dot_dimension_numbers<[1], [0], [0], [1], [0, 0, 1, 1], [], []>} : vector<32x128xbf16>, vector<128x128xbf16>, vector<32x128xf32> -> vector<32x128xf32>
    %85 = vector.broadcast %68 : vector<1x128xf32> to vector<32x128xf32>
    %86 = arith.addf %84, %85 : vector<32x128xf32>
    %87 = arith.maximumf %81, %86 : vector<32x128xf32>
    %c64_i32_30 = arith.constant 64 : i32
    %88 = tpu.dynamic_rotate %87 by %c64_i32_30 dim 1 : vector<32x128xf32>, i32 -> vector<32x128xf32>
    %89 = arith.maximumf %87, %88 : vector<32x128xf32>
    %c32_i32_31 = arith.constant 32 : i32
    %90 = tpu.dynamic_rotate %89 by %c32_i32_31 dim 1 : vector<32x128xf32>, i32 -> vector<32x128xf32>
    %91 = arith.maximumf %89, %90 : vector<32x128xf32>
    %c0_32 = arith.constant 0 : index
    %c0_33 = arith.constant 0 : index
    %92 = vector.load %arg4[%c0_32, %c0_33] : memref<128x128xbf16, #tpu.memory_space<vmem>>, vector<128x128xbf16>
    %cst_34 = arith.constant dense<0.000000e+00> : vector<32x128xf32>
    %93 = tpu.matmul %67, %92, %cst_34 {dimension_numbers = #tpu.dot_dimension_numbers<[1], [0], [0], [1], [0, 0, 1, 1], [], []>} : vector<32x128xbf16>, vector<128x128xbf16>, vector<32x128xf32> -> vector<32x128xf32>
    %c0_35 = arith.constant 0 : index
    %c0_36 = arith.constant 0 : index
    %94 = vector.load %arg5[%c0_35, %c0_36] : memref<1x128xf32, #tpu.memory_space<vmem>>, vector<1x128xf32>
    %95 = vector.broadcast %94 : vector<1x128xf32> to vector<32x128xf32>
    %96 = arith.addf %93, %95 : vector<32x128xf32>
    %cst_37 = arith.constant 0.000000e+00 : f32
    %97 = vector.broadcast %cst_37 : f32 to vector<32x128xf32>
    %98 = arith.maximumf %96, %97 : vector<32x128xf32>
    %c64_i32_38 = arith.constant 64 : i32
    %99 = tpu.dynamic_rotate %98 by %c64_i32_38 dim 1 : vector<32x128xf32>, i32 -> vector<32x128xf32>
    %100 = arith.maximumf %98, %99 : vector<32x128xf32>
    %c32_i32_39 = arith.constant 32 : i32
    %101 = tpu.dynamic_rotate %100 by %c32_i32_39 dim 1 : vector<32x128xf32>, i32 -> vector<32x128xf32>
    %102 = arith.maximumf %100, %101 : vector<32x128xf32>
    %c16_i32_40 = arith.constant 16 : i32
    %103 = tpu.dynamic_rotate %102 by %c16_i32_40 dim 1 : vector<32x128xf32>, i32 -> vector<32x128xf32>
    %104 = arith.maximumf %102, %103 : vector<32x128xf32>
    %c8_i32 = arith.constant 8 : i32
    %105 = tpu.dynamic_rotate %104 by %c8_i32 dim 1 : vector<32x128xf32>, i32 -> vector<32x128xf32>
    %106 = arith.maximumf %104, %105 : vector<32x128xf32>
    %c32_i32_41 = arith.constant 32 : i32
    %107 = vector.broadcast %c32_i32_41 : i32 to vector<32x128xi32>
    %108 = arith.cmpi slt, %2, %107 : vector<32x128xi32>
    %c40_i32 = arith.constant 40 : i32
    %109 = vector.broadcast %c40_i32 : i32 to vector<32x128xi32>
    %110 = arith.cmpi slt, %2, %109 : vector<32x128xi32>
    %cst_42 = arith.constant 0.000000e+00 : f32
    %111 = vector.broadcast %cst_42 : f32 to vector<32x128xf32>
    %112 = arith.select %110, %106, %111 : vector<32x128xi1>, vector<32x128xf32>
    %113 = arith.select %108, %91, %112 : vector<32x128xi1>, vector<32x128xf32>
    %c0_43 = arith.constant 0 : index
    %c0_44 = arith.constant 0 : index
    %114 = vector.load %arg6[%c0_43, %c0_44] : memref<1x128xf32, #tpu.memory_space<vmem>>, vector<1x128xf32>
    %115 = vector.broadcast %114 : vector<1x128xf32> to vector<32x128xf32>
    %116 = arith.addf %113, %115 : vector<32x128xf32>
    %117 = tpu.iota {dimensions = array<i32: 0>} : vector<32x1xi32>
    %c3_i32_45 = arith.constant 3 : i32
    %118 = vector.broadcast %c3_i32_45 : i32 to vector<32x1xi32>
    %119 = arith.cmpi sge, %117, %118 : vector<32x1xi32>
    %c26_i32 = arith.constant 26 : i32
    %120 = vector.broadcast %c26_i32 : i32 to vector<32x1xi32>
    %121 = arith.cmpi slt, %117, %120 : vector<32x1xi32>
    %122 = arith.andi %119, %121 : vector<32x1xi1>
    %cst_46 = arith.constant 0.000000e+00 : f32
    %123 = vector.shape_cast %122 : vector<32x1xi1> to vector<32x1xi1>
    %124 = vector.broadcast %123 : vector<32x1xi1> to vector<32x128xi1>
    %125 = vector.broadcast %cst_46 : f32 to vector<32x128xf32>
    %126 = arith.select %124, %116, %125 : vector<32x128xi1>, vector<32x128xf32>
    %c0_47 = arith.constant 0 : index
    %c0_48 = arith.constant 0 : index
    %c0_49 = arith.constant 0 : index
    %127 = vector.load %arg7[%c0_47, %c0_48, %c0_49] : memref<1x32x128xf32, #tpu.memory_space<vmem>>, vector<1x32x128xf32>
    %128 = vector.shape_cast %127 : vector<1x32x128xf32> to vector<32x128xf32>
    %129 = vector.shape_cast %126 : vector<32x128xf32> to vector<1x32x128xf32>
    tpu.vector_store %arg7[%c0_47, %c0_48, %c0_49], %129 {strides = array<i32>} : memref<1x32x128xf32, #tpu.memory_space<vmem>>, vector<1x32x128xf32>,
    return
  }
  func.func @transform_0(%arg0: i32) -> (i32, i32, i32) {
    %c0_i32 = arith.constant 0 : i32
    %c0_i32_0 = arith.constant 0 : i32
    %c0_i32_1 = arith.constant 0 : i32
    return %arg0, %c0_i32, %c0_i32_0 : i32, i32, i32
  }
  func.func @transform_1(%arg0: i32) -> (i32, i32, i32) {
    %c0_i32 = arith.constant 0 : i32
    %c0_i32_0 = arith.constant 0 : i32
    %c0_i32_1 = arith.constant 0 : i32
    %c0_i32_2 = arith.constant 0 : i32
    return %c0_i32, %c0_i32_0, %c0_i32_1 : i32, i32, i32
  }
  func.func @transform_2(%arg0: i32) -> (i32, i32) {
    %c0_i32 = arith.constant 0 : i32
    %c0_i32_0 = arith.constant 0 : i32
    %c0_i32_1 = arith.constant 0 : i32
    return %c0_i32, %c0_i32_0 : i32, i32
  }
  func.func @transform_3(%arg0: i32) -> (i32, i32) {
    %c0_i32 = arith.constant 0 : i32
    %c0_i32_0 = arith.constant 0 : i32
    %c0_i32_1 = arith.constant 0 : i32
    return %c0_i32, %c0_i32_0 : i32, i32
  }
  func.func @transform_4(%arg0: i32) -> (i32, i32) {
    %c0_i32 = arith.constant 0 : i32
    %c0_i32_0 = arith.constant 0 : i32
    %c0_i32_1 = arith.constant 0 : i32
    return %c0_i32, %c0_i32_0 : i32, i32
  }
  func.func @transform_5(%arg0: i32) -> (i32, i32) {
    %c0_i32 = arith.constant 0 : i32
    %c0_i32_0 = arith.constant 0 : i32
    %c0_i32_1 = arith.constant 0 : i32
    return %c0_i32, %c0_i32_0 : i32, i32
  }
  func.func @transform_6(%arg0: i32) -> (i32, i32, i32) {
    %c0_i32 = arith.constant 0 : i32
    %c0_i32_0 = arith.constant 0 : i32
    %c0_i32_1 = arith.constant 0 : i32
    return %arg0, %c0_i32, %c0_i32_0 : i32, i32, i32
  }
}

module attributes {stable_mosaic.version = 11 : i64} {
  func.func @_midpool_kernel(%arg0: i32, %arg1: memref<1x32x128xf32, #tpu.memory_space<vmem>>, %arg2: memref<896x128xbf16, #tpu.memory_space<vmem>>, %arg3: memref<1x128xf32, #tpu.memory_space<vmem>>, %arg4: memref<1x128xf32, #tpu.memory_space<vmem>>, %arg5: memref<896x128xbf16, #tpu.memory_space<vmem>>, %arg6: memref<1x128xf32, #tpu.memory_space<vmem>>, %arg7: memref<1x128xf32, #tpu.memory_space<vmem>>, %arg8: memref<1x128xf32, #tpu.memory_space<vmem>>, %arg9: memref<896x128xbf16, #tpu.memory_space<vmem>>, %arg10: memref<1x128xf32, #tpu.memory_space<vmem>>, %arg11: memref<1x8x128xf32, #tpu.memory_space<vmem>>) attributes {dimension_semantics = [#tpu.dimension_semantics<parallel>], iteration_bounds = array<i64: 2>, scalar_prefetch = 0 : i64, scratch_operands = 0 : i64, tpu.core_type = #tpu.core_type<tc>, window_params = [{transform_indices = @transform_0, window_bounds = array<i64: 1, 32, 128>}, {pipeline_mode = #tpu.pipeline_mode<synchronous>, transform_indices = @transform_1, window_bounds = array<i64: 896, 128>}, {pipeline_mode = #tpu.pipeline_mode<synchronous>, transform_indices = @transform_2, window_bounds = array<i64: 1, 128>}, {pipeline_mode = #tpu.pipeline_mode<synchronous>, transform_indices = @transform_3, window_bounds = array<i64: 1, 128>}, {pipeline_mode = #tpu.pipeline_mode<synchronous>, transform_indices = @transform_4, window_bounds = array<i64: 896, 128>}, {pipeline_mode = #tpu.pipeline_mode<synchronous>, transform_indices = @transform_5, window_bounds = array<i64: 1, 128>}, {pipeline_mode = #tpu.pipeline_mode<synchronous>, transform_indices = @transform_6, window_bounds = array<i64: 1, 128>}, {pipeline_mode = #tpu.pipeline_mode<synchronous>, transform_indices = @transform_7, window_bounds = array<i64: 1, 128>}, {pipeline_mode = #tpu.pipeline_mode<synchronous>, transform_indices = @transform_8, window_bounds = array<i64: 896, 128>}, {pipeline_mode = #tpu.pipeline_mode<synchronous>, transform_indices = @transform_9, window_bounds = array<i64: 1, 128>}, {transform_indices = @transform_10, window_bounds = array<i64: 1, 8, 128>}]} {
    %0 = tpu.iota {dimensions = array<i32: 0>} : vector<32x1xi32>
    %c3_i32 = arith.constant 3 : i32
    %1 = vector.broadcast %c3_i32 : i32 to vector<32x1xi32>
    %2 = arith.cmpi sge, %0, %1 : vector<32x1xi32>
    %c26_i32 = arith.constant 26 : i32
    %3 = vector.broadcast %c26_i32 : i32 to vector<32x1xi32>
    %4 = arith.cmpi slt, %0, %3 : vector<32x1xi32>
    %5 = arith.andi %2, %4 : vector<32x1xi1>
    %c0 = arith.constant 0 : index
    %c0_0 = arith.constant 0 : index
    %c0_1 = arith.constant 0 : index
    %6 = vector.load %arg1[%c0, %c0_0, %c0_1] : memref<1x32x128xf32, #tpu.memory_space<vmem>>, vector<1x32x128xf32>
    %7 = vector.shape_cast %6 : vector<1x32x128xf32> to vector<32x128xf32>
    %cst = arith.constant -1.000000e+30 : f32
    %8 = vector.shape_cast %5 : vector<32x1xi1> to vector<32x1xi1>
    %9 = vector.broadcast %8 : vector<32x1xi1> to vector<32x128xi1>
    %10 = vector.broadcast %cst : f32 to vector<32x128xf32>
    %11 = arith.select %9, %7, %10 : vector<32x128xi1>, vector<32x128xf32>
    %cst_2 = arith.constant dense<0xFF800000> : vector<128xf32>
    %12 = vector.multi_reduction <maximumf>, %11, %cst_2 [0] : vector<32x128xf32> to vector<128xf32>
    %13 = vector.shape_cast %12 : vector<128xf32> to vector<1x128xf32>
    %c0_3 = arith.constant 0 : index
    %c0_4 = arith.constant 0 : index
    %c0_5 = arith.constant 0 : index
    %14 = vector.load %arg11[%c0_3, %c0_4, %c0_5] : memref<1x8x128xf32, #tpu.memory_space<vmem>>, vector<1x1x128xf32>
    %15 = vector.shape_cast %14 : vector<1x1x128xf32> to vector<1x128xf32>
    %16 = vector.shape_cast %13 : vector<1x128xf32> to vector<1x1x128xf32>
    tpu.vector_store %arg11[%c0_3, %c0_4, %c0_5], %16 {strides = array<i32>} : memref<1x8x128xf32, #tpu.memory_space<vmem>>, vector<1x1x128xf32>,
    %cst_6 = arith.constant dense<0.000000e+00> : vector<128xf32>
    %17 = vector.multi_reduction <add>, %7, %cst_6 [0] : vector<32x128xf32> to vector<128xf32>
    %18 = vector.shape_cast %17 : vector<128xf32> to vector<1x128xf32>
    %cst_7 = arith.constant 0.0434782617 : f32
    %19 = vector.broadcast %cst_7 : f32 to vector<1x128xf32>
    %20 = arith.mulf %18, %19 : vector<1x128xf32>
    %c0_8 = arith.constant 0 : index
    %c4 = arith.constant 4 : index
    %c0_9 = arith.constant 0 : index
    %21 = vector.load %arg11[%c0_8, %c4, %c0_9] : memref<1x8x128xf32, #tpu.memory_space<vmem>>, vector<1x1x128xf32>
    %22 = vector.shape_cast %21 : vector<1x1x128xf32> to vector<1x128xf32>
    %23 = vector.shape_cast %20 : vector<1x128xf32> to vector<1x1x128xf32>
    tpu.vector_store %arg11[%c0_8, %c4, %c0_9], %23 {strides = array<i32>} : memref<1x8x128xf32, #tpu.memory_space<vmem>>, vector<1x1x128xf32>,
    %c0_10 = arith.constant 0 : index
    %c0_11 = arith.constant 0 : index
    %24 = vector.load %arg3[%c0_10, %c0_11] : memref<1x128xf32, #tpu.memory_space<vmem>>, vector<1x128xf32>
    %c3_i32_12 = arith.constant 3 : i32
    %25 = tpu.dynamic_rotate %7 by %c3_i32_12 dim 0 : vector<32x128xf32>, i32 -> vector<32x128xf32>
    %c2_i32 = arith.constant 2 : i32
    %26 = tpu.dynamic_rotate %7 by %c2_i32 dim 0 : vector<32x128xf32>, i32 -> vector<32x128xf32>
    %c1_i32 = arith.constant 1 : i32
    %27 = tpu.dynamic_rotate %7 by %c1_i32 dim 0 : vector<32x128xf32>, i32 -> vector<32x128xf32>
    %c0_i32 = arith.constant 0 : i32
    %28 = tpu.dynamic_rotate %7 by %c0_i32 dim 0 : vector<32x128xf32>, i32 -> vector<32x128xf32>
    %c31_i32 = arith.constant 31 : i32
    %29 = tpu.dynamic_rotate %7 by %c31_i32 dim 0 : vector<32x128xf32>, i32 -> vector<32x128xf32>
    %c30_i32 = arith.constant 30 : i32
    %30 = tpu.dynamic_rotate %7 by %c30_i32 dim 0 : vector<32x128xf32>, i32 -> vector<32x128xf32>
    %c29_i32 = arith.constant 29 : i32
    %31 = tpu.dynamic_rotate %7 by %c29_i32 dim 0 : vector<32x128xf32>, i32 -> vector<32x128xf32>
    %32 = tpu.concatenate %25, %26, %27, %28, %29, %30, %31 in 1 : vector<32x128xf32>, vector<32x128xf32>, vector<32x128xf32>, vector<32x128xf32>, vector<32x128xf32>, vector<32x128xf32>, vector<32x128xf32> -> vector<32x896xf32>
    %33 = arith.truncf %32 : vector<32x896xf32> to vector<32x896xbf16>
    %c0_13 = arith.constant 0 : index
    %c0_14 = arith.constant 0 : index
    %34 = vector.load %arg2[%c0_13, %c0_14] : memref<896x128xbf16, #tpu.memory_space<vmem>>, vector<896x128xbf16>
    %cst_15 = arith.constant dense<0.000000e+00> : vector<32x128xf32>
    %35 = tpu.matmul %33, %34, %cst_15 {dimension_numbers = #tpu.dot_dimension_numbers<[1], [0], [0], [1], [0, 0, 1, 1], [], []>} : vector<32x896xbf16>, vector<896x128xbf16>, vector<32x128xf32> -> vector<32x128xf32>
    %36 = vector.broadcast %24 : vector<1x128xf32> to vector<32x128xf32>
    %37 = arith.addf %35, %36 : vector<32x128xf32>
    %cst_16 = arith.constant 0.000000e+00 : f32
    %38 = vector.broadcast %cst_16 : f32 to vector<32x128xf32>
    %39 = arith.maximumf %37, %38 : vector<32x128xf32>
    %c0_17 = arith.constant 0 : index
    %c0_18 = arith.constant 0 : index
    %40 = vector.load %arg4[%c0_17, %c0_18] : memref<1x128xf32, #tpu.memory_space<vmem>>, vector<1x128xf32>
    %41 = vector.broadcast %40 : vector<1x128xf32> to vector<32x128xf32>
    %42 = arith.addf %39, %41 : vector<32x128xf32>
    %cst_19 = arith.constant 0.000000e+00 : f32
    %43 = vector.shape_cast %5 : vector<32x1xi1> to vector<32x1xi1>
    %44 = vector.broadcast %43 : vector<32x1xi1> to vector<32x128xi1>
    %45 = vector.broadcast %cst_19 : f32 to vector<32x128xf32>
    %46 = arith.select %44, %42, %45 : vector<32x128xi1>, vector<32x128xf32>
    %cst_20 = arith.constant -1.000000e+30 : f32
    %47 = vector.shape_cast %5 : vector<32x1xi1> to vector<32x1xi1>
    %48 = vector.broadcast %47 : vector<32x1xi1> to vector<32x128xi1>
    %49 = vector.broadcast %cst_20 : f32 to vector<32x128xf32>
    %50 = arith.select %48, %46, %49 : vector<32x128xi1>, vector<32x128xf32>
    %cst_21 = arith.constant dense<0xFF800000> : vector<128xf32>
    %51 = vector.multi_reduction <maximumf>, %50, %cst_21 [0] : vector<32x128xf32> to vector<128xf32>
    %52 = vector.shape_cast %51 : vector<128xf32> to vector<1x128xf32>
    %c0_22 = arith.constant 0 : index
    %c1 = arith.constant 1 : index
    %c0_23 = arith.constant 0 : index
    %53 = vector.load %arg11[%c0_22, %c1, %c0_23] : memref<1x8x128xf32, #tpu.memory_space<vmem>>, vector<1x1x128xf32>
    %54 = vector.shape_cast %53 : vector<1x1x128xf32> to vector<1x128xf32>
    %55 = vector.shape_cast %52 : vector<1x128xf32> to vector<1x1x128xf32>
    tpu.vector_store %arg11[%c0_22, %c1, %c0_23], %55 {strides = array<i32>} : memref<1x8x128xf32, #tpu.memory_space<vmem>>, vector<1x1x128xf32>,
    %cst_24 = arith.constant dense<0.000000e+00> : vector<128xf32>
    %56 = vector.multi_reduction <add>, %46, %cst_24 [0] : vector<32x128xf32> to vector<128xf32>
    %57 = vector.shape_cast %56 : vector<128xf32> to vector<1x128xf32>
    %cst_25 = arith.constant 0.0434782617 : f32
    %58 = vector.broadcast %cst_25 : f32 to vector<1x128xf32>
    %59 = arith.mulf %57, %58 : vector<1x128xf32>
    %c0_26 = arith.constant 0 : index
    %c5 = arith.constant 5 : index
    %c0_27 = arith.constant 0 : index
    %60 = vector.load %arg11[%c0_26, %c5, %c0_27] : memref<1x8x128xf32, #tpu.memory_space<vmem>>, vector<1x1x128xf32>
    %61 = vector.shape_cast %60 : vector<1x1x128xf32> to vector<1x128xf32>
    %62 = vector.shape_cast %59 : vector<1x128xf32> to vector<1x1x128xf32>
    tpu.vector_store %arg11[%c0_26, %c5, %c0_27], %62 {strides = array<i32>} : memref<1x8x128xf32, #tpu.memory_space<vmem>>, vector<1x1x128xf32>,
    %c0_28 = arith.constant 0 : index
    %c0_29 = arith.constant 0 : index
    %63 = vector.load %arg6[%c0_28, %c0_29] : memref<1x128xf32, #tpu.memory_space<vmem>>, vector<1x128xf32>
    %c3_i32_30 = arith.constant 3 : i32
    %64 = tpu.dynamic_rotate %46 by %c3_i32_30 dim 0 : vector<32x128xf32>, i32 -> vector<32x128xf32>
    %c2_i32_31 = arith.constant 2 : i32
    %65 = tpu.dynamic_rotate %46 by %c2_i32_31 dim 0 : vector<32x128xf32>, i32 -> vector<32x128xf32>
    %c1_i32_32 = arith.constant 1 : i32
    %66 = tpu.dynamic_rotate %46 by %c1_i32_32 dim 0 : vector<32x128xf32>, i32 -> vector<32x128xf32>
    %c0_i32_33 = arith.constant 0 : i32
    %67 = tpu.dynamic_rotate %46 by %c0_i32_33 dim 0 : vector<32x128xf32>, i32 -> vector<32x128xf32>
    %c31_i32_34 = arith.constant 31 : i32
    %68 = tpu.dynamic_rotate %46 by %c31_i32_34 dim 0 : vector<32x128xf32>, i32 -> vector<32x128xf32>
    %c30_i32_35 = arith.constant 30 : i32
    %69 = tpu.dynamic_rotate %46 by %c30_i32_35 dim 0 : vector<32x128xf32>, i32 -> vector<32x128xf32>
    %c29_i32_36 = arith.constant 29 : i32
    %70 = tpu.dynamic_rotate %46 by %c29_i32_36 dim 0 : vector<32x128xf32>, i32 -> vector<32x128xf32>
    %71 = tpu.concatenate %64, %65, %66, %67, %68, %69, %70 in 1 : vector<32x128xf32>, vector<32x128xf32>, vector<32x128xf32>, vector<32x128xf32>, vector<32x128xf32>, vector<32x128xf32>, vector<32x128xf32> -> vector<32x896xf32>
    %72 = arith.truncf %71 : vector<32x896xf32> to vector<32x896xbf16>
    %c0_37 = arith.constant 0 : index
    %c0_38 = arith.constant 0 : index
    %73 = vector.load %arg5[%c0_37, %c0_38] : memref<896x128xbf16, #tpu.memory_space<vmem>>, vector<896x128xbf16>
    %cst_39 = arith.constant dense<0.000000e+00> : vector<32x128xf32>
    %74 = tpu.matmul %72, %73, %cst_39 {dimension_numbers = #tpu.dot_dimension_numbers<[1], [0], [0], [1], [0, 0, 1, 1], [], []>} : vector<32x896xbf16>, vector<896x128xbf16>, vector<32x128xf32> -> vector<32x128xf32>
    %75 = vector.broadcast %63 : vector<1x128xf32> to vector<32x128xf32>
    %76 = arith.addf %74, %75 : vector<32x128xf32>
    %cst_40 = arith.constant 0.000000e+00 : f32
    %77 = vector.broadcast %cst_40 : f32 to vector<32x128xf32>
    %78 = arith.maximumf %76, %77 : vector<32x128xf32>
    %cst_41 = arith.constant 0.000000e+00 : f32
    %79 = vector.shape_cast %5 : vector<32x1xi1> to vector<32x1xi1>
    %80 = vector.broadcast %79 : vector<32x1xi1> to vector<32x128xi1>
    %81 = vector.broadcast %cst_41 : f32 to vector<32x128xf32>
    %82 = arith.select %80, %78, %81 : vector<32x128xi1>, vector<32x128xf32>
    %c0_42 = arith.constant 0 : index
    %c0_43 = arith.constant 0 : index
    %83 = vector.load %arg7[%c0_42, %c0_43] : memref<1x128xf32, #tpu.memory_space<vmem>>, vector<1x128xf32>
    %84 = vector.broadcast %83 : vector<1x128xf32> to vector<32x128xf32>
    %85 = arith.mulf %82, %84 : vector<32x128xf32>
    %c0_44 = arith.constant 0 : index
    %c0_45 = arith.constant 0 : index
    %86 = vector.load %arg8[%c0_44, %c0_45] : memref<1x128xf32, #tpu.memory_space<vmem>>, vector<1x128xf32>
    %87 = vector.broadcast %86 : vector<1x128xf32> to vector<32x128xf32>
    %88 = arith.addf %85, %87 : vector<32x128xf32>
    %cst_46 = arith.constant 0.000000e+00 : f32
    %89 = vector.shape_cast %5 : vector<32x1xi1> to vector<32x1xi1>
    %90 = vector.broadcast %89 : vector<32x1xi1> to vector<32x128xi1>
    %91 = vector.broadcast %cst_46 : f32 to vector<32x128xf32>
    %92 = arith.select %90, %88, %91 : vector<32x128xi1>, vector<32x128xf32>
    %93 = arith.addf %82, %46 : vector<32x128xf32>
    %cst_47 = arith.constant -1.000000e+30 : f32
    %94 = vector.shape_cast %5 : vector<32x1xi1> to vector<32x1xi1>
    %95 = vector.broadcast %94 : vector<32x1xi1> to vector<32x128xi1>
    %96 = vector.broadcast %cst_47 : f32 to vector<32x128xf32>
    %97 = arith.select %95, %93, %96 : vector<32x128xi1>, vector<32x128xf32>
    %cst_48 = arith.constant dense<0xFF800000> : vector<128xf32>
    %98 = vector.multi_reduction <maximumf>, %97, %cst_48 [0] : vector<32x128xf32> to vector<128xf32>
    %99 = vector.shape_cast %98 : vector<128xf32> to vector<1x128xf32>
    %c0_49 = arith.constant 0 : index
    %c2 = arith.constant 2 : index
    %c0_50 = arith.constant 0 : index
    %100 = vector.load %arg11[%c0_49, %c2, %c0_50] : memref<1x8x128xf32, #tpu.memory_space<vmem>>, vector<1x1x128xf32>
    %101 = vector.shape_cast %100 : vector<1x1x128xf32> to vector<1x128xf32>
    %102 = vector.shape_cast %99 : vector<1x128xf32> to vector<1x1x128xf32>
    tpu.vector_store %arg11[%c0_49, %c2, %c0_50], %102 {strides = array<i32>} : memref<1x8x128xf32, #tpu.memory_space<vmem>>, vector<1x1x128xf32>,
    %cst_51 = arith.constant dense<0.000000e+00> : vector<128xf32>
    %103 = vector.multi_reduction <add>, %93, %cst_51 [0] : vector<32x128xf32> to vector<128xf32>
    %104 = vector.shape_cast %103 : vector<128xf32> to vector<1x128xf32>
    %cst_52 = arith.constant 0.0434782617 : f32
    %105 = vector.broadcast %cst_52 : f32 to vector<1x128xf32>
    %106 = arith.mulf %104, %105 : vector<1x128xf32>
    %c0_53 = arith.constant 0 : index
    %c6 = arith.constant 6 : index
    %c0_54 = arith.constant 0 : index
    %107 = vector.load %arg11[%c0_53, %c6, %c0_54] : memref<1x8x128xf32, #tpu.memory_space<vmem>>, vector<1x1x128xf32>
    %108 = vector.shape_cast %107 : vector<1x1x128xf32> to vector<1x128xf32>
    %109 = vector.shape_cast %106 : vector<1x128xf32> to vector<1x1x128xf32>
    tpu.vector_store %arg11[%c0_53, %c6, %c0_54], %109 {strides = array<i32>} : memref<1x8x128xf32, #tpu.memory_space<vmem>>, vector<1x1x128xf32>,
    %c0_55 = arith.constant 0 : index
    %c0_56 = arith.constant 0 : index
    %110 = vector.load %arg10[%c0_55, %c0_56] : memref<1x128xf32, #tpu.memory_space<vmem>>, vector<1x128xf32>
    %c3_i32_57 = arith.constant 3 : i32
    %111 = tpu.dynamic_rotate %92 by %c3_i32_57 dim 0 : vector<32x128xf32>, i32 -> vector<32x128xf32>
    %c2_i32_58 = arith.constant 2 : i32
    %112 = tpu.dynamic_rotate %92 by %c2_i32_58 dim 0 : vector<32x128xf32>, i32 -> vector<32x128xf32>
    %c1_i32_59 = arith.constant 1 : i32
    %113 = tpu.dynamic_rotate %92 by %c1_i32_59 dim 0 : vector<32x128xf32>, i32 -> vector<32x128xf32>
    %c0_i32_60 = arith.constant 0 : i32
    %114 = tpu.dynamic_rotate %92 by %c0_i32_60 dim 0 : vector<32x128xf32>, i32 -> vector<32x128xf32>
    %c31_i32_61 = arith.constant 31 : i32
    %115 = tpu.dynamic_rotate %92 by %c31_i32_61 dim 0 : vector<32x128xf32>, i32 -> vector<32x128xf32>
    %c30_i32_62 = arith.constant 30 : i32
    %116 = tpu.dynamic_rotate %92 by %c30_i32_62 dim 0 : vector<32x128xf32>, i32 -> vector<32x128xf32>
    %c29_i32_63 = arith.constant 29 : i32
    %117 = tpu.dynamic_rotate %92 by %c29_i32_63 dim 0 : vector<32x128xf32>, i32 -> vector<32x128xf32>
    %118 = tpu.concatenate %111, %112, %113, %114, %115, %116, %117 in 1 : vector<32x128xf32>, vector<32x128xf32>, vector<32x128xf32>, vector<32x128xf32>, vector<32x128xf32>, vector<32x128xf32>, vector<32x128xf32> -> vector<32x896xf32>
    %119 = arith.truncf %118 : vector<32x896xf32> to vector<32x896xbf16>
    %c0_64 = arith.constant 0 : index
    %c0_65 = arith.constant 0 : index
    %120 = vector.load %arg9[%c0_64, %c0_65] : memref<896x128xbf16, #tpu.memory_space<vmem>>, vector<896x128xbf16>
    %cst_66 = arith.constant dense<0.000000e+00> : vector<32x128xf32>
    %121 = tpu.matmul %119, %120, %cst_66 {dimension_numbers = #tpu.dot_dimension_numbers<[1], [0], [0], [1], [0, 0, 1, 1], [], []>} : vector<32x896xbf16>, vector<896x128xbf16>, vector<32x128xf32> -> vector<32x128xf32>
    %122 = vector.broadcast %110 : vector<1x128xf32> to vector<32x128xf32>
    %123 = arith.addf %121, %122 : vector<32x128xf32>
    %cst_67 = arith.constant 0.000000e+00 : f32
    %124 = vector.broadcast %cst_67 : f32 to vector<32x128xf32>
    %125 = arith.maximumf %123, %124 : vector<32x128xf32>
    %cst_68 = arith.constant 0.000000e+00 : f32
    %126 = vector.shape_cast %5 : vector<32x1xi1> to vector<32x1xi1>
    %127 = vector.broadcast %126 : vector<32x1xi1> to vector<32x128xi1>
    %128 = vector.broadcast %cst_68 : f32 to vector<32x128xf32>
    %129 = arith.select %127, %125, %128 : vector<32x128xi1>, vector<32x128xf32>
    %130 = arith.addf %93, %129 : vector<32x128xf32>
    %cst_69 = arith.constant -1.000000e+30 : f32
    %131 = vector.shape_cast %5 : vector<32x1xi1> to vector<32x1xi1>
    %132 = vector.broadcast %131 : vector<32x1xi1> to vector<32x128xi1>
    %133 = vector.broadcast %cst_69 : f32 to vector<32x128xf32>
    %134 = arith.select %132, %130, %133 : vector<32x128xi1>, vector<32x128xf32>
    %cst_70 = arith.constant dense<0xFF800000> : vector<128xf32>
    %135 = vector.multi_reduction <maximumf>, %134, %cst_70 [0] : vector<32x128xf32> to vector<128xf32>
    %136 = vector.shape_cast %135 : vector<128xf32> to vector<1x128xf32>
    %c0_71 = arith.constant 0 : index
    %c3 = arith.constant 3 : index
    %c0_72 = arith.constant 0 : index
    %137 = vector.load %arg11[%c0_71, %c3, %c0_72] : memref<1x8x128xf32, #tpu.memory_space<vmem>>, vector<1x1x128xf32>
    %138 = vector.shape_cast %137 : vector<1x1x128xf32> to vector<1x128xf32>
    %139 = vector.shape_cast %136 : vector<1x128xf32> to vector<1x1x128xf32>
    tpu.vector_store %arg11[%c0_71, %c3, %c0_72], %139 {strides = array<i32>} : memref<1x8x128xf32, #tpu.memory_space<vmem>>, vector<1x1x128xf32>,
    %cst_73 = arith.constant dense<0.000000e+00> : vector<128xf32>
    %140 = vector.multi_reduction <add>, %130, %cst_73 [0] : vector<32x128xf32> to vector<128xf32>
    %141 = vector.shape_cast %140 : vector<128xf32> to vector<1x128xf32>
    %cst_74 = arith.constant 0.0434782617 : f32
    %142 = vector.broadcast %cst_74 : f32 to vector<1x128xf32>
    %143 = arith.mulf %141, %142 : vector<1x128xf32>
    %c0_75 = arith.constant 0 : index
    %c7 = arith.constant 7 : index
    %c0_76 = arith.constant 0 : index
    %144 = vector.load %arg11[%c0_75, %c7, %c0_76] : memref<1x8x128xf32, #tpu.memory_space<vmem>>, vector<1x1x128xf32>
    %145 = vector.shape_cast %144 : vector<1x1x128xf32> to vector<1x128xf32>
    %146 = vector.shape_cast %143 : vector<1x128xf32> to vector<1x1x128xf32>
    tpu.vector_store %arg11[%c0_75, %c7, %c0_76], %146 {strides = array<i32>} : memref<1x8x128xf32, #tpu.memory_space<vmem>>, vector<1x1x128xf32>,
    return
  }
  func.func @transform_0(%arg0: i32) -> (i32, i32, i32) {
    %c0_i32 = arith.constant 0 : i32
    %c0_i32_0 = arith.constant 0 : i32
    %c0_i32_1 = arith.constant 0 : i32
    return %arg0, %c0_i32, %c0_i32_0 : i32, i32, i32
  }
  func.func @transform_1(%arg0: i32) -> (i32, i32) {
    %c0_i32 = arith.constant 0 : i32
    %c0_i32_0 = arith.constant 0 : i32
    %c0_i32_1 = arith.constant 0 : i32
    return %c0_i32, %c0_i32_0 : i32, i32
  }
  func.func @transform_2(%arg0: i32) -> (i32, i32) {
    %c0_i32 = arith.constant 0 : i32
    %c0_i32_0 = arith.constant 0 : i32
    %c0_i32_1 = arith.constant 0 : i32
    return %c0_i32, %c0_i32_0 : i32, i32
  }
  func.func @transform_3(%arg0: i32) -> (i32, i32) {
    %c0_i32 = arith.constant 0 : i32
    %c0_i32_0 = arith.constant 0 : i32
    %c0_i32_1 = arith.constant 0 : i32
    return %c0_i32, %c0_i32_0 : i32, i32
  }
  func.func @transform_4(%arg0: i32) -> (i32, i32) {
    %c0_i32 = arith.constant 0 : i32
    %c0_i32_0 = arith.constant 0 : i32
    %c0_i32_1 = arith.constant 0 : i32
    return %c0_i32, %c0_i32_0 : i32, i32
  }
  func.func @transform_5(%arg0: i32) -> (i32, i32) {
    %c0_i32 = arith.constant 0 : i32
    %c0_i32_0 = arith.constant 0 : i32
    %c0_i32_1 = arith.constant 0 : i32
    return %c0_i32, %c0_i32_0 : i32, i32
  }
  func.func @transform_6(%arg0: i32) -> (i32, i32) {
    %c0_i32 = arith.constant 0 : i32
    %c0_i32_0 = arith.constant 0 : i32
    %c0_i32_1 = arith.constant 0 : i32
    return %c0_i32, %c0_i32_0 : i32, i32
  }
  func.func @transform_7(%arg0: i32) -> (i32, i32) {
    %c0_i32 = arith.constant 0 : i32
    %c0_i32_0 = arith.constant 0 : i32
    %c0_i32_1 = arith.constant 0 : i32
    return %c0_i32, %c0_i32_0 : i32, i32
  }
  func.func @transform_8(%arg0: i32) -> (i32, i32) {
    %c0_i32 = arith.constant 0 : i32
    %c0_i32_0 = arith.constant 0 : i32
    %c0_i32_1 = arith.constant 0 : i32
    return %c0_i32, %c0_i32_0 : i32, i32
  }
  func.func @transform_9(%arg0: i32) -> (i32, i32) {
    %c0_i32 = arith.constant 0 : i32
    %c0_i32_0 = arith.constant 0 : i32
    %c0_i32_1 = arith.constant 0 : i32
    return %c0_i32, %c0_i32_0 : i32, i32
  }
  func.func @transform_10(%arg0: i32) -> (i32, i32, i32) {
    %c0_i32 = arith.constant 0 : i32
    %c0_i32_0 = arith.constant 0 : i32
    %c0_i32_1 = arith.constant 0 : i32
    return %arg0, %c0_i32, %c0_i32_0 : i32, i32, i32
  }
}

module attributes {stable_mosaic.version = 11 : i64} {
  func.func @_head_kernel(%arg0: memref<2x1024xf32, #tpu.memory_space<vmem>>, %arg1: memref<1024x200xf32, #tpu.memory_space<vmem>>, %arg2: memref<1x200xf32, #tpu.memory_space<vmem>>, %arg3: memref<200x128xf32, #tpu.memory_space<vmem>>, %arg4: memref<1x128xf32, #tpu.memory_space<vmem>>, %arg5: memref<2x128xf32, #tpu.memory_space<vmem>>) attributes {dimension_semantics = [], scalar_prefetch = 0 : i64, scratch_operands = 0 : i64, tpu.core_type = #tpu.core_type<tc>} {
    %c0 = arith.constant 0 : index
    %c0_0 = arith.constant 0 : index
    %0 = vector.load %arg0[%c0, %c0_0] : memref<2x1024xf32, #tpu.memory_space<vmem>>, vector<2x1024xf32>
    %c0_1 = arith.constant 0 : index
    %c0_2 = arith.constant 0 : index
    %1 = vector.load %arg1[%c0_1, %c0_2] : memref<1024x200xf32, #tpu.memory_space<vmem>>, vector<1024x200xf32>
    %cst = arith.constant dense<0.000000e+00> : vector<2x200xf32>
    %2 = tpu.matmul %0, %1, %cst {dimension_numbers = #tpu.dot_dimension_numbers<[1], [0], [0], [1], [0, 0, 1, 1], [], []>} : vector<2x1024xf32>, vector<1024x200xf32>, vector<2x200xf32> -> vector<2x200xf32>
    %c0_3 = arith.constant 0 : index
    %c0_4 = arith.constant 0 : index
    %3 = vector.load %arg2[%c0_3, %c0_4] : memref<1x200xf32, #tpu.memory_space<vmem>>, vector<1x200xf32>
    %4 = vector.broadcast %3 : vector<1x200xf32> to vector<2x200xf32>
    %5 = arith.addf %2, %4 : vector<2x200xf32>
    %cst_5 = arith.constant 0.000000e+00 : f32
    %6 = vector.broadcast %cst_5 : f32 to vector<2x200xf32>
    %7 = arith.maximumf %5, %6 : vector<2x200xf32>
    %c0_6 = arith.constant 0 : index
    %c0_7 = arith.constant 0 : index
    %8 = vector.load %arg3[%c0_6, %c0_7] : memref<200x128xf32, #tpu.memory_space<vmem>>, vector<200x128xf32>
    %cst_8 = arith.constant dense<0.000000e+00> : vector<2x128xf32>
    %9 = tpu.matmul %7, %8, %cst_8 {dimension_numbers = #tpu.dot_dimension_numbers<[1], [0], [0], [1], [0, 0, 1, 1], [], []>} : vector<2x200xf32>, vector<200x128xf32>, vector<2x128xf32> -> vector<2x128xf32>
    %c0_9 = arith.constant 0 : index
    %c0_10 = arith.constant 0 : index
    %10 = vector.load %arg4[%c0_9, %c0_10] : memref<1x128xf32, #tpu.memory_space<vmem>>, vector<1x128xf32>
    %11 = vector.broadcast %10 : vector<1x128xf32> to vector<2x128xf32>
    %12 = arith.addf %9, %11 : vector<2x128xf32>
    %13 = arith.negf %12 : vector<2x128xf32>
    %14 = math.exp %13 : vector<2x128xf32>
    %cst_11 = arith.constant 1.000000e+00 : f32
    %15 = vector.broadcast %cst_11 : f32 to vector<2x128xf32>
    %16 = arith.addf %15, %14 : vector<2x128xf32>
    %17 = arith.divf %15, %16 : vector<2x128xf32>
    %c0_12 = arith.constant 0 : index
    %c0_13 = arith.constant 0 : index
    %18 = vector.load %arg5[%c0_12, %c0_13] : memref<2x128xf32, #tpu.memory_space<vmem>>, vector<2x128xf32>
    tpu.vector_store %arg5[%c0_12, %c0_13], %17 {strides = array<i32>} : memref<2x128xf32, #tpu.memory_space<vmem>>, vector<2x128xf32>,
    return
  }
}

</mosaic_0001>

<llo_original>
// kernel: musicnn_forward.4
$region0: #{musicnn_forward.4}
  #allocation0 [shape = 'u32[]', space=smem, size = 0x4, offset = 0x4, fixed_abs, tag = 'smem constant byte address 0x4 - core index']
  #allocation1 [shape = 'u32[144,128]{1,0:T(1,128)}', space=vmem, size = 0x12000, scoped, tag = 'internal scratch']
  %s0 = inlined_call_operand.vmem [shape: f32[48,64], index: 0, kind: input, shape index: {}]
  %s1 = inlined_call_operand.vmem [shape: f32[64,128], index: 1, kind: input, shape index: {}]
  %s2 = inlined_call_operand.vmem [shape: f32[128,128], index: 2, kind: input, shape index: {}]
  %s3 = inlined_call_operand.vmem [shape: f32[48,128], index: 3, kind: output, shape index: {}]
  %s4 = sld [smem:[#allocation0]]
  $region22: #{musicnn_forward.4} parent=0
    _
  %s6 = ssub.s32 1, %s4
  %s7 = scalar_select 0, %s6, %s4
  // Predicated region
  $region2: #{musicnn_forward.4} parent=0 // pred_check
    _
  $region3: #{musicnn_forward.4} parent=0 // pred_check_branch
    %9 = sbr.rel (0) target = $region5
  $region4: #{musicnn_forward.4} parent=0 // pred_region
    _
  $region5: #{musicnn_forward.4} parent=0 // pred_fallthru
    _
  // Predicated region
  $region6: #{musicnn_forward.4} parent=0 // pred_check
    _
  $region7: #{musicnn_forward.4} parent=0 // pred_check_branch
    %11 = sbr.rel (0) target = $region9
  $region8: #{musicnn_forward.4} parent=0 // pred_region
    _
  $region9: #{musicnn_forward.4} parent=0 // pred_fallthru
    _
  // Predicated region
  $region10: #{musicnn_forward.4} parent=0 // pred_check
    _
  $region11: #{musicnn_forward.4} parent=0 // pred_check_branch
    %13 = sbr.rel (0) target = $region13
  $region12: #{musicnn_forward.4} parent=0 // pred_region
    _
  $region13: #{musicnn_forward.4} parent=0 // pred_fallthru
    _
  %v14 = vld [vmem:[%s0] sm:$0xff]
  %v15 = vld [vmem:[%s0 + $0x8] sm:$0xff]
  %v16 = vld [vmem:[%s0 + $0x10] sm:$0xff]
  %v17 = vld [vmem:[%s0 + $0x18] sm:$0xff]
  %v18 = vld [vmem:[%s0 + $0x20] sm:$0xff]
  %v19 = vld [vmem:[%s0 + $0x28] sm:$0xff]
  %v20 = vld [vmem:[%s1] sm:$0xff]
  %v21 = vld [vmem:[%s1 + $0x8] sm:$0xff]
  %v22 = vld [vmem:[%s1 + $0x10] sm:$0xff]
  %v23 = vld [vmem:[%s1 + $0x18] sm:$0xff]
  %v24 = vld [vmem:[%s1 + $0x20] sm:$0xff]
  %v25 = vld [vmem:[%s1 + $0x28] sm:$0xff]
  %v26 = vld [vmem:[%s1 + $0x30] sm:$0xff]
  %v27 = vld [vmem:[%s1 + $0x38] sm:$0xff]
  %vm28 = vcmask 523264
  %v30 = vsel %vm28, %v14, 0
  %v33 = vsel %vm28, %v15, 0
  %v36 = vsel %vm28, %v16, 0
  %v39 = vsel %vm28, %v17, 0
  %v42 = vsel %vm28, %v18, 0
  %v45 = vsel %vm28, %v19, 0
  %47 = vmatprep.subr.mxu0 0.0
  %48 = vmatpush1.msra.mxu0 0.0
  %49 = vmatprep.subr.mxu0 0.0
  %50 = vmatpush1.msra.mxu0 0.0
  %51 = vmatprep.subr.mxu0 0.0
  %52 = vmatpush1.msra.mxu0 0.0
  %53 = vmatprep.subr.mxu0 0.0
  %54 = vmatpush1.msra.mxu0 0.0
  %55 = vmatprep.subr.mxu0 0.0
  %56 = vmatpush1.msra.mxu0 0.0
  %57 = vmatprep.subr.mxu0 0.0
  %58 = vmatpush1.msra.mxu0 0.0
  %59 = vmatprep.subr.mxu0 0.0
  %60 = vmatpush1.msra.mxu0 0.0
  %61 = vmatprep.subr.mxu0 0.0
  %62 = vmatpush1.msra.mxu0 0.0
  %63 = vmatprep.subr.mxu0 0.0
  %64 = vmatpush1.msra.mxu0 %v27
  %65 = vmatprep.subr.mxu0 0.0
  %66 = vmatpush1.msra.mxu0 %v26
  %67 = vmatprep.subr.mxu0 0.0
  %68 = vmatpush1.msra.mxu0 %v25
  %69 = vmatprep.subr.mxu0 0.0
  %70 = vmatpush1.msra.mxu0 %v24
  %71 = vmatprep.subr.mxu0 0.0
  %72 = vmatpush1.msra.mxu0 %v23
  %73 = vmatprep.subr.mxu0 0.0
  %74 = vmatpush1.msra.mxu0 %v22
  %75 = vmatprep.subr.mxu0 0.0
  %76 = vmatpush1.msra.mxu0 %v21
  %77 = vmatprep.subr.mxu0 0.0
  %78 = vmatpush1.msra.mxu0 %v20
  %79 = vmatprep.subr.mxu0 0.0
  %80 = vmatpush2.msra.mxu0 0.0
  %81 = vmatprep.subr.mxu0 0.0
  %82 = vmatpush2.msra.mxu0 0.0
  %83 = vmatprep.subr.mxu0 0.0
  %84 = vmatpush2.msra.mxu0 0.0
  %85 = vmatprep.subr.mxu0 0.0
  %86 = vmatpush2.msra.mxu0 0.0
  %87 = vmatprep.subr.mxu0 0.0
  %88 = vmatpush2.msra.mxu0 0.0
  %89 = vmatprep.subr.mxu0 0.0
  %90 = vmatpush2.msra.mxu0 0.0
  %91 = vmatprep.subr.mxu0 0.0
  %92 = vmatpush2.msra.mxu0 0.0
  %93 = vmatprep.subr.mxu0 0.0
  %94 = vmatpush2.msra.mxu0 0.0
  %95 = vmatprep.subr.mxu0 0.0
  %96 = vmatpush2.msra.mxu0 0.0
  %97 = vmatprep.subr.mxu0 0.0
  %98 = vmatpush2.msra.mxu0 0.0
  %99 = vmatprep.subr.mxu0 0.0
  %100 = vmatpush2.msra.mxu0 0.0
  %101 = vmatprep.subr.mxu0 0.0
  %102 = vmatpush2.msra.mxu0 0.0
  %103 = vmatprep.subr.mxu0 0.0
  %104 = vmatpush2.msra.mxu0 0.0
  %105 = vmatprep.subr.mxu0 0.0
  %106 = vmatpush2.msra.mxu0 0.0
  %107 = vmatprep.subr.mxu0 0.0
  %108 = vmatpush2.msra.mxu0 0.0
  %109 = vmatprep.subr.mxu0 0.0
  %110 = vmatpush2.msra.mxu0 0.0
  %111 = vmatprep.mubr.f32.mxu0 0.0
  %112 = vmatmul.mubr.f32.gmra.mxu0 %v30
  %v113 = vpop.f32.mrf.mxu0
  %v114 = vadd.f32 0.0, %v113
  %v115 = vpop.f32.mrf.mxu0
  %116 = vmatprep.mubr.f32.mxu0 0.0
  %117 = vmatmul.mubr.f32.gmra.mxu0 %v33
  %v118 = vpop.f32.mrf.mxu0
  %v119 = vadd.f32 0.0, %v118
  %v120 = vpop.f32.mrf.mxu0
  %121 = vmatprep.mubr.f32.mxu0 0.0
  %122 = vmatmul.mubr.f32.gmra.mxu0 %v36
  %v123 = vpop.f32.mrf.mxu0
  %v124 = vadd.f32 0.0, %v123
  %v125 = vpop.f32.mrf.mxu0
  %126 = vmatprep.mubr.f32.mxu0 0.0
  %127 = vmatmul.mubr.f32.gmra.mxu0 %v39
  %v128 = vpop.f32.mrf.mxu0
  %v129 = vadd.f32 0.0, %v128
  %v130 = vpop.f32.mrf.mxu0
  %131 = vmatprep.mubr.f32.mxu0 0.0
  %132 = vmatmul.mubr.f32.gmra.mxu0 %v42
  %v133 = vpop.f32.mrf.mxu0
  %v134 = vadd.f32 0.0, %v133
  %v135 = vpop.f32.mrf.mxu0
  %136 = vmatprep.mubr.f32.mxu0 0.0
  %137 = vmatmul.mubr.f32.gmra.mxu0 %v45
  %v138 = vpop.f32.mrf.mxu0
  %v139 = vadd.f32 0.0, %v138
  %v140 = vpop.f32.mrf.mxu0
  %141 = vdwg.mxu0
  %v142 = vmul.f32 %v114, %v114
  %v143 = vmul.f32 %v119, %v119
  %v144 = vmul.f32 %v124, %v124
  %v145 = vmul.f32 %v129, %v129
  %v146 = vmul.f32 %v134, %v134
  %v147 = vmul.f32 %v139, %v139
  %v148 = vld [vmem:[%s2] sm:$0xff]
  %v149 = vld [vmem:[%s2 + $0x8] sm:$0xff]
  %v150 = vld [vmem:[%s2 + $0x10] sm:$0xff]
  %v151 = vld [vmem:[%s2 + $0x18] sm:$0xff]
  %v152 = vld [vmem:[%s2 + $0x20] sm:$0xff]
  %v153 = vld [vmem:[%s2 + $0x28] sm:$0xff]
  %v154 = vld [vmem:[%s2 + $0x30] sm:$0xff]
  %v155 = vld [vmem:[%s2 + $0x38] sm:$0xff]
  %v156 = vld [vmem:[%s2 + $0x40] sm:$0xff]
  %v157 = vld [vmem:[%s2 + $0x48] sm:$0xff]
  %v158 = vld [vmem:[%s2 + $0x50] sm:$0xff]
  %v159 = vld [vmem:[%s2 + $0x58] sm:$0xff]
  %v160 = vld [vmem:[%s2 + $0x60] sm:$0xff]
  %v161 = vld [vmem:[%s2 + $0x68] sm:$0xff]
  %v162 = vld [vmem:[%s2 + $0x70] sm:$0xff]
  %v163 = vld [vmem:[%s2 + $0x78] sm:$0xff]
  %164 = vmatprep.subr.mxu0 0.0
  %165 = vmatpush1.msra.mxu0 %v163
  %166 = vmatprep.subr.mxu0 0.0
  %167 = vmatpush1.msra.mxu0 %v162
  %168 = vmatprep.subr.mxu0 0.0
  %169 = vmatpush1.msra.mxu0 %v161
  %170 = vmatprep.subr.mxu0 0.0
  %171 = vmatpush1.msra.mxu0 %v160
  %172 = vmatprep.subr.mxu0 0.0
  %173 = vmatpush1.msra.mxu0 %v159
  %174 = vmatprep.subr.mxu0 0.0
  %175 = vmatpush1.msra.mxu0 %v158
  %176 = vmatprep.subr.mxu0 0.0
  %177 = vmatpush1.msra.mxu0 %v157
  %178 = vmatprep.subr.mxu0 0.0
  %179 = vmatpush1.msra.mxu0 %v156
  %180 = vmatprep.subr.mxu0 0.0
  %181 = vmatpush1.msra.mxu0 %v155
  %182 = vmatprep.subr.mxu0 0.0
  %183 = vmatpush1.msra.mxu0 %v154
  %184 = vmatprep.subr.mxu0 0.0
  %185 = vmatpush1.msra.mxu0 %v153
  %186 = vmatprep.subr.mxu0 0.0
  %187 = vmatpush1.msra.mxu0 %v152
  %188 = vmatprep.subr.mxu0 0.0
  %189 = vmatpush1.msra.mxu0 %v151
  %190 = vmatprep.subr.mxu0 0.0
  %191 = vmatpush1.msra.mxu0 %v150
  %192 = vmatprep.subr.mxu0 0.0
  %193 = vmatpush1.msra.mxu0 %v149
  %194 = vmatprep.subr.mxu0 0.0
  %195 = vmatpush1.msra.mxu0 %v148
  %196 = vmatprep.subr.mxu0 0.0
  %197 = vmatpush2.msra.mxu0 0.0
  %198 = vmatprep.subr.mxu0 0.0
  %199 = vmatpush2.msra.mxu0 0.0
  %200 = vmatprep.subr.mxu0 0.0
  %201 = vmatpush2.msra.mxu0 0.0
  %202 = vmatprep.subr.mxu0 0.0
  %203 = vmatpush2.msra.mxu0 0.0
  %204 = vmatprep.subr.mxu0 0.0
  %205 = vmatpush2.msra.mxu0 0.0
  %206 = vmatprep.subr.mxu0 0.0
  %207 = vmatpush2.msra.mxu0 0.0
  %208 = vmatprep.subr.mxu0 0.0
  %209 = vmatpush2.msra.mxu0 0.0
  %210 = vmatprep.subr.mxu0 0.0
  %211 = vmatpush2.msra.mxu0 0.0
  %212 = vmatprep.subr.mxu0 0.0
  %213 = vmatpush2.msra.mxu0 0.0
  %214 = vmatprep.subr.mxu0 0.0
  %215 = vmatpush2.msra.mxu0 0.0
  %216 = vmatprep.subr.mxu0 0.0
  %217 = vmatpush2.msra.mxu0 0.0
  %218 = vmatprep.subr.mxu0 0.0
  %219 = vmatpush2.msra.mxu0 0.0
  %220 = vmatprep.subr.mxu0 0.0
  %221 = vmatpush2.msra.mxu0 0.0
  %222 = vmatprep.subr.mxu0 0.0
  %223 = vmatpush2.msra.mxu0 0.0
  %224 = vmatprep.subr.mxu0 0.0
  %225 = vmatpush2.msra.mxu0 0.0
  %226 = vmatprep.subr.mxu0 0.0
  %227 = vmatpush2.msra.mxu0 0.0
  %228 = vmatprep.mubr.f32.mxu0 0.0
  %229 = vmatmul.mubr.f32.gmra.mxu0 %v142
  %v230 = vpop.f32.mrf.mxu0
  %v231 = vadd.f32 1e-08, %v230
  %v232 = vpop.f32.mrf.mxu0
  %233 = vmatprep.mubr.f32.mxu0 0.0
  %234 = vmatmul.mubr.f32.gmra.mxu0 %v143
  %v235 = vpop.f32.mrf.mxu0
  %v236 = vadd.f32 1e-08, %v235
  %v237 = vpop.f32.mrf.mxu0
  %238 = vmatprep.mubr.f32.mxu0 0.0
  %239 = vmatmul.mubr.f32.gmra.mxu0 %v144
  %v240 = vpop.f32.mrf.mxu0
  %v241 = vadd.f32 1e-08, %v240
  %v242 = vpop.f32.mrf.mxu0
  %243 = vmatprep.mubr.f32.mxu0 0.0
  %244 = vmatmul.mubr.f32.gmra.mxu0 %v145
  %v245 = vpop.f32.mrf.mxu0
  %v246 = vadd.f32 1e-08, %v245
  %v247 = vpop.f32.mrf.mxu0
  %248 = vmatprep.mubr.f32.mxu0 0.0
  %249 = vmatmul.mubr.f32.gmra.mxu0 %v146
  %v250 = vpop.f32.mrf.mxu0
  %v251 = vadd.f32 1e-08, %v250
  %v252 = vpop.f32.mrf.mxu0
  %253 = vmatprep.mubr.f32.mxu0 0.0
  %254 = vmatmul.mubr.f32.gmra.mxu0 %v147
  %v255 = vpop.f32.mrf.mxu0
  %v256 = vadd.f32 1e-08, %v255
  %v257 = vpop.f32.mrf.mxu0
  %258 = vdwg.mxu0
  %v259 = vlog2.pop %v231
  %v260 = vmul.f32 %v259, 0.6931472
  %v261 = vlog2.pop %v236
  %v262 = vmul.f32 %v261, 0.6931472
  %v263 = vlog2.pop %v241
  %v264 = vmul.f32 %v263, 0.6931472
  %v265 = vlog2.pop %v246
  %v266 = vmul.f32 %v265, 0.6931472
  %v267 = vlog2.pop %v251
  %v268 = vmul.f32 %v267, 0.6931472
  %v269 = vlog2.pop %v256
  %v270 = vmul.f32 %v269, 0.6931472
  %271 = vst [vmem:[%s3] sm:$0xff] %v260
  %272 = vst [vmem:[%s3 + $0x8] sm:$0xff] %v262
  %273 = vst [vmem:[%s3 + $0x10] sm:$0xff] %v264
  %274 = vst [vmem:[%s3 + $0x18] sm:$0xff] %v266
  %275 = vst [vmem:[%s3 + $0x20] sm:$0xff] %v268
  %276 = vst [vmem:[%s3 + $0x28] sm:$0xff] %v270
  // Predicated region
  $region14: #{musicnn_forward.4} parent=0 // pred_check
    _
  $region15: #{musicnn_forward.4} parent=0 // pred_check_branch
    %278 = sbr.rel (0) target = $region17
  $region16: #{musicnn_forward.4} parent=0 // pred_region
    _
  $region17: #{musicnn_forward.4} parent=0 // pred_fallthru
    _
  // Predicated region
  $region18: #{musicnn_forward.4} parent=0 // pred_check
    _
  $region19: #{musicnn_forward.4} parent=0 // pred_check_branch
    %280 = sbr.rel (0) target = $region21
  $region20: #{musicnn_forward.4} parent=0 // pred_region
    _
  $region21: #{musicnn_forward.4} parent=0 // pred_fallthru
    _

// kernel: musicnn_forward.5
$region0: #{musicnn_forward.5}
  #allocation0 [shape = 'u32[]', space=smem, size = 0x4, offset = 0x4, fixed_abs, tag = 'smem constant byte address 0x4 - core index']
  #allocation1 [shape = 'u32[144,128]{1,0:T(1,128)}', space=vmem, size = 0x12000, scoped, tag = 'internal scratch']
  %s0 = inlined_call_operand.vmem [shape: f32[2,32,128], index: 0, kind: input, shape index: {}]
  %s1 = inlined_call_operand.vmem [shape: bf16[3,128,128], index: 1, kind: input, shape index: {}]
  %s2 = inlined_call_operand.vmem [shape: f32[1,128], index: 2, kind: input, shape index: {}]
  %s3 = inlined_call_operand.vmem [shape: bf16[128,128], index: 3, kind: input, shape index: {}]
  %s4 = inlined_call_operand.vmem [shape: f32[1,128], index: 4, kind: input, shape index: {}]
  %s5 = inlined_call_operand.vmem [shape: f32[1,128], index: 5, kind: input, shape index: {}]
  %s6 = inlined_call_operand.vmem [shape: f32[2,32,128], index: 6, kind: output, shape index: {}]
  %s7 = sld [smem:[#allocation0]]
  $region57: #{musicnn_forward.5} parent=0
    _
  %s9 = ssub.s32 1, %s7
  %s10 = scalar_select 0, %s9, %s7
  loop: start=0, step=1, limit=4
  $region2: #{musicnn_forward.5} parent=0 // loop_pre_header
    _
  $region3: #{musicnn_forward.5} parent=0 // loop_header
    %s12 = sphi 0, %s16
    %p13 = scmp.ge.s32.totalorder %s12, 4
    %s22 = sphi 0, %s24
    %s25 = sphi 0, %s22
    %s26 = sphi 0, %s25
    %s42 = sphi 0, %s26
    %s46 = sphi 0, %s46
    %s48 = sphi 0, %s46
    %s49 = sphi 0, %s48
    %s63 = sphi 0, %s49
    %s67 = sphi 0, %s67
    %s69 = sphi 0, %s67
    %s70 = sphi 0, %s69
    %s84 = sphi 0, %s70
    %s88 = sphi 0, %s88
    %s90 = sphi 0, %s88
    %s91 = sphi 0, %s90
    %s105 = sphi 0, %s91
    %s109 = sphi 0, %s109
    %s111 = sphi 0, %s109
    %s112 = sphi 0, %s111
    %s126 = sphi 0, %s112
    %s130 = sphi 0, %s130
    %s132 = sphi 0, %s130
    %s133 = sphi 0, %s132
    %s147 = sphi 0, %s133
    %s153 = sphi 0, %s155
    %s156 = sphi 0, %s153
    %s157 = sphi 0, %s156
    %s173 = sphi 0, %s157
  $region4: #{musicnn_forward.5} parent=0 // loop_header_branch
    %15 = sbr.rel (%p13) target = $region8
  $region5: #{musicnn_forward.5} parent=0 // loop_body
    %s17 = ssub.s32 %s12, 1
    %s18 = ssub.s32 %s12, 2
    %s19 = sadd.s32 %s12, 1
    %s20 = ssub.s32 %s12, %s19
    %p21 = scmp.eq.s32.totalorder %s20, 0
    %s23 = sadd.s32 %s22, 1
    %s24 = scalar_select %p21, %s22, %s23
    %p27 = pneg %p21
    %p28 = scmp.eq.s32.totalorder %s12, 1
    %p29 = por %p27, %p28
    %p30 = scmp.ne.s32.totalorder %s22, %s25
    %p31 = scmp.eq.s32.totalorder %s12, 0
    %p32 = por %p30, %p31
    %p33 = scmp.ne.s32.totalorder %s22, %s25
    %p34 = scmp.eq.s32.totalorder %s17, 1
    %p35 = por %p33, %p34
    %p36 = scmp.ne.s32.totalorder %s25, %s26
    %p37 = scmp.eq.s32.totalorder %s17, 0
    %p38 = por %p36, %p37
    %p39 = scmp.ne.s32.totalorder %s25, %s26
    %p40 = scmp.eq.s32.totalorder %s18, 1
    %p41 = por %p39, %p40
    %p43 = scmp.ne.s32.totalorder %s26, %s42
    %p44 = scmp.eq.s32.totalorder %s18, 0
    %p45 = por %p43, %p44
    %s47 = sadd.s32 %s46, 1
    %p50 = scmp.eq.s32.totalorder %s12, 1
    %p51 = scmp.ne.s32.totalorder %s46, %s48
    %p52 = scmp.eq.s32.totalorder %s12, 0
    %p53 = por %p51, %p52
    %p54 = scmp.ne.s32.totalorder %s46, %s48
    %p55 = scmp.eq.s32.totalorder %s17, 1
    %p56 = por %p54, %p55
    %p57 = scmp.ne.s32.totalorder %s48, %s49
    %p58 = scmp.eq.s32.totalorder %s17, 0
    %p59 = por %p57, %p58
    %p60 = scmp.ne.s32.totalorder %s48, %s49
    %p61 = scmp.eq.s32.totalorder %s18, 1
    %p62 = por %p60, %p61
    %p64 = scmp.ne.s32.totalorder %s49, %s63
    %p65 = scmp.eq.s32.totalorder %s18, 0
    %p66 = por %p64, %p65
    %s68 = sadd.s32 %s67, 1
    %p71 = scmp.eq.s32.totalorder %s12, 1
    %p72 = scmp.ne.s32.totalorder %s67, %s69
    %p73 = scmp.eq.s32.totalorder %s12, 0
    %p74 = por %p72, %p73
    %p75 = scmp.ne.s32.totalorder %s67, %s69
    %p76 = scmp.eq.s32.totalorder %s17, 1
    %p77 = por %p75, %p76
    %p78 = scmp.ne.s32.totalorder %s69, %s70
    %p79 = scmp.eq.s32.totalorder %s17, 0
    %p80 = por %p78, %p79
    %p81 = scmp.ne.s32.totalorder %s69, %s70
    %p82 = scmp.eq.s32.totalorder %s18, 1
    %p83 = por %p81, %p82
    %p85 = scmp.ne.s32.totalorder %s70, %s84
    %p86 = scmp.eq.s32.totalorder %s18, 0
    %p87 = por %p85, %p86
    %s89 = sadd.s32 %s88, 1
    %p92 = scmp.eq.s32.totalorder %s12, 1
    %p93 = scmp.ne.s32.totalorder %s88, %s90
    %p94 = scmp.eq.s32.totalorder %s12, 0
    %p95 = por %p93, %p94
    %p96 = scmp.ne.s32.totalorder %s88, %s90
    %p97 = scmp.eq.s32.totalorder %s17, 1
    %p98 = por %p96, %p97
    %p99 = scmp.ne.s32.totalorder %s90, %s91
    %p100 = scmp.eq.s32.totalorder %s17, 0
    %p101 = por %p99, %p100
    %p102 = scmp.ne.s32.totalorder %s90, %s91
    %p103 = scmp.eq.s32.totalorder %s18, 1
    %p104 = por %p102, %p103
    %p106 = scmp.ne.s32.totalorder %s91, %s105
    %p107 = scmp.eq.s32.totalorder %s18, 0
    %p108 = por %p106, %p107
    %s110 = sadd.s32 %s109, 1
    %p113 = scmp.eq.s32.totalorder %s12, 1
    %p114 = scmp.ne.s32.totalorder %s109, %s111
    %p115 = scmp.eq.s32.totalorder %s12, 0
    %p116 = por %p114, %p115
    %p117 = scmp.ne.s32.totalorder %s109, %s111
    %p118 = scmp.eq.s32.totalorder %s17, 1
    %p119 = por %p117, %p118
    %p120 = scmp.ne.s32.totalorder %s111, %s112
    %p121 = scmp.eq.s32.totalorder %s17, 0
    %p122 = por %p120, %p121
    %p123 = scmp.ne.s32.totalorder %s111, %s112
    %p124 = scmp.eq.s32.totalorder %s18, 1
    %p125 = por %p123, %p124
    %p127 = scmp.ne.s32.totalorder %s112, %s126
    %p128 = scmp.eq.s32.totalorder %s18, 0
    %p129 = por %p127, %p128
    %s131 = sadd.s32 %s130, 1
    %p134 = scmp.eq.s32.totalorder %s12, 1
    %p135 = scmp.ne.s32.totalorder %s130, %s132
    %p136 = scmp.eq.s32.totalorder %s12, 0
    %p137 = por %p135, %p136
    %p138 = scmp.ne.s32.totalorder %s130, %s132
    %p139 = scmp.eq.s32.totalorder %s17, 1
    %p140 = por %p138, %p139
    %p141 = scmp.ne.s32.totalorder %s132, %s133
    %p142 = scmp.eq.s32.totalorder %s17, 0
    %p143 = por %p141, %p142
    %p144 = scmp.ne.s32.totalorder %s132, %s133
    %p145 = scmp.eq.s32.totalorder %s18, 1
    %p146 = por %p144, %p145
    %p148 = scmp.ne.s32.totalorder %s133, %s147
    %p149 = scmp.eq.s32.totalorder %s18, 0
    %p150 = por %p148, %p149
    %s151 = ssub.s32 %s12, %s19
    %p152 = scmp.eq.s32.totalorder %s151, 0
    %s154 = sadd.s32 %s153, 1
    %s155 = scalar_select %p152, %s153, %s154
    %p158 = pneg %p152
    %p159 = scmp.eq.s32.totalorder %s12, 1
    %p160 = por %p158, %p159
    %p161 = scmp.ne.s32.totalorder %s153, %s156
    %p162 = scmp.eq.s32.totalorder %s12, 0
    %p163 = por %p161, %p162
    %p164 = scmp.ne.s32.totalorder %s153, %s156
    %p165 = scmp.eq.s32.totalorder %s17, 1
    %p166 = por %p164, %p165
    %p167 = scmp.ne.s32.totalorder %s156, %s157
    %p168 = scmp.eq.s32.totalorder %s17, 0
    %p169 = por %p167, %p168
    %p170 = scmp.ne.s32.totalorder %s156, %s157
    %p171 = scmp.eq.s32.totalorder %s18, 1
    %p172 = por %p170, %p171
    %p174 = scmp.ne.s32.totalorder %s157, %s173
    %p175 = scmp.eq.s32.totalorder %s18, 0
    %p176 = por %p174, %p175
    %p177 = scmp.le.s32.totalorder 1, %s12
    %p178 = scmp.lt.s32.totalorder %s12, 3
    %p179 = pnand %p177, %p178
    %p180 = pneg %p179
    // Predicated region
    $region9: #{musicnn_forward.5} parent=5 // pred_check
      _
    $region10: #{musicnn_forward.5} parent=5 // pred_check_branch
      %182 = sbr.rel (%p179) target = $region12
    $region11: #{musicnn_forward.5} parent=5 // pred_region
      %s183 = ssub.s32 %s12, 1
      // Predicated region
      $region13: #{musicnn_forward.5} parent=11 // pred_check
        %p184 = pneg %p59
      $region14: #{musicnn_forward.5} parent=11 // pred_check_branch
        %186 = sbr.rel (%p184) target = $region16
      $region15: #{musicnn_forward.5} parent=11 // pred_region
        _
      $region16: #{musicnn_forward.5} parent=11 // pred_fallthru
        _
      // Predicated region
      $region17: #{musicnn_forward.5} parent=11 // pred_check
        %p187 = pneg %p80
      $region18: #{musicnn_forward.5} parent=11 // pred_check_branch
        %189 = sbr.rel (%p187) target = $region20
      $region19: #{musicnn_forward.5} parent=11 // pred_region
        _
      $region20: #{musicnn_forward.5} parent=11 // pred_fallthru
        _
      // Predicated region
      $region21: #{musicnn_forward.5} parent=11 // pred_check
        %p190 = pneg %p101
      $region22: #{musicnn_forward.5} parent=11 // pred_check_branch
        %192 = sbr.rel (%p190) target = $region24
      $region23: #{musicnn_forward.5} parent=11 // pred_region
        _
      $region24: #{musicnn_forward.5} parent=11 // pred_fallthru
        _
      // Predicated region
      $region25: #{musicnn_forward.5} parent=11 // pred_check
        %p193 = pneg %p122
      $region26: #{musicnn_forward.5} parent=11 // pred_check_branch
        %195 = sbr.rel (%p193) target = $region28
      $region27: #{musicnn_forward.5} parent=11 // pred_region
        _
      $region28: #{musicnn_forward.5} parent=11 // pred_fallthru
        _
      // Predicated region
      $region29: #{musicnn_forward.5} parent=11 // pred_check
        %p196 = pneg %p143
      $region30: #{musicnn_forward.5} parent=11 // pred_check_branch
        %198 = sbr.rel (%p196) target = $region32
      $region31: #{musicnn_forward.5} parent=11 // pred_region
        _
      $region32: #{musicnn_forward.5} parent=11 // pred_fallthru
        _
    $region12: #{musicnn_forward.5} parent=5 // pred_fallthru
      _
    %p199 = scmp.lt.s32.totalorder %s12, 2
    // Predicated region
    $region33: #{musicnn_forward.5} parent=5 // pred_check
      %p200 = pneg %p199
    $region34: #{musicnn_forward.5} parent=5 // pred_check_branch
      %202 = sbr.rel (%p200) target = $region36
    $region35: #{musicnn_forward.5} parent=5 // pred_region
      // Predicated region
      $region37: #{musicnn_forward.5} parent=35 // pred_check
        %p203 = pneg %p32
      $region38: #{musicnn_forward.5} parent=35 // pred_check_branch
        %205 = sbr.rel (%p203) target = $region40
      $region39: #{musicnn_forward.5} parent=35 // pred_region
        %p206 = scmp.lt.s32.totalorder %s12, 1
        %s207 = scalar_select %p206, %s12, 1
        %s208 = smul.addr %s207, 4
        %s209 = smul.addr %s208, 8
        %s210 = scalar_lea.vmem %s0, %s209
      $region40: #{musicnn_forward.5} parent=35 // pred_fallthru
        _
    $region36: #{musicnn_forward.5} parent=5 // pred_fallthru
      _
    %p211 = scmp.le.s32.totalorder 1, %s12
    %p212 = scmp.lt.s32.totalorder %s12, 3
    %p213 = pnand %p211, %p212
    %p214 = pneg %p213
    // Predicated region
    $region41: #{musicnn_forward.5} parent=5 // pred_check
      _
    $region42: #{musicnn_forward.5} parent=5 // pred_check_branch
      %216 = sbr.rel (%p213) target = $region44
    $region43: #{musicnn_forward.5} parent=5 // pred_region
      %s217 = ssub.s32 %s12, 1
      %p218 = scmp.lt.s32.totalorder %s17, 1
      %s219 = scalar_select %p218, %s17, 1
      %s220 = smul.addr %s219, 4
      %s221 = smul.addr %s220, 8
      %s222 = scalar_lea.vmem %s0, %s221
      %p223 = pneg %p38
      %p224 = pneg %p35
      %p225 = pneg %p59
      %p226 = pneg %p56
      %p227 = pneg %p80
      %p228 = pneg %p77
      %p229 = pneg %p101
      %p230 = pneg %p98
      %p231 = pneg %p122
      %p232 = pneg %p119
      %p233 = pneg %p143
      %p234 = pneg %p140
      %p235 = pneg %p169
      %p236 = pneg %p166
      %p237 = scmp.lt.s32.totalorder %s17, 1
      %s238 = scalar_select %p237, %s17, 1
      %s239 = smul.addr %s238, 4
      %s240 = smul.addr %s239, 8
      %s241 = scalar_lea.vmem %s6, %s240
      %p242 = scmp.lt.s32.totalorder %s17, 1
      %s243 = scalar_select %p242, %s17, 1
      %s244 = smul.addr %s243, 4
      %s245 = smul.addr %s244, 8
      %s246 = scalar_lea.vmem %s0, %s245
      %p247 = scmp.lt.s32.totalorder %s17, 1
      %s248 = scalar_select %p247, %s17, 1
      %s249 = smul.addr %s248, 4
      %s250 = smul.addr %s249, 8
      %s251 = scalar_lea.vmem %s6, %s250
      %v253 = vld [vmem:[%s246] sm:$0xff]
      %v254 = vld [vmem:[%s246 + $0x8] sm:$0xff]
      %v255 = vld [vmem:[%s246 + $0x10] sm:$0xff]
      %v256 = vld [vmem:[%s246 + $0x18] sm:$0xff]
      %v257 = vlaneseq
      %v258 = vand.u32 %v257, 127
      %v259 = vrot.slane %v253, 5
      %v260 = vrot.slane %v254, 5
      %v261 = vrot.slane %v255, 5
      %v262 = vrot.slane %v256, 5
      %v263 = vlaneseq
      %v264 = vshrl.u32 %v263, 7
      %vm265 = vcmp.lt.s32.totalorder %v264, 3
      %v266 = vsel %vm265, %v261, %v262
      %v267 = vsel %vm265, %v260, %v261
      %v268 = vsel %vm265, %v259, %v260
      %v269 = vsel %vm265, %v262, %v259
      %vm270 = vcmp.ge.s32.totalorder %v258, 0
      %vm271 = vcmp.lt.s32.totalorder %v258, 16
      %vm272 = vmand %vm270, %vm271
      %v273 = vsel %vm272, %v269, 0.0
      %v274 = vsel %vm272, %v268, 0.0
      %v275 = vsel %vm272, %v267, 0.0
      %v276 = vsel %vm272, %v266, 0.0
      %v277 = vrot.slane %v253, 6
      %v278 = vrot.slane %v254, 6
      %v279 = vrot.slane %v255, 6
      %v280 = vrot.slane %v256, 6
      %vm281 = vcmp.lt.s32.totalorder %v264, 2
      %v282 = vsel %vm281, %v279, %v280
      %v283 = vsel %vm281, %v278, %v279
      %v284 = vsel %vm281, %v277, %v278
      %v285 = vsel %vm281, %v280, %v277
      %286 = vrot.lane.b32.xlu0 %v285, 16
      %v287 = vpop.permute.xlu0 %286
      %288 = vrot.lane.b32.xlu0 %v284, 16
      %v289 = vpop.permute.xlu0 %288
      %290 = vrot.lane.b32.xlu0 %v283, 16
      %v291 = vpop.permute.xlu0 %290
      %292 = vrot.lane.b32.xlu0 %v282, 16
      %v293 = vpop.permute.xlu0 %292
      %vm294 = vcmp.ge.s32.totalorder %v258, 16
      %vm295 = vcmp.lt.s32.totalorder %v258, 32
      %vm296 = vmand %vm294, %vm295
      %v297 = vsel %vm296, %v287, %v273
      %v298 = vsel %vm296, %v289, %v274
      %v299 = vsel %vm296, %v291, %v275
      %v300 = vsel %vm296, %v293, %v276
      %v301 = vrot.slane %v253, 7
      %v302 = vrot.slane %v254, 7
      %v303 = vrot.slane %v255, 7
      %v304 = vrot.slane %v256, 7
      %vm305 = vcmp.lt.s32.totalorder %v264, 1
      %v306 = vsel %vm305, %v303, %v304
      %v307 = vsel %vm305, %v302, %v303
      %v308 = vsel %vm305, %v301, %v302
      %v309 = vsel %vm305, %v304, %v301
      %310 = vrot.lane.b32.xlu0 %v309, 32
      %v311 = vpop.permute.xlu0 %310
      %312 = vrot.lane.b32.xlu0 %v308, 32
      %v313 = vpop.permute.xlu0 %312
      %314 = vrot.lane.b32.xlu0 %v307, 32
      %v315 = vpop.permute.xlu0 %314
      %316 = vrot.lane.b32.xlu0 %v306, 32
      %v317 = vpop.permute.xlu0 %316
      %vm318 = vcmp.ge.s32.totalorder %v258, 32
      %vm319 = vcmp.lt.s32.totalorder %v258, 48
      %vm320 = vmand %vm318, %vm319
      %v321 = vsel %vm320, %v311, %v297
      %v322 = vsel %vm320, %v313, %v298
      %v323 = vsel %vm320, %v315, %v299
      %v324 = vsel %vm320, %v317, %v300
      %325 = vrot.lane.b32.xlu0 %v253, 48
      %v326 = vpop.permute.xlu0 %325
      %327 = vrot.lane.b32.xlu0 %v254, 48
      %v328 = vpop.permute.xlu0 %327
      %329 = vrot.lane.b32.xlu0 %v255, 48
      %v330 = vpop.permute.xlu0 %329
      %331 = vrot.lane.b32.xlu0 %v256, 48
      %v332 = vpop.permute.xlu0 %331
      %vm333 = vcmp.ge.s32.totalorder %v258, 48
      %vm334 = vcmp.lt.s32.totalorder %v258, 64
      %vm335 = vmand %vm333, %vm334
      %v336 = vsel %vm335, %v326, %v321
      %v337 = vsel %vm335, %v328, %v322
      %v338 = vsel %vm335, %v330, %v323
      %v339 = vsel %vm335, %v332, %v324
      %v340 = vrot.slane %v253, 1
      %v341 = vrot.slane %v254, 1
      %v342 = vrot.slane %v255, 1
      %v343 = vrot.slane %v256, 1
      %vm344 = vcmp.lt.s32.totalorder %v264, 7
      %v345 = vsel %vm344, %v342, %v343
      %v346 = vsel %vm344, %v341, %v342
      %v347 = vsel %vm344, %v340, %v341
      %v348 = vsel %vm344, %v343, %v340
      %349 = vrot.lane.b32.xlu0 %v347, 64
      %v350 = vpop.permute.xlu0 %349
      %351 = vrot.lane.b32.xlu0 %v346, 64
      %v352 = vpop.permute.xlu0 %351
      %353 = vrot.lane.b32.xlu0 %v345, 64
      %v354 = vpop.permute.xlu0 %353
      %355 = vrot.lane.b32.xlu0 %v348, 64
      %v356 = vpop.permute.xlu0 %355
      %vm357 = vcmp.ge.s32.totalorder %v258, 64
      %vm358 = vcmp.lt.s32.totalorder %v258, 80
      %vm359 = vmand %vm357, %vm358
      %v360 = vsel %vm359, %v350, %v336
      %v361 = vsel %vm359, %v352, %v337
      %v362 = vsel %vm359, %v354, %v338
      %v363 = vsel %vm359, %v356, %v339
      %v364 = vrot.slane %v253, 2
      %v365 = vrot.slane %v254, 2
      %v366 = vrot.slane %v255, 2
      %v367 = vrot.slane %v256, 2
      %vm368 = vcmp.lt.s32.totalorder %v264, 6
      %v369 = vsel %vm368, %v366, %v367
      %v370 = vsel %vm368, %v365, %v366
      %v371 = vsel %vm368, %v364, %v365
      %v372 = vsel %vm368, %v367, %v364
      %373 = vrot.lane.b32.xlu0 %v371, 80
      %v374 = vpop.permute.xlu0 %373
      %375 = vrot.lane.b32.xlu0 %v370, 80
      %v376 = vpop.permute.xlu0 %375
      %377 = vrot.lane.b32.xlu0 %v369, 80
      %v378 = vpop.permute.xlu0 %377
      %379 = vrot.lane.b32.xlu0 %v372, 80
      %v380 = vpop.permute.xlu0 %379
      %vm381 = vcmp.ge.s32.totalorder %v258, 80
      %vm382 = vcmp.lt.s32.totalorder %v258, 96
      %vm383 = vmand %vm381, %vm382
      %v384 = vsel %vm383, %v374, %v360
      %v385 = vsel %vm383, %v376, %v361
      %v386 = vsel %vm383, %v378, %v362
      %v387 = vsel %vm383, %v380, %v363
      %v388 = vrot.slane %v253, 3
      %v389 = vrot.slane %v254, 3
      %v390 = vrot.slane %v255, 3
      %v391 = vrot.slane %v256, 3
      %vm392 = vcmp.lt.s32.totalorder %v264, 5
      %v393 = vsel %vm392, %v390, %v391
      %v394 = vsel %vm392, %v389, %v390
      %v395 = vsel %vm392, %v388, %v389
      %v396 = vsel %vm392, %v391, %v388
      %397 = vrot.lane.b32.xlu0 %v395, 96
      %v398 = vpop.permute.xlu0 %397
      %399 = vrot.lane.b32.xlu0 %v394, 96
      %v400 = vpop.permute.xlu0 %399
      %401 = vrot.lane.b32.xlu0 %v393, 96
      %v402 = vpop.permute.xlu0 %401
      %403 = vrot.lane.b32.xlu0 %v396, 96
      %v404 = vpop.permute.xlu0 %403
      %vm405 = vcmp.ge.s32.totalorder %v258, 96
      %vm406 = vcmp.lt.s32.totalorder %v258, 112
      %vm407 = vmand %vm405, %vm406
      %v408 = vsel %vm407, %v398, %v384
      %v409 = vsel %vm407, %v400, %v385
      %v410 = vsel %vm407, %v402, %v386
      %v411 = vsel %vm407, %v404, %v387
      %v412 = vrot.slane %v253, 4
      %v413 = vrot.slane %v254, 4
      %v414 = vrot.slane %v255, 4
      %v415 = vrot.slane %v256, 4
      %vm416 = vcmp.lt.s32.totalorder %v264, 4
      %v417 = vsel %vm416, %v414, %v415
      %v418 = vsel %vm416, %v413, %v414
      %v419 = vsel %vm416, %v412, %v413
      %v420 = vsel %vm416, %v415, %v412
      %421 = vrot.lane.b32.xlu0 %v419, 112
      %v422 = vpop.permute.xlu0 %421
      %423 = vrot.lane.b32.xlu0 %v418, 112
      %v424 = vpop.permute.xlu0 %423
      %425 = vrot.lane.b32.xlu0 %v417, 112
      %v426 = vpop.permute.xlu0 %425
      %427 = vrot.lane.b32.xlu0 %v420, 112
      %v428 = vpop.permute.xlu0 %427
      %vm429 = vcmp.ge.s32.totalorder %v258, 112
      %vm430 = vcmp.lt.s32.totalorder %v258, 128
      %vm431 = vmand %vm429, %vm430
      %v432 = vsel %vm431, %v422, %v408
      %v433 = vsel %vm431, %v424, %v409
      %v434 = vsel %vm431, %v426, %v410
      %v435 = vsel %vm431, %v428, %v411
      %v436 = vpack.c.bf16 %v433, %v432
      %v437 = vpack.c.bf16 %v435, %v434
      %v438 = vld [vmem:[%s2] sm:$0x1]
      %v439 = vld [vmem:[%s1] sm:$0xf]
      %v440 = vld [vmem:[%s1 + $0x4] sm:$0xf]
      %v441 = vld [vmem:[%s1 + $0x8] sm:$0xf]
      %v442 = vld [vmem:[%s1 + $0xc] sm:$0xf]
      %v443 = vld [vmem:[%s1 + $0x10] sm:$0xf]
      %v444 = vld [vmem:[%s1 + $0x14] sm:$0xf]
      %v445 = vld [vmem:[%s1 + $0x18] sm:$0xf]
      %v446 = vld [vmem:[%s1 + $0x1c] sm:$0xf]
      %v447 = vld [vmem:[%s1 + $0x20] sm:$0xf]
      %v448 = vld [vmem:[%s1 + $0x24] sm:$0xf]
      %v449 = vld [vmem:[%s1 + $0x28] sm:$0xf]
      %v450 = vld [vmem:[%s1 + $0x2c] sm:$0xf]
      %v451 = vld [vmem:[%s1 + $0x30] sm:$0xf]
      %v452 = vld [vmem:[%s1 + $0x34] sm:$0xf]
      %v453 = vld [vmem:[%s1 + $0x38] sm:$0xf]
      %v454 = vld [vmem:[%s1 + $0x3c] sm:$0xf]
      %v456 = vlaneseq
      %v457 = vshrl.u32 %v456, 7
      %v458 = vsub.s32 0, %v457
      %v459 = vrot.slane %v438, %v458
      %v477 = vunpack.c.l.b16 %v439
      %v478 = vunpack.c.l.b16 %v440
      %v479 = vunpack.c.l.b16 %v441
      %v480 = vunpack.c.l.b16 %v442
      %v481 = vunpack.c.l.b16 %v443
      %v482 = vunpack.c.l.b16 %v444
      %v483 = vunpack.c.l.b16 %v445
      %v484 = vunpack.c.l.b16 %v446
      %v485 = vunpack.c.l.b16 %v447
      %v486 = vunpack.c.l.b16 %v448
      %v487 = vunpack.c.l.b16 %v449
      %v488 = vunpack.c.l.b16 %v450
      %v489 = vunpack.c.l.b16 %v451
      %v490 = vunpack.c.l.b16 %v452
      %v491 = vunpack.c.l.b16 %v453
      %v492 = vunpack.c.l.b16 %v454
      %v493 = vpack.c.b16 %v478, %v477
      %v494 = vpack.c.b16 %v480, %v479
      %v495 = vpack.c.b16 %v482, %v481
      %v496 = vpack.c.b16 %v484, %v483
      %v497 = vpack.c.b16 %v486, %v485
      %v498 = vpack.c.b16 %v488, %v487
      %v499 = vpack.c.b16 %v490, %v489
      %v500 = vpack.c.b16 %v492, %v491
      %509 = vmatprep.subr.bf16.mxu0 0
      %510 = vmatpush1.bf16.msra.mxu0 %v500
      %511 = vmatprep.subr.bf16.mxu0 0
      %512 = vmatpush1.bf16.msra.mxu0 %v499
      %513 = vmatprep.subr.bf16.mxu0 0
      %514 = vmatpush1.bf16.msra.mxu0 %v498
      %515 = vmatprep.subr.bf16.mxu0 0
      %516 = vmatpush1.bf16.msra.mxu0 %v497
      %517 = vmatprep.subr.bf16.mxu0 0
      %518 = vmatpush1.bf16.msra.mxu0 %v496
      %519 = vmatprep.subr.bf16.mxu0 0
      %520 = vmatpush1.bf16.msra.mxu0 %v495
      %521 = vmatprep.subr.bf16.mxu0 0
      %522 = vmatpush1.bf16.msra.mxu0 %v494
      %523 = vmatprep.subr.bf16.mxu0 0
      %524 = vmatpush1.bf16.msra.mxu0 %v493
      %525 = vmatprep.subr.bf16.mxu0 0
      %526 = vmatpush2.bf16.msra.mxu0 0
      %527 = vmatprep.subr.bf16.mxu0 0
      %528 = vmatpush2.bf16.msra.mxu0 0
      %529 = vmatprep.subr.bf16.mxu0 0
      %530 = vmatpush2.bf16.msra.mxu0 0
      %531 = vmatprep.subr.bf16.mxu0 0
      %532 = vmatpush2.bf16.msra.mxu0 0
      %533 = vmatprep.subr.bf16.mxu0 0
      %534 = vmatpush2.bf16.msra.mxu0 0
      %535 = vmatprep.subr.bf16.mxu0 0
      %536 = vmatpush2.bf16.msra.mxu0 0
      %537 = vmatprep.subr.bf16.mxu0 0
      %538 = vmatpush2.bf16.msra.mxu0 0
      %539 = vmatprep.subr.bf16.mxu0 0
      %540 = vmatpush2.bf16.msra.mxu0 0
      %541 = vmatprep.mubr.bf16.mxu0 0
      %542 = vmatmul.mubr.bf16.gmra.mxu0 %v436
      %v543 = vpop.f32.mrf.mxu0
      %v544 = vadd.f32 %v459, %v543
      %v545 = vpop.f32.mrf.mxu0
      %v546 = vpop.f32.mrf.mxu0
      %v547 = vadd.f32 %v459, %v546
      %v548 = vpop.f32.mrf.mxu0
      %549 = vmatprep.mubr.bf16.mxu0 0
      %550 = vmatmul.mubr.bf16.gmra.mxu0 %v437
      %v551 = vpop.f32.mrf.mxu0
      %v552 = vadd.f32 %v459, %v551
      %v553 = vpop.f32.mrf.mxu0
      %v554 = vpop.f32.mrf.mxu0
      %v555 = vadd.f32 %v459, %v554
      %v556 = vpop.f32.mrf.mxu0
      %557 = vdwg.mxu0
      %v558 = vmax.f32 %v544, 0.0
      %v559 = vmax.f32 %v547, 0.0
      %v560 = vmax.f32 %v552, 0.0
      %v561 = vmax.f32 %v555, 0.0
      %s562 = scalar_lea.vmem %s1, 64
      %v563 = vld [vmem:[%s562] sm:$0xf]
      %v564 = vld [vmem:[%s562 + $0x4] sm:$0xf]
      %v565 = vld [vmem:[%s562 + $0x8] sm:$0xf]
      %v566 = vld [vmem:[%s562 + $0xc] sm:$0xf]
      %v567 = vld [vmem:[%s562 + $0x10] sm:$0xf]
      %v568 = vld [vmem:[%s562 + $0x14] sm:$0xf]
      %v569 = vld [vmem:[%s562 + $0x18] sm:$0xf]
      %v570 = vld [vmem:[%s562 + $0x1c] sm:$0xf]
      %v571 = vld [vmem:[%s562 + $0x20] sm:$0xf]
      %v572 = vld [vmem:[%s562 + $0x24] sm:$0xf]
      %v573 = vld [vmem:[%s562 + $0x28] sm:$0xf]
      %v574 = vld [vmem:[%s562 + $0x2c] sm:$0xf]
      %v575 = vld [vmem:[%s562 + $0x30] sm:$0xf]
      %v576 = vld [vmem:[%s562 + $0x34] sm:$0xf]
      %v577 = vld [vmem:[%s562 + $0x38] sm:$0xf]
      %v578 = vld [vmem:[%s562 + $0x3c] sm:$0xf]
      %v595 = vunpack.c.l.b16 %v563
      %v596 = vunpack.c.l.b16 %v564
      %v597 = vunpack.c.l.b16 %v565
      %v598 = vunpack.c.l.b16 %v566
      %v599 = vunpack.c.l.b16 %v567
      %v600 = vunpack.c.l.b16 %v568
      %v601 = vunpack.c.l.b16 %v569
      %v602 = vunpack.c.l.b16 %v570
      %v603 = vunpack.c.l.b16 %v571
      %v604 = vunpack.c.l.b16 %v572
      %v605 = vunpack.c.l.b16 %v573
      %v606 = vunpack.c.l.b16 %v574
      %v607 = vunpack.c.l.b16 %v575
      %v608 = vunpack.c.l.b16 %v576
      %v609 = vunpack.c.l.b16 %v577
      %v610 = vunpack.c.l.b16 %v578
      %v611 = vpack.c.b16 %v596, %v595
      %v612 = vpack.c.b16 %v598, %v597
      %v613 = vpack.c.b16 %v600, %v599
      %v614 = vpack.c.b16 %v602, %v601
      %v615 = vpack.c.b16 %v604, %v603
      %v616 = vpack.c.b16 %v606, %v605
      %v617 = vpack.c.b16 %v608, %v607
      %v618 = vpack.c.b16 %v610, %v609
      %627 = vmatprep.subr.bf16.mxu0 0
      %628 = vmatpush1.bf16.msra.mxu0 %v618
      %629 = vmatprep.subr.bf16.mxu0 0
      %630 = vmatpush1.bf16.msra.mxu0 %v617
      %631 = vmatprep.subr.bf16.mxu0 0
      %632 = vmatpush1.bf16.msra.mxu0 %v616
      %633 = vmatprep.subr.bf16.mxu0 0
      %634 = vmatpush1.bf16.msra.mxu0 %v615
      %635 = vmatprep.subr.bf16.mxu0 0
      %636 = vmatpush1.bf16.msra.mxu0 %v614
      %637 = vmatprep.subr.bf16.mxu0 0
      %638 = vmatpush1.bf16.msra.mxu0 %v613
      %639 = vmatprep.subr.bf16.mxu0 0
      %640 = vmatpush1.bf16.msra.mxu0 %v612
      %641 = vmatprep.subr.bf16.mxu0 0
      %642 = vmatpush1.bf16.msra.mxu0 %v611
      %643 = vmatprep.subr.bf16.mxu0 0
      %644 = vmatpush2.bf16.msra.mxu0 0
      %645 = vmatprep.subr.bf16.mxu0 0
      %646 = vmatpush2.bf16.msra.mxu0 0
      %647 = vmatprep.subr.bf16.mxu0 0
      %648 = vmatpush2.bf16.msra.mxu0 0
      %649 = vmatprep.subr.bf16.mxu0 0
      %650 = vmatpush2.bf16.msra.mxu0 0
      %651 = vmatprep.subr.bf16.mxu0 0
      %652 = vmatpush2.bf16.msra.mxu0 0
      %653 = vmatprep.subr.bf16.mxu0 0
      %654 = vmatpush2.bf16.msra.mxu0 0
      %655 = vmatprep.subr.bf16.mxu0 0
      %656 = vmatpush2.bf16.msra.mxu0 0
      %657 = vmatprep.subr.bf16.mxu0 0
      %658 = vmatpush2.bf16.msra.mxu0 0
      %659 = vmatprep.mubr.bf16.mxu0 0
      %660 = vmatmul.mubr.bf16.gmra.mxu0 %v436
      %v661 = vpop.f32.mrf.mxu0
      %v662 = vadd.f32 %v459, %v661
      %v663 = vpop.f32.mrf.mxu0
      %v664 = vpop.f32.mrf.mxu0
      %v665 = vadd.f32 %v459, %v664
      %v666 = vpop.f32.mrf.mxu0
      %667 = vmatprep.mubr.bf16.mxu0 0
      %668 = vmatmul.mubr.bf16.gmra.mxu0 %v437
      %v669 = vpop.f32.mrf.mxu0
      %v670 = vadd.f32 %v459, %v669
      %v671 = vpop.f32.mrf.mxu0
      %v672 = vpop.f32.mrf.mxu0
      %v673 = vadd.f32 %v459, %v672
      %v674 = vpop.f32.mrf.mxu0
      %675 = vdwg.mxu0
      %v676 = vmax.f32 %v558, %v662
      %v677 = vmax.f32 %v559, %v665
      %v678 = vmax.f32 %v560, %v670
      %v679 = vmax.f32 %v561, %v673
      %s680 = scalar_lea.vmem %s1, 128
      %v681 = vld [vmem:[%s680] sm:$0xf]
      %v682 = vld [vmem:[%s680 + $0x4] sm:$0xf]
      %v683 = vld [vmem:[%s680 + $0x8] sm:$0xf]
      %v684 = vld [vmem:[%s680 + $0xc] sm:$0xf]
      %v685 = vld [vmem:[%s680 + $0x10] sm:$0xf]
      %v686 = vld [vmem:[%s680 + $0x14] sm:$0xf]
      %v687 = vld [vmem:[%s680 + $0x18] sm:$0xf]
      %v688 = vld [vmem:[%s680 + $0x1c] sm:$0xf]
      %v689 = vld [vmem:[%s680 + $0x20] sm:$0xf]
      %v690 = vld [vmem:[%s680 + $0x24] sm:$0xf]
      %v691 = vld [vmem:[%s680 + $0x28] sm:$0xf]
      %v692 = vld [vmem:[%s680 + $0x2c] sm:$0xf]
      %v693 = vld [vmem:[%s680 + $0x30] sm:$0xf]
      %v694 = vld [vmem:[%s680 + $0x34] sm:$0xf]
      %v695 = vld [vmem:[%s680 + $0x38] sm:$0xf]
      %v696 = vld [vmem:[%s680 + $0x3c] sm:$0xf]
      %v713 = vunpack.c.l.b16 %v681
      %v714 = vunpack.c.l.b16 %v682
      %v715 = vunpack.c.l.b16 %v683
      %v716 = vunpack.c.l.b16 %v684
      %v717 = vunpack.c.l.b16 %v685
      %v718 = vunpack.c.l.b16 %v686
      %v719 = vunpack.c.l.b16 %v687
      %v720 = vunpack.c.l.b16 %v688
      %v721 = vunpack.c.l.b16 %v689
      %v722 = vunpack.c.l.b16 %v690
      %v723 = vunpack.c.l.b16 %v691
      %v724 = vunpack.c.l.b16 %v692
      %v725 = vunpack.c.l.b16 %v693
      %v726 = vunpack.c.l.b16 %v694
      %v727 = vunpack.c.l.b16 %v695
      %v728 = vunpack.c.l.b16 %v696
      %v729 = vpack.c.b16 %v714, %v713
      %v730 = vpack.c.b16 %v716, %v715
      %v731 = vpack.c.b16 %v718, %v717
      %v732 = vpack.c.b16 %v720, %v719
      %v733 = vpack.c.b16 %v722, %v721
      %v734 = vpack.c.b16 %v724, %v723
      %v735 = vpack.c.b16 %v726, %v725
      %v736 = vpack.c.b16 %v728, %v727
      %745 = vmatprep.subr.bf16.mxu0 0
      %746 = vmatpush1.bf16.msra.mxu0 %v736
      %747 = vmatprep.subr.bf16.mxu0 0
      %748 = vmatpush1.bf16.msra.mxu0 %v735
      %749 = vmatprep.subr.bf16.mxu0 0
      %750 = vmatpush1.bf16.msra.mxu0 %v734
      %751 = vmatprep.subr.bf16.mxu0 0
      %752 = vmatpush1.bf16.msra.mxu0 %v733
      %753 = vmatprep.subr.bf16.mxu0 0
      %754 = vmatpush1.bf16.msra.mxu0 %v732
      %755 = vmatprep.subr.bf16.mxu0 0
      %756 = vmatpush1.bf16.msra.mxu0 %v731
      %757 = vmatprep.subr.bf16.mxu0 0
      %758 = vmatpush1.bf16.msra.mxu0 %v730
      %759 = vmatprep.subr.bf16.mxu0 0
      %760 = vmatpush1.bf16.msra.mxu0 %v729
      %761 = vmatprep.subr.bf16.mxu0 0
      %762 = vmatpush2.bf16.msra.mxu0 0
      %763 = vmatprep.subr.bf16.mxu0 0
      %764 = vmatpush2.bf16.msra.mxu0 0
      %765 = vmatprep.subr.bf16.mxu0 0
      %766 = vmatpush2.bf16.msra.mxu0 0
      %767 = vmatprep.subr.bf16.mxu0 0
      %768 = vmatpush2.bf16.msra.mxu0 0
      %769 = vmatprep.subr.bf16.mxu0 0
      %770 = vmatpush2.bf16.msra.mxu0 0
      %771 = vmatprep.subr.bf16.mxu0 0
      %772 = vmatpush2.bf16.msra.mxu0 0
      %773 = vmatprep.subr.bf16.mxu0 0
      %774 = vmatpush2.bf16.msra.mxu0 0
      %775 = vmatprep.subr.bf16.mxu0 0
      %776 = vmatpush2.bf16.msra.mxu0 0
      %777 = vmatprep.mubr.bf16.mxu0 0
      %778 = vmatmul.mubr.bf16.gmra.mxu0 %v436
      %v779 = vpop.f32.mrf.mxu0
      %v780 = vadd.f32 %v459, %v779
      %v781 = vpop.f32.mrf.mxu0
      %v782 = vpop.f32.mrf.mxu0
      %v783 = vadd.f32 %v459, %v782
      %v784 = vpop.f32.mrf.mxu0
      %785 = vmatprep.mubr.bf16.mxu0 0
      %786 = vmatmul.mubr.bf16.gmra.mxu0 %v437
      %v787 = vpop.f32.mrf.mxu0
      %v788 = vadd.f32 %v459, %v787
      %v789 = vpop.f32.mrf.mxu0
      %v790 = vpop.f32.mrf.mxu0
      %v791 = vadd.f32 %v459, %v790
      %v792 = vpop.f32.mrf.mxu0
      %793 = vdwg.mxu0
      %v794 = vmax.f32 %v676, %v780
      %v795 = vmax.f32 %v677, %v783
      %v796 = vmax.f32 %v678, %v788
      %v797 = vmax.f32 %v679, %v791
      %798 = vrot.lane.b32.xlu0 %v794, 64
      %v799 = vpop.permute.xlu0 %798
      %800 = vrot.lane.b32.xlu0 %v795, 64
      %v801 = vpop.permute.xlu0 %800
      %802 = vrot.lane.b32.xlu0 %v796, 64
      %v803 = vpop.permute.xlu0 %802
      %804 = vrot.lane.b32.xlu0 %v797, 64
      %v805 = vpop.permute.xlu0 %804
      %v806 = vmax.f32 %v794, %v799
      %v807 = vmax.f32 %v795, %v801
      %v808 = vmax.f32 %v796, %v803
      %v809 = vmax.f32 %v797, %v805
      %810 = vrot.lane.b32.xlu0 %v806, 32
      %v811 = vpop.permute.xlu0 %810
      %812 = vrot.lane.b32.xlu0 %v807, 32
      %v813 = vpop.permute.xlu0 %812
      %814 = vrot.lane.b32.xlu0 %v808, 32
      %v815 = vpop.permute.xlu0 %814
      %816 = vrot.lane.b32.xlu0 %v809, 32
      %v817 = vpop.permute.xlu0 %816
      %v818 = vmax.f32 %v806, %v811
      %v819 = vmax.f32 %v807, %v813
      %v820 = vmax.f32 %v808, %v815
      %v821 = vmax.f32 %v809, %v817
      %v822 = vld [vmem:[%s3] sm:$0xf]
      %v823 = vld [vmem:[%s3 + $0x4] sm:$0xf]
      %v824 = vld [vmem:[%s3 + $0x8] sm:$0xf]
      %v825 = vld [vmem:[%s3 + $0xc] sm:$0xf]
      %v826 = vld [vmem:[%s3 + $0x10] sm:$0xf]
      %v827 = vld [vmem:[%s3 + $0x14] sm:$0xf]
      %v828 = vld [vmem:[%s3 + $0x18] sm:$0xf]
      %v829 = vld [vmem:[%s3 + $0x1c] sm:$0xf]
      %v830 = vld [vmem:[%s3 + $0x20] sm:$0xf]
      %v831 = vld [vmem:[%s3 + $0x24] sm:$0xf]
      %v832 = vld [vmem:[%s3 + $0x28] sm:$0xf]
      %v833 = vld [vmem:[%s3 + $0x2c] sm:$0xf]
      %v834 = vld [vmem:[%s3 + $0x30] sm:$0xf]
      %v835 = vld [vmem:[%s3 + $0x34] sm:$0xf]
      %v836 = vld [vmem:[%s3 + $0x38] sm:$0xf]
      %v837 = vld [vmem:[%s3 + $0x3c] sm:$0xf]
      %v838 = vld [vmem:[%s4] sm:$0x1]
      %v840 = vlaneseq
      %v841 = vshrl.u32 %v840, 7
      %v842 = vsub.s32 0, %v841
      %v843 = vrot.slane %v838, %v842
      %v861 = vunpack.c.l.b16 %v822
      %v862 = vunpack.c.l.b16 %v823
      %v863 = vunpack.c.l.b16 %v824
      %v864 = vunpack.c.l.b16 %v825
      %v865 = vunpack.c.l.b16 %v826
      %v866 = vunpack.c.l.b16 %v827
      %v867 = vunpack.c.l.b16 %v828
      %v868 = vunpack.c.l.b16 %v829
      %v869 = vunpack.c.l.b16 %v830
      %v870 = vunpack.c.l.b16 %v831
      %v871 = vunpack.c.l.b16 %v832
      %v872 = vunpack.c.l.b16 %v833
      %v873 = vunpack.c.l.b16 %v834
      %v874 = vunpack.c.l.b16 %v835
      %v875 = vunpack.c.l.b16 %v836
      %v876 = vunpack.c.l.b16 %v837
      %v877 = vpack.c.b16 %v862, %v861
      %v878 = vpack.c.b16 %v864, %v863
      %v879 = vpack.c.b16 %v866, %v865
      %v880 = vpack.c.b16 %v868, %v867
      %v881 = vpack.c.b16 %v870, %v869
      %v882 = vpack.c.b16 %v872, %v871
      %v883 = vpack.c.b16 %v874, %v873
      %v884 = vpack.c.b16 %v876, %v875
      %893 = vmatprep.subr.bf16.mxu0 0
      %894 = vmatpush1.bf16.msra.mxu0 %v884
      %895 = vmatprep.subr.bf16.mxu0 0
      %896 = vmatpush1.bf16.msra.mxu0 %v883
      %897 = vmatprep.subr.bf16.mxu0 0
      %898 = vmatpush1.bf16.msra.mxu0 %v882
      %899 = vmatprep.subr.bf16.mxu0 0
      %900 = vmatpush1.bf16.msra.mxu0 %v881
      %901 = vmatprep.subr.bf16.mxu0 0
      %902 = vmatpush1.bf16.msra.mxu0 %v880
      %903 = vmatprep.subr.bf16.mxu0 0
      %904 = vmatpush1.bf16.msra.mxu0 %v879
      %905 = vmatprep.subr.bf16.mxu0 0
      %906 = vmatpush1.bf16.msra.mxu0 %v878
      %907 = vmatprep.subr.bf16.mxu0 0
      %908 = vmatpush1.bf16.msra.mxu0 %v877
      %909 = vmatprep.subr.bf16.mxu0 0
      %910 = vmatpush2.bf16.msra.mxu0 0
      %911 = vmatprep.subr.bf16.mxu0 0
      %912 = vmatpush2.bf16.msra.mxu0 0
      %913 = vmatprep.subr.bf16.mxu0 0
      %914 = vmatpush2.bf16.msra.mxu0 0
      %915 = vmatprep.subr.bf16.mxu0 0
      %916 = vmatpush2.bf16.msra.mxu0 0
      %917 = vmatprep.subr.bf16.mxu0 0
      %918 = vmatpush2.bf16.msra.mxu0 0
      %919 = vmatprep.subr.bf16.mxu0 0
      %920 = vmatpush2.bf16.msra.mxu0 0
      %921 = vmatprep.subr.bf16.mxu0 0
      %922 = vmatpush2.bf16.msra.mxu0 0
      %923 = vmatprep.subr.bf16.mxu0 0
      %924 = vmatpush2.bf16.msra.mxu0 0
      %925 = vmatprep.mubr.bf16.mxu0 0
      %926 = vmatmul.mubr.bf16.gmra.mxu0 %v436
      %v927 = vpop.f32.mrf.mxu0
      %v928 = vadd.f32 %v843, %v927
      %v929 = vpop.f32.mrf.mxu0
      %v930 = vpop.f32.mrf.mxu0
      %v931 = vadd.f32 %v843, %v930
      %v932 = vpop.f32.mrf.mxu0
      %933 = vmatprep.mubr.bf16.mxu0 0
      %934 = vmatmul.mubr.bf16.gmra.mxu0 %v437
      %v935 = vpop.f32.mrf.mxu0
      %v936 = vadd.f32 %v843, %v935
      %v937 = vpop.f32.mrf.mxu0
      %v938 = vpop.f32.mrf.mxu0
      %v939 = vadd.f32 %v843, %v938
      %v940 = vpop.f32.mrf.mxu0
      %941 = vdwg.mxu0
      %v942 = vmax.f32 %v928, 0.0
      %v943 = vmax.f32 %v931, 0.0
      %v944 = vmax.f32 %v936, 0.0
      %v945 = vmax.f32 %v939, 0.0
      %946 = vrot.lane.b32.xlu0 %v942, 64
      %v947 = vpop.permute.xlu0 %946
      %948 = vrot.lane.b32.xlu0 %v943, 64
      %v949 = vpop.permute.xlu0 %948
      %950 = vrot.lane.b32.xlu0 %v944, 64
      %v951 = vpop.permute.xlu0 %950
      %952 = vrot.lane.b32.xlu0 %v945, 64
      %v953 = vpop.permute.xlu0 %952
      %v954 = vmax.f32 %v942, %v947
      %v955 = vmax.f32 %v943, %v949
      %v956 = vmax.f32 %v944, %v951
      %v957 = vmax.f32 %v945, %v953
      %958 = vrot.lane.b32.xlu0 %v954, 32
      %v959 = vpop.permute.xlu0 %958
      %960 = vrot.lane.b32.xlu0 %v955, 32
      %v961 = vpop.permute.xlu0 %960
      %962 = vrot.lane.b32.xlu0 %v956, 32
      %v963 = vpop.permute.xlu0 %962
      %964 = vrot.lane.b32.xlu0 %v957, 32
      %v965 = vpop.permute.xlu0 %964
      %v966 = vmax.f32 %v954, %v959
      %v967 = vmax.f32 %v955, %v961
      %v968 = vmax.f32 %v956, %v963
      %v969 = vmax.f32 %v957, %v965
      %970 = vrot.lane.b32.xlu0 %v966, 16
      %v971 = vpop.permute.xlu0 %970
      %972 = vrot.lane.b32.xlu0 %v967, 16
      %v973 = vpop.permute.xlu0 %972
      %974 = vrot.lane.b32.xlu0 %v968, 16
      %v975 = vpop.permute.xlu0 %974
      %976 = vrot.lane.b32.xlu0 %v969, 16
      %v977 = vpop.permute.xlu0 %976
      %v978 = vmax.f32 %v966, %v971
      %v979 = vmax.f32 %v967, %v973
      %v980 = vmax.f32 %v968, %v975
      %v981 = vmax.f32 %v969, %v977
      %982 = vrot.lane.b32.xlu0 %v978, 8
      %v983 = vpop.permute.xlu0 %982
      %984 = vrot.lane.b32.xlu0 %v979, 8
      %v985 = vpop.permute.xlu0 %984
      %986 = vrot.lane.b32.xlu0 %v980, 8
      %v987 = vpop.permute.xlu0 %986
      %988 = vrot.lane.b32.xlu0 %v981, 8
      %v989 = vpop.permute.xlu0 %988
      %v990 = vmax.f32 %v978, %v983
      %v991 = vmax.f32 %v979, %v985
      %v992 = vmax.f32 %v980, %v987
      %v993 = vmax.f32 %v981, %v989
      %vm994 = vcmp.lt.s32.totalorder %v258, 40
      %v995 = vsel %vm994, %v990, 0.0
      %v996 = vsel %vm994, %v991, 0.0
      %v997 = vsel %vm994, %v992, 0.0
      %v998 = vsel %vm994, %v993, 0.0
      %v999 = vsel %vm295, %v818, %v995
      %v1000 = vsel %vm295, %v819, %v996
      %v1001 = vsel %vm295, %v820, %v997
      %v1002 = vsel %vm295, %v821, %v998
      %v1003 = vld [vmem:[%s5] sm:$0x1]
      %v1005 = vlaneseq
      %v1006 = vshrl.u32 %v1005, 7
      %v1007 = vsub.s32 0, %v1006
      %v1008 = vrot.slane %v1003, %v1007
      %v1010 = vadd.f32 %v999, %v1008
      %v1011 = vadd.f32 %v1000, %v1008
      %v1012 = vadd.f32 %v1001, %v1008
      %v1013 = vadd.f32 %v1002, %v1008
      %v1014 = vadd.s32 %v264, 8
      %v1015 = vadd.s32 %v264, 16
      %v1016 = vadd.s32 %v264, 24
      %vm1017 = vcmp.ge.s32.totalorder %v264, 3
      %vm1018 = vcmp.ge.s32.totalorder %v1014, 3
      %vm1019 = vcmp.ge.s32.totalorder %v1015, 3
      %vm1020 = vcmp.ge.s32.totalorder %v1016, 3
      %vm1021 = vcmp.lt.s32.totalorder %v264, 26
      %vm1022 = vcmp.lt.s32.totalorder %v1014, 26
      %vm1023 = vcmp.lt.s32.totalorder %v1015, 26
      %vm1024 = vcmp.lt.s32.totalorder %v1016, 26
      %vm1025 = vmand %vm1017, %vm1021
      %vm1026 = vmand %vm1018, %vm1022
      %vm1027 = vmand %vm1019, %vm1023
      %vm1028 = vmand %vm1020, %vm1024
      %v1029 = vsel %vm1025, 1, 0
      %v1030 = vsel %vm1026, 1, 0
      %v1031 = vsel %vm1027, 1, 0
      %v1032 = vsel %vm1028, 1, 0
      %vm1033 = vcmp.eq.s32.totalorder %v1029, 1
      %vm1034 = vcmp.eq.s32.totalorder %v1030, 1
      %vm1035 = vcmp.eq.s32.totalorder %v1031, 1
      %vm1036 = vcmp.eq.s32.totalorder %v1032, 1
      %v1037 = vsel %vm1033, %v1010, 0.0
      %v1038 = vsel %vm1034, %v1011, 0.0
      %v1039 = vsel %vm1035, %v1012, 0.0
      %v1040 = vsel %vm1036, %v1013, 0.0
      %1041 = vst [vmem:[%s251] sm:$0xff] %v1037
      %1042 = vst [vmem:[%s251 + $0x8] sm:$0xff] %v1038
      %1043 = vst [vmem:[%s251 + $0x10] sm:$0xff] %v1039
      %1044 = vst [vmem:[%s251 + $0x18] sm:$0xff] %v1040
      %p1045 = scmp.lt.s32.totalorder %s17, 1
      %s1046 = scalar_select %p1045, %s17, 1
      %s1047 = smul.addr %s1046, 4
      %s1048 = smul.addr %s1047, 8
      %s1049 = scalar_lea.vmem %s6, %s1048
      // Predicated region
      $region45: #{musicnn_forward.5} parent=43 // pred_check
        %p1050 = pneg %p166
      $region46: #{musicnn_forward.5} parent=43 // pred_check_branch
        %1052 = sbr.rel (%p1050) target = $region48
      $region47: #{musicnn_forward.5} parent=43 // pred_region
        _
      $region48: #{musicnn_forward.5} parent=43 // pred_fallthru
        _
    $region44: #{musicnn_forward.5} parent=5 // pred_fallthru
      _
    %p1053 = scmp.le.s32.totalorder 2, %s12
    // Predicated region
    $region49: #{musicnn_forward.5} parent=5 // pred_check
      %p1054 = pneg %p1053
    $region50: #{musicnn_forward.5} parent=5 // pred_check_branch
      %1056 = sbr.rel (%p1054) target = $region52
    $region51: #{musicnn_forward.5} parent=5 // pred_region
      %s1057 = ssub.s32 %s12, 2
      // Predicated region
      $region53: #{musicnn_forward.5} parent=51 // pred_check
        %p1058 = pneg %p172
      $region54: #{musicnn_forward.5} parent=51 // pred_check_branch
        %1060 = sbr.rel (%p1058) target = $region56
      $region55: #{musicnn_forward.5} parent=51 // pred_region
        %p1061 = scmp.lt.s32.totalorder %s18, 1
        %s1062 = scalar_select %p1061, %s18, 1
        %s1063 = smul.addr %s1062, 4
        %s1064 = smul.addr %s1063, 8
        %s1065 = scalar_lea.vmem %s6, %s1064
      $region56: #{musicnn_forward.5} parent=51 // pred_fallthru
        _
    $region52: #{musicnn_forward.5} parent=5 // pred_fallthru
      _
  $region6: #{musicnn_forward.5} parent=0 // loop_footer
    %s16 = sadd.s32 1, %s12
  $region7: #{musicnn_forward.5} parent=0 // loop_footer_branch
    %11 = sbr.rel target = $region3
  $region8: #{musicnn_forward.5} parent=0 // loop_exit
    _

// kernel: musicnn_forward.7
$region0: #{musicnn_forward.7}
  #allocation0 [shape = 'u32[]', space=smem, size = 0x4, offset = 0x4, fixed_abs, tag = 'smem constant byte address 0x4 - core index']
  #allocation1 [shape = 'u32[144,128]{1,0:T(1,128)}', space=vmem, size = 0x12000, scoped, tag = 'internal scratch']
  %s0 = inlined_call_operand.vmem [shape: f32[2,1024], index: 0, kind: input, shape index: {}]
  %s1 = inlined_call_operand.vmem [shape: f32[1024,200], index: 1, kind: input, shape index: {}]
  %s2 = inlined_call_operand.vmem [shape: f32[1,200], index: 2, kind: input, shape index: {}]
  %s3 = inlined_call_operand.vmem [shape: f32[200,128], index: 3, kind: input, shape index: {}]
  %s4 = inlined_call_operand.vmem [shape: f32[1,128], index: 4, kind: input, shape index: {}]
  %s5 = inlined_call_operand.hbm [shape: f32[2,128], index: 5, kind: output, shape index: {}]
  %s6 = sld [smem:[#allocation0]]
  $region30: #{musicnn_forward.7} parent=0
    _
  %s8 = ssub.s32 1, %s6
  %s9 = scalar_select 0, %s8, %s6
  $region1: #{musicnn_forward.7} parent=0
    #allocation2 [shape = 'u8[1024]{0}', space=vmem, size = 0x400, scoped, tag = 'output window, operand 0, single buffered']
    #allocation3 [shape = 's32[1]{0}', space=sflag, size = 0x4, scoped, tag = 'scoped memory for musicnn_forward.7']
    %10 = vsyncpa [#allocation3], 0
    // Predicated region
    $region2: #{musicnn_forward.7} parent=1 // pred_check
      _
    $region3: #{musicnn_forward.7} parent=1 // pred_check_branch
      %12 = sbr.rel (0) target = $region5
    $region4: #{musicnn_forward.7} parent=1 // pred_region
      _
    $region5: #{musicnn_forward.7} parent=1 // pred_fallthru
      _
    // Predicated region
    $region6: #{musicnn_forward.7} parent=1 // pred_check
      _
    $region7: #{musicnn_forward.7} parent=1 // pred_check_branch
      %14 = sbr.rel (0) target = $region9
    $region8: #{musicnn_forward.7} parent=1 // pred_region
      _
    $region9: #{musicnn_forward.7} parent=1 // pred_fallthru
      _
    // Predicated region
    $region10: #{musicnn_forward.7} parent=1 // pred_check
      _
    $region11: #{musicnn_forward.7} parent=1 // pred_check_branch
      %16 = sbr.rel (0) target = $region13
    $region12: #{musicnn_forward.7} parent=1 // pred_region
      _
    $region13: #{musicnn_forward.7} parent=1 // pred_fallthru
      _
    // Predicated region
    $region14: #{musicnn_forward.7} parent=1 // pred_check
      _
    $region15: #{musicnn_forward.7} parent=1 // pred_check_branch
      %18 = sbr.rel (0) target = $region17
    $region16: #{musicnn_forward.7} parent=1 // pred_region
      _
    $region17: #{musicnn_forward.7} parent=1 // pred_fallthru
      _
    // Predicated region
    $region18: #{musicnn_forward.7} parent=1 // pred_check
      _
    $region19: #{musicnn_forward.7} parent=1 // pred_check_branch
      %20 = sbr.rel (0) target = $region21
    $region20: #{musicnn_forward.7} parent=1 // pred_region
      _
    $region21: #{musicnn_forward.7} parent=1 // pred_fallthru
      _
    %v21 = vld [vmem:[%s0] sm:$0xff]
    %v22 = vld [vmem:[%s0 + $0x8] sm:$0xff]
    %v23 = vld [vmem:[%s1] sm:$0xff]
    %v24 = vld [vmem:[%s1 + $0x8] sm:$0xff]
    %v25 = vld [vmem:[%s1 + $0x10] sm:$0xff]
    %v26 = vld [vmem:[%s1 + $0x18] sm:$0xff]
    %v27 = vld [vmem:[%s1 + $0x20] sm:$0xff]
    %v28 = vld [vmem:[%s1 + $0x28] sm:$0xff]
    %v29 = vld [vmem:[%s1 + $0x30] sm:$0xff]
    %v30 = vld [vmem:[%s1 + $0x38] sm:$0xff]
    %v31 = vld [vmem:[%s1 + $0x40] sm:$0xff]
    %v32 = vld [vmem:[%s1 + $0x48] sm:$0xff]
    %v33 = vld [vmem:[%s1 + $0x50] sm:$0xff]
    %v34 = vld [vmem:[%s1 + $0x58] sm:$0xff]
    %v35 = vld [vmem:[%s1 + $0x60] sm:$0xff]
    %v36 = vld [vmem:[%s1 + $0x68] sm:$0xff]
    %v37 = vld [vmem:[%s1 + $0x70] sm:$0xff]
    %v38 = vld [vmem:[%s1 + $0x78] sm:$0xff]
    %v39 = vld [vmem:[%s1 + $0x80] sm:$0xff]
    %v40 = vld [vmem:[%s1 + $0x88] sm:$0xff]
    %v41 = vld [vmem:[%s1 + $0x90] sm:$0xff]
    %v42 = vld [vmem:[%s1 + $0x98] sm:$0xff]
    %v43 = vld [vmem:[%s1 + $0xa0] sm:$0xff]
    %v44 = vld [vmem:[%s1 + $0xa8] sm:$0xff]
    %v45 = vld [vmem:[%s1 + $0xb0] sm:$0xff]
    %v46 = vld [vmem:[%s1 + $0xb8] sm:$0xff]
    %v47 = vld [vmem:[%s1 + $0xc0] sm:$0xff]
    %v48 = vld [vmem:[%s1 + $0xc8] sm:$0xff]
    %v49 = vld [vmem:[%s1 + $0xd0] sm:$0xff]
    %v50 = vld [vmem:[%s1 + $0xd8] sm:$0xff]
    %v51 = vld [vmem:[%s1 + $0xe0] sm:$0xff]
    %v52 = vld [vmem:[%s1 + $0xe8] sm:$0xff]
    %v53 = vld [vmem:[%s1 + $0xf0] sm:$0xff]
    %v54 = vld [vmem:[%s1 + $0xf8] sm:$0xff]
    %v55 = vld [vmem:[%s1 + $0x100] sm:$0xff]
    %v56 = vld [vmem:[%s1 + $0x108] sm:$0xff]
    %v57 = vld [vmem:[%s1 + $0x110] sm:$0xff]
    %v58 = vld [vmem:[%s1 + $0x118] sm:$0xff]
    %v59 = vld [vmem:[%s1 + $0x120] sm:$0xff]
    %v60 = vld [vmem:[%s1 + $0x128] sm:$0xff]
    %v61 = vld [vmem:[%s1 + $0x130] sm:$0xff]
    %v62 = vld [vmem:[%s1 + $0x138] sm:$0xff]
    %v63 = vld [vmem:[%s1 + $0x140] sm:$0xff]
    %v64 = vld [vmem:[%s1 + $0x148] sm:$0xff]
    %v65 = vld [vmem:[%s1 + $0x150] sm:$0xff]
    %v66 = vld [vmem:[%s1 + $0x158] sm:$0xff]
    %v67 = vld [vmem:[%s1 + $0x160] sm:$0xff]
    %v68 = vld [vmem:[%s1 + $0x168] sm:$0xff]
    %v69 = vld [vmem:[%s1 + $0x170] sm:$0xff]
    %v70 = vld [vmem:[%s1 + $0x178] sm:$0xff]
    %v71 = vld [vmem:[%s1 + $0x180] sm:$0xff]
    %v72 = vld [vmem:[%s1 + $0x188] sm:$0xff]
    %v73 = vld [vmem:[%s1 + $0x190] sm:$0xff]
    %v74 = vld [vmem:[%s1 + $0x198] sm:$0xff]
    %v75 = vld [vmem:[%s1 + $0x1a0] sm:$0xff]
    %v76 = vld [vmem:[%s1 + $0x1a8] sm:$0xff]
    %v77 = vld [vmem:[%s1 + $0x1b0] sm:$0xff]
    %v78 = vld [vmem:[%s1 + $0x1b8] sm:$0xff]
    %v79 = vld [vmem:[%s1 + $0x1c0] sm:$0xff]
    %v80 = vld [vmem:[%s1 + $0x1c8] sm:$0xff]
    %v81 = vld [vmem:[%s1 + $0x1d0] sm:$0xff]
    %v82 = vld [vmem:[%s1 + $0x1d8] sm:$0xff]
    %v83 = vld [vmem:[%s1 + $0x1e0] sm:$0xff]
    %v84 = vld [vmem:[%s1 + $0x1e8] sm:$0xff]
    %v85 = vld [vmem:[%s1 + $0x1f0] sm:$0xff]
    %v86 = vld [vmem:[%s1 + $0x1f8] sm:$0xff]
    %v87 = vld [vmem:[%s1 + $0x200] sm:$0xff]
    %v88 = vld [vmem:[%s1 + $0x208] sm:$0xff]
    %v89 = vld [vmem:[%s1 + $0x210] sm:$0xff]
    %v90 = vld [vmem:[%s1 + $0x218] sm:$0xff]
    %v91 = vld [vmem:[%s1 + $0x220] sm:$0xff]
    %v92 = vld [vmem:[%s1 + $0x228] sm:$0xff]
    %v93 = vld [vmem:[%s1 + $0x230] sm:$0xff]
    %v94 = vld [vmem:[%s1 + $0x238] sm:$0xff]
    %v95 = vld [vmem:[%s1 + $0x240] sm:$0xff]
    %v96 = vld [vmem:[%s1 + $0x248] sm:$0xff]
    %v97 = vld [vmem:[%s1 + $0x250] sm:$0xff]
    %v98 = vld [vmem:[%s1 + $0x258] sm:$0xff]
    %v99 = vld [vmem:[%s1 + $0x260] sm:$0xff]
    %v100 = vld [vmem:[%s1 + $0x268] sm:$0xff]
    %v101 = vld [vmem:[%s1 + $0x270] sm:$0xff]
    %v102 = vld [vmem:[%s1 + $0x278] sm:$0xff]
    %v103 = vld [vmem:[%s1 + $0x280] sm:$0xff]
    %v104 = vld [vmem:[%s1 + $0x288] sm:$0xff]
    %v105 = vld [vmem:[%s1 + $0x290] sm:$0xff]
    %v106 = vld [vmem:[%s1 + $0x298] sm:$0xff]
    %v107 = vld [vmem:[%s1 + $0x2a0] sm:$0xff]
    %v108 = vld [vmem:[%s1 + $0x2a8] sm:$0xff]
    %v109 = vld [vmem:[%s1 + $0x2b0] sm:$0xff]
    %v110 = vld [vmem:[%s1 + $0x2b8] sm:$0xff]
    %v111 = vld [vmem:[%s1 + $0x2c0] sm:$0xff]
    %v112 = vld [vmem:[%s1 + $0x2c8] sm:$0xff]
    %v113 = vld [vmem:[%s1 + $0x2d0] sm:$0xff]
    %v114 = vld [vmem:[%s1 + $0x2d8] sm:$0xff]
    %v115 = vld [vmem:[%s1 + $0x2e0] sm:$0xff]
    %v116 = vld [vmem:[%s1 + $0x2e8] sm:$0xff]
    %v117 = vld [vmem:[%s1 + $0x2f0] sm:$0xff]
    %v118 = vld [vmem:[%s1 + $0x2f8] sm:$0xff]
    %v119 = vld [vmem:[%s1 + $0x300] sm:$0xff]
    %v120 = vld [vmem:[%s1 + $0x308] sm:$0xff]
    %v121 = vld [vmem:[%s1 + $0x310] sm:$0xff]
    %v122 = vld [vmem:[%s1 + $0x318] sm:$0xff]
    %v123 = vld [vmem:[%s1 + $0x320] sm:$0xff]
    %v124 = vld [vmem:[%s1 + $0x328] sm:$0xff]
    %v125 = vld [vmem:[%s1 + $0x330] sm:$0xff]
    %v126 = vld [vmem:[%s1 + $0x338] sm:$0xff]
    %v127 = vld [vmem:[%s1 + $0x340] sm:$0xff]
    %v128 = vld [vmem:[%s1 + $0x348] sm:$0xff]
    %v129 = vld [vmem:[%s1 + $0x350] sm:$0xff]
    %v130 = vld [vmem:[%s1 + $0x358] sm:$0xff]
    %v131 = vld [vmem:[%s1 + $0x360] sm:$0xff]
    %v132 = vld [vmem:[%s1 + $0x368] sm:$0xff]
    %v133 = vld [vmem:[%s1 + $0x370] sm:$0xff]
    %v134 = vld [vmem:[%s1 + $0x378] sm:$0xff]
    %v135 = vld [vmem:[%s1 + $0x380] sm:$0xff]
    %v136 = vld [vmem:[%s1 + $0x388] sm:$0xff]
    %v137 = vld [vmem:[%s1 + $0x390] sm:$0xff]
    %v138 = vld [vmem:[%s1 + $0x398] sm:$0xff]
    %v139 = vld [vmem:[%s1 + $0x3a0] sm:$0xff]
    %v140 = vld [vmem:[%s1 + $0x3a8] sm:$0xff]
    %v141 = vld [vmem:[%s1 + $0x3b0] sm:$0xff]
    %v142 = vld [vmem:[%s1 + $0x3b8] sm:$0xff]
    %v143 = vld [vmem:[%s1 + $0x3c0] sm:$0xff]
    %v144 = vld [vmem:[%s1 + $0x3c8] sm:$0xff]
    %v145 = vld [vmem:[%s1 + $0x3d0] sm:$0xff]
    %v146 = vld [vmem:[%s1 + $0x3d8] sm:$0xff]
    %v147 = vld [vmem:[%s1 + $0x3e0] sm:$0xff]
    %v148 = vld [vmem:[%s1 + $0x3e8] sm:$0xff]
    %v149 = vld [vmem:[%s1 + $0x3f0] sm:$0xff]
    %v150 = vld [vmem:[%s1 + $0x3f8] sm:$0xff]
    %v151 = vld [vmem:[%s1 + $0x400] sm:$0xff]
    %v152 = vld [vmem:[%s1 + $0x408] sm:$0xff]
    %v153 = vld [vmem:[%s1 + $0x410] sm:$0xff]
    %v154 = vld [vmem:[%s1 + $0x418] sm:$0xff]
    %v155 = vld [vmem:[%s1 + $0x420] sm:$0xff]
    %v156 = vld [vmem:[%s1 + $0x428] sm:$0xff]
    %v157 = vld [vmem:[%s1 + $0x430] sm:$0xff]
    %v158 = vld [vmem:[%s1 + $0x438] sm:$0xff]
    %v159 = vld [vmem:[%s1 + $0x440] sm:$0xff]
    %v160 = vld [vmem:[%s1 + $0x448] sm:$0xff]
    %v161 = vld [vmem:[%s1 + $0x450] sm:$0xff]
    %v162 = vld [vmem:[%s1 + $0x458] sm:$0xff]
    %v163 = vld [vmem:[%s1 + $0x460] sm:$0xff]
    %v164 = vld [vmem:[%s1 + $0x468] sm:$0xff]
    %v165 = vld [vmem:[%s1 + $0x470] sm:$0xff]
    %v166 = vld [vmem:[%s1 + $0x478] sm:$0xff]
    %v167 = vld [vmem:[%s1 + $0x480] sm:$0xff]
    %v168 = vld [vmem:[%s1 + $0x488] sm:$0xff]
    %v169 = vld [vmem:[%s1 + $0x490] sm:$0xff]
    %v170 = vld [vmem:[%s1 + $0x498] sm:$0xff]
    %v171 = vld [vmem:[%s1 + $0x4a0] sm:$0xff]
    %v172 = vld [vmem:[%s1 + $0x4a8] sm:$0xff]
    %v173 = vld [vmem:[%s1 + $0x4b0] sm:$0xff]
    %v174 = vld [vmem:[%s1 + $0x4b8] sm:$0xff]
    %v175 = vld [vmem:[%s1 + $0x4c0] sm:$0xff]
    %v176 = vld [vmem:[%s1 + $0x4c8] sm:$0xff]
    %v177 = vld [vmem:[%s1 + $0x4d0] sm:$0xff]
    %v178 = vld [vmem:[%s1 + $0x4d8] sm:$0xff]
    %v179 = vld [vmem:[%s1 + $0x4e0] sm:$0xff]
    %v180 = vld [vmem:[%s1 + $0x4e8] sm:$0xff]
    %v181 = vld [vmem:[%s1 + $0x4f0] sm:$0xff]
    %v182 = vld [vmem:[%s1 + $0x4f8] sm:$0xff]
    %v183 = vld [vmem:[%s1 + $0x500] sm:$0xff]
    %v184 = vld [vmem:[%s1 + $0x508] sm:$0xff]
    %v185 = vld [vmem:[%s1 + $0x510] sm:$0xff]
    %v186 = vld [vmem:[%s1 + $0x518] sm:$0xff]
    %v187 = vld [vmem:[%s1 + $0x520] sm:$0xff]
    %v188 = vld [vmem:[%s1 + $0x528] sm:$0xff]
    %v189 = vld [vmem:[%s1 + $0x530] sm:$0xff]
    %v190 = vld [vmem:[%s1 + $0x538] sm:$0xff]
    %v191 = vld [vmem:[%s1 + $0x540] sm:$0xff]
    %v192 = vld [vmem:[%s1 + $0x548] sm:$0xff]
    %v193 = vld [vmem:[%s1 + $0x550] sm:$0xff]
    %v194 = vld [vmem:[%s1 + $0x558] sm:$0xff]
    %v195 = vld [vmem:[%s1 + $0x560] sm:$0xff]
    %v196 = vld [vmem:[%s1 + $0x568] sm:$0xff]
    %v197 = vld [vmem:[%s1 + $0x570] sm:$0xff]
    %v198 = vld [vmem:[%s1 + $0x578] sm:$0xff]
    %v199 = vld [vmem:[%s1 + $0x580] sm:$0xff]
    %v200 = vld [vmem:[%s1 + $0x588] sm:$0xff]
    %v201 = vld [vmem:[%s1 + $0x590] sm:$0xff]
    %v202 = vld [vmem:[%s1 + $0x598] sm:$0xff]
    %v203 = vld [vmem:[%s1 + $0x5a0] sm:$0xff]
    %v204 = vld [vmem:[%s1 + $0x5a8] sm:$0xff]
    %v205 = vld [vmem:[%s1 + $0x5b0] sm:$0xff]
    %v206 = vld [vmem:[%s1 + $0x5b8] sm:$0xff]
    %v207 = vld [vmem:[%s1 + $0x5c0] sm:$0xff]
    %v208 = vld [vmem:[%s1 + $0x5c8] sm:$0xff]
    %v209 = vld [vmem:[%s1 + $0x5d0] sm:$0xff]
    %v210 = vld [vmem:[%s1 + $0x5d8] sm:$0xff]
    %v211 = vld [vmem:[%s1 + $0x5e0] sm:$0xff]
    %v212 = vld [vmem:[%s1 + $0x5e8] sm:$0xff]
    %v213 = vld [vmem:[%s1 + $0x5f0] sm:$0xff]
    %v214 = vld [vmem:[%s1 + $0x5f8] sm:$0xff]
    %v215 = vld [vmem:[%s1 + $0x600] sm:$0xff]
    %v216 = vld [vmem:[%s1 + $0x608] sm:$0xff]
    %v217 = vld [vmem:[%s1 + $0x610] sm:$0xff]
    %v218 = vld [vmem:[%s1 + $0x618] sm:$0xff]
    %v219 = vld [vmem:[%s1 + $0x620] sm:$0xff]
    %v220 = vld [vmem:[%s1 + $0x628] sm:$0xff]
    %v221 = vld [vmem:[%s1 + $0x630] sm:$0xff]
    %v222 = vld [vmem:[%s1 + $0x638] sm:$0xff]
    %v223 = vld [vmem:[%s1 + $0x640] sm:$0xff]
    %v224 = vld [vmem:[%s1 + $0x648] sm:$0xff]
    %v225 = vld [vmem:[%s1 + $0x650] sm:$0xff]
    %v226 = vld [vmem:[%s1 + $0x658] sm:$0xff]
    %v227 = vld [vmem:[%s1 + $0x660] sm:$0xff]
    %v228 = vld [vmem:[%s1 + $0x668] sm:$0xff]
    %v229 = vld [vmem:[%s1 + $0x670] sm:$0xff]
    %v230 = vld [vmem:[%s1 + $0x678] sm:$0xff]
    %v231 = vld [vmem:[%s1 + $0x680] sm:$0xff]
    %v232 = vld [vmem:[%s1 + $0x688] sm:$0xff]
    %v233 = vld [vmem:[%s1 + $0x690] sm:$0xff]
    %v234 = vld [vmem:[%s1 + $0x698] sm:$0xff]
    %v235 = vld [vmem:[%s1 + $0x6a0] sm:$0xff]
    %v236 = vld [vmem:[%s1 + $0x6a8] sm:$0xff]
    %v237 = vld [vmem:[%s1 + $0x6b0] sm:$0xff]
    %v238 = vld [vmem:[%s1 + $0x6b8] sm:$0xff]
    %v239 = vld [vmem:[%s1 + $0x6c0] sm:$0xff]
    %v240 = vld [vmem:[%s1 + $0x6c8] sm:$0xff]
    %v241 = vld [vmem:[%s1 + $0x6d0] sm:$0xff]
    %v242 = vld [vmem:[%s1 + $0x6d8] sm:$0xff]
    %v243 = vld [vmem:[%s1 + $0x6e0] sm:$0xff]
    %v244 = vld [vmem:[%s1 + $0x6e8] sm:$0xff]
    %v245 = vld [vmem:[%s1 + $0x6f0] sm:$0xff]
    %v246 = vld [vmem:[%s1 + $0x6f8] sm:$0xff]
    %v247 = vld [vmem:[%s1 + $0x700] sm:$0xff]
    %v248 = vld [vmem:[%s1 + $0x708] sm:$0xff]
    %v249 = vld [vmem:[%s1 + $0x710] sm:$0xff]
    %v250 = vld [vmem:[%s1 + $0x718] sm:$0xff]
    %v251 = vld [vmem:[%s1 + $0x720] sm:$0xff]
    %v252 = vld [vmem:[%s1 + $0x728] sm:$0xff]
    %v253 = vld [vmem:[%s1 + $0x730] sm:$0xff]
    %v254 = vld [vmem:[%s1 + $0x738] sm:$0xff]
    %v255 = vld [vmem:[%s1 + $0x740] sm:$0xff]
    %v256 = vld [vmem:[%s1 + $0x748] sm:$0xff]
    %v257 = vld [vmem:[%s1 + $0x750] sm:$0xff]
    %v258 = vld [vmem:[%s1 + $0x758] sm:$0xff]
    %v259 = vld [vmem:[%s1 + $0x760] sm:$0xff]
    %v260 = vld [vmem:[%s1 + $0x768] sm:$0xff]
    %v261 = vld [vmem:[%s1 + $0x770] sm:$0xff]
    %v262 = vld [vmem:[%s1 + $0x778] sm:$0xff]
    %v263 = vld [vmem:[%s1 + $0x780] sm:$0xff]
    %v264 = vld [vmem:[%s1 + $0x788] sm:$0xff]
    %v265 = vld [vmem:[%s1 + $0x790] sm:$0xff]
    %v266 = vld [vmem:[%s1 + $0x798] sm:$0xff]
    %v267 = vld [vmem:[%s1 + $0x7a0] sm:$0xff]
    %v268 = vld [vmem:[%s1 + $0x7a8] sm:$0xff]
    %v269 = vld [vmem:[%s1 + $0x7b0] sm:$0xff]
    %v270 = vld [vmem:[%s1 + $0x7b8] sm:$0xff]
    %v271 = vld [vmem:[%s1 + $0x7c0] sm:$0xff]
    %v272 = vld [vmem:[%s1 + $0x7c8] sm:$0xff]
    %v273 = vld [vmem:[%s1 + $0x7d0] sm:$0xff]
    %v274 = vld [vmem:[%s1 + $0x7d8] sm:$0xff]
    %v275 = vld [vmem:[%s1 + $0x7e0] sm:$0xff]
    %v276 = vld [vmem:[%s1 + $0x7e8] sm:$0xff]
    %v277 = vld [vmem:[%s1 + $0x7f0] sm:$0xff]
    %v278 = vld [vmem:[%s1 + $0x7f8] sm:$0xff]
    %v279 = vld [vmem:[%s2] sm:$0x3]
    %v281 = vlaneseq
    %v282 = vshrl.u32 %v281, 7
    %v283 = vsub.s32 0, %v282
    %v284 = vrot.slane %v279, %v283
    %v285 = vlaneseq
    %v286 = vshrl.u32 %v285, 7
    %v287 = vsub.s32 1, %v286
    %v288 = vrot.slane %v279, %v287
    %v293 = vcombine.high %v21, %v21
    %v295 = vunpack.c.l.s4 1983009808
    %v296 = vunpack.c.0.s8 %v295
    %v297 = vlaneseq
    %v298 = vshrl.u32 %v297, 7
    %v299 = vsub.s32 %v296, %v298
    %v300 = vrot.slane %v21, %v299
    %v302 = vunpack.c.l.s4 1983009808
    %v303 = vunpack.c.0.s8 %v302
    %v304 = vlaneseq
    %v305 = vshrl.u32 %v304, 7
    %v306 = vsub.s32 %v303, %v305
    %v307 = vrot.slane %v293, %v306
    %v308 = vcombine.high %v300, %v300
    %v309 = vcombine.high %v307, %v307
    %v310 = vcombine.high %v22, %v22
    %v312 = vunpack.c.l.s4 1983009808
    %v313 = vunpack.c.0.s8 %v312
    %v314 = vlaneseq
    %v315 = vshrl.u32 %v314, 7
    %v316 = vsub.s32 %v313, %v315
    %v317 = vrot.slane %v22, %v316
    %v319 = vunpack.c.l.s4 1983009808
    %v320 = vunpack.c.0.s8 %v319
    %v321 = vlaneseq
    %v322 = vshrl.u32 %v321, 7
    %v323 = vsub.s32 %v320, %v322
    %v324 = vrot.slane %v310, %v323
    %v325 = vcombine.high %v317, %v317
    %v326 = vcombine.high %v324, %v324
    %335 = vmatprep.subr.mxu0 %v54
    %336 = vmatpush1.msra.mxu0 %v53
    %337 = vmatprep.subr.mxu0 %v52
    %338 = vmatpush1.msra.mxu0 %v51
    %339 = vmatprep.subr.mxu0 %v50
    %340 = vmatpush1.msra.mxu0 %v49
    %341 = vmatprep.subr.mxu0 %v48
    %342 = vmatpush1.msra.mxu0 %v47
    %343 = vmatprep.subr.mxu0 %v46
    %344 = vmatpush1.msra.mxu0 %v45
    %345 = vmatprep.subr.mxu0 %v44
    %346 = vmatpush1.msra.mxu0 %v43
    %347 = vmatprep.subr.mxu0 %v42
    %348 = vmatpush1.msra.mxu0 %v41
    %349 = vmatprep.subr.mxu0 %v40
    %350 = vmatpush1.msra.mxu0 %v39
    %351 = vmatprep.subr.mxu0 %v38
    %352 = vmatpush1.msra.mxu0 %v37
    %353 = vmatprep.subr.mxu0 %v36
    %354 = vmatpush1.msra.mxu0 %v35
    %355 = vmatprep.subr.mxu0 %v34
    %356 = vmatpush1.msra.mxu0 %v33
    %357 = vmatprep.subr.mxu0 %v32
    %358 = vmatpush1.msra.mxu0 %v31
    %359 = vmatprep.subr.mxu0 %v30
    %360 = vmatpush1.msra.mxu0 %v29
    %361 = vmatprep.subr.mxu0 %v28
    %362 = vmatpush1.msra.mxu0 %v27
    %363 = vmatprep.subr.mxu0 %v26
    %364 = vmatpush1.msra.mxu0 %v25
    %365 = vmatprep.subr.mxu0 %v24
    %366 = vmatpush1.msra.mxu0 %v23
    %367 = vmatprep.subr.mxu0 %v86
    %368 = vmatpush2.msra.mxu0 %v85
    %369 = vmatprep.subr.mxu0 %v84
    %370 = vmatpush2.msra.mxu0 %v83
    %371 = vmatprep.subr.mxu0 %v82
    %372 = vmatpush2.msra.mxu0 %v81
    %373 = vmatprep.subr.mxu0 %v80
    %374 = vmatpush2.msra.mxu0 %v79
    %375 = vmatprep.subr.mxu0 %v78
    %376 = vmatpush2.msra.mxu0 %v77
    %377 = vmatprep.subr.mxu0 %v76
    %378 = vmatpush2.msra.mxu0 %v75
    %379 = vmatprep.subr.mxu0 %v74
    %380 = vmatpush2.msra.mxu0 %v73
    %381 = vmatprep.subr.mxu0 %v72
    %382 = vmatpush2.msra.mxu0 %v71
    %383 = vmatprep.subr.mxu0 %v70
    %384 = vmatpush2.msra.mxu0 %v69
    %385 = vmatprep.subr.mxu0 %v68
    %386 = vmatpush2.msra.mxu0 %v67
    %387 = vmatprep.subr.mxu0 %v66
    %388 = vmatpush2.msra.mxu0 %v65
    %389 = vmatprep.subr.mxu0 %v64
    %390 = vmatpush2.msra.mxu0 %v63
    %391 = vmatprep.subr.mxu0 %v62
    %392 = vmatpush2.msra.mxu0 %v61
    %393 = vmatprep.subr.mxu0 %v60
    %394 = vmatpush2.msra.mxu0 %v59
    %395 = vmatprep.subr.mxu0 %v58
    %396 = vmatpush2.msra.mxu0 %v57
    %397 = vmatprep.subr.mxu0 %v56
    %398 = vmatpush2.msra.mxu0 %v55
    %399 = vmatprep.mubr.f32.mxu0 %v308
    %400 = vmatmul.mubr.f32.gmra.mxu0 %v300
    %v401 = vpop.f32.mrf.mxu0
    %v402 = vadd.f32 %v284, %v401
    %v403 = vpop.f32.mrf.mxu0
    %v404 = vadd.f32 %v288, %v403
    %405 = vdwg.mxu0
    %406 = vmatprep.subr.mxu0 %v118
    %407 = vmatpush1.msra.mxu0 %v117
    %408 = vmatprep.subr.mxu0 %v116
    %409 = vmatpush1.msra.mxu0 %v115
    %410 = vmatprep.subr.mxu0 %v114
    %411 = vmatpush1.msra.mxu0 %v113
    %412 = vmatprep.subr.mxu0 %v112
    %413 = vmatpush1.msra.mxu0 %v111
    %414 = vmatprep.subr.mxu0 %v110
    %415 = vmatpush1.msra.mxu0 %v109
    %416 = vmatprep.subr.mxu0 %v108
    %417 = vmatpush1.msra.mxu0 %v107
    %418 = vmatprep.subr.mxu0 %v106
    %419 = vmatpush1.msra.mxu0 %v105
    %420 = vmatprep.subr.mxu0 %v104
    %421 = vmatpush1.msra.mxu0 %v103
    %422 = vmatprep.subr.mxu0 %v102
    %423 = vmatpush1.msra.mxu0 %v101
    %424 = vmatprep.subr.mxu0 %v100
    %425 = vmatpush1.msra.mxu0 %v99
    %426 = vmatprep.subr.mxu0 %v98
    %427 = vmatpush1.msra.mxu0 %v97
    %428 = vmatprep.subr.mxu0 %v96
    %429 = vmatpush1.msra.mxu0 %v95
    %430 = vmatprep.subr.mxu0 %v94
    %431 = vmatpush1.msra.mxu0 %v93
    %432 = vmatprep.subr.mxu0 %v92
    %433 = vmatpush1.msra.mxu0 %v91
    %434 = vmatprep.subr.mxu0 %v90
    %435 = vmatpush1.msra.mxu0 %v89
    %436 = vmatprep.subr.mxu0 %v88
    %437 = vmatpush1.msra.mxu0 %v87
    %438 = vmatprep.subr.mxu0 %v150
    %439 = vmatpush2.msra.mxu0 %v149
    %440 = vmatprep.subr.mxu0 %v148
    %441 = vmatpush2.msra.mxu0 %v147
    %442 = vmatprep.subr.mxu0 %v146
    %443 = vmatpush2.msra.mxu0 %v145
    %444 = vmatprep.subr.mxu0 %v144
    %445 = vmatpush2.msra.mxu0 %v143
    %446 = vmatprep.subr.mxu0 %v142
    %447 = vmatpush2.msra.mxu0 %v141
    %448 = vmatprep.subr.mxu0 %v140
    %449 = vmatpush2.msra.mxu0 %v139
    %450 = vmatprep.subr.mxu0 %v138
    %451 = vmatpush2.msra.mxu0 %v137
    %452 = vmatprep.subr.mxu0 %v136
    %453 = vmatpush2.msra.mxu0 %v135
    %454 = vmatprep.subr.mxu0 %v134
    %455 = vmatpush2.msra.mxu0 %v133
    %456 = vmatprep.subr.mxu0 %v132
    %457 = vmatpush2.msra.mxu0 %v131
    %458 = vmatprep.subr.mxu0 %v130
    %459 = vmatpush2.msra.mxu0 %v129
    %460 = vmatprep.subr.mxu0 %v128
    %461 = vmatpush2.msra.mxu0 %v127
    %462 = vmatprep.subr.mxu0 %v126
    %463 = vmatpush2.msra.mxu0 %v125
    %464 = vmatprep.subr.mxu0 %v124
    %465 = vmatpush2.msra.mxu0 %v123
    %466 = vmatprep.subr.mxu0 %v122
    %467 = vmatpush2.msra.mxu0 %v121
    %468 = vmatprep.subr.mxu0 %v120
    %469 = vmatpush2.msra.mxu0 %v119
    %470 = vmatprep.mubr.f32.mxu0 %v309
    %471 = vmatmul.mubr.f32.gmra.mxu0 %v307
    %v472 = vpop.f32.mrf.mxu0
    %v473 = vadd.f32 %v402, %v472
    %v474 = vpop.f32.mrf.mxu0
    %v475 = vadd.f32 %v404, %v474
    %476 = vdwg.mxu0
    %477 = vmatprep.subr.mxu0 %v182
    %478 = vmatpush1.msra.mxu0 %v181
    %479 = vmatprep.subr.mxu0 %v180
    %480 = vmatpush1.msra.mxu0 %v179
    %481 = vmatprep.subr.mxu0 %v178
    %482 = vmatpush1.msra.mxu0 %v177
    %483 = vmatprep.subr.mxu0 %v176
    %484 = vmatpush1.msra.mxu0 %v175
    %485 = vmatprep.subr.mxu0 %v174
    %486 = vmatpush1.msra.mxu0 %v173
    %487 = vmatprep.subr.mxu0 %v172
    %488 = vmatpush1.msra.mxu0 %v171
    %489 = vmatprep.subr.mxu0 %v170
    %490 = vmatpush1.msra.mxu0 %v169
    %491 = vmatprep.subr.mxu0 %v168
    %492 = vmatpush1.msra.mxu0 %v167
    %493 = vmatprep.subr.mxu0 %v166
    %494 = vmatpush1.msra.mxu0 %v165
    %495 = vmatprep.subr.mxu0 %v164
    %496 = vmatpush1.msra.mxu0 %v163
    %497 = vmatprep.subr.mxu0 %v162
    %498 = vmatpush1.msra.mxu0 %v161
    %499 = vmatprep.subr.mxu0 %v160
    %500 = vmatpush1.msra.mxu0 %v159
    %501 = vmatprep.subr.mxu0 %v158
    %502 = vmatpush1.msra.mxu0 %v157
    %503 = vmatprep.subr.mxu0 %v156
    %504 = vmatpush1.msra.mxu0 %v155
    %505 = vmatprep.subr.mxu0 %v154
    %506 = vmatpush1.msra.mxu0 %v153
    %507 = vmatprep.subr.mxu0 %v152
    %508 = vmatpush1.msra.mxu0 %v151
    %509 = vmatprep.subr.mxu0 %v214
    %510 = vmatpush2.msra.mxu0 %v213
    %511 = vmatprep.subr.mxu0 %v212
    %512 = vmatpush2.msra.mxu0 %v211
    %513 = vmatprep.subr.mxu0 %v210
    %514 = vmatpush2.msra.mxu0 %v209
    %515 = vmatprep.subr.mxu0 %v208
    %516 = vmatpush2.msra.mxu0 %v207
    %517 = vmatprep.subr.mxu0 %v206
    %518 = vmatpush2.msra.mxu0 %v205
    %519 = vmatprep.subr.mxu0 %v204
    %520 = vmatpush2.msra.mxu0 %v203
    %521 = vmatprep.subr.mxu0 %v202
    %522 = vmatpush2.msra.mxu0 %v201
    %523 = vmatprep.subr.mxu0 %v200
    %524 = vmatpush2.msra.mxu0 %v199
    %525 = vmatprep.subr.mxu0 %v198
    %526 = vmatpush2.msra.mxu0 %v197
    %527 = vmatprep.subr.mxu0 %v196
    %528 = vmatpush2.msra.mxu0 %v195
    %529 = vmatprep.subr.mxu0 %v194
    %530 = vmatpush2.msra.mxu0 %v193
    %531 = vmatprep.subr.mxu0 %v192
    %532 = vmatpush2.msra.mxu0 %v191
    %533 = vmatprep.subr.mxu0 %v190
    %534 = vmatpush2.msra.mxu0 %v189
    %535 = vmatprep.subr.mxu0 %v188
    %536 = vmatpush2.msra.mxu0 %v187
    %537 = vmatprep.subr.mxu0 %v186
    %538 = vmatpush2.msra.mxu0 %v185
    %539 = vmatprep.subr.mxu0 %v184
    %540 = vmatpush2.msra.mxu0 %v183
    %541 = vmatprep.mubr.f32.mxu0 %v325
    %542 = vmatmul.mubr.f32.gmra.mxu0 %v317
    %v543 = vpop.f32.mrf.mxu0
    %v544 = vadd.f32 %v473, %v543
    %v545 = vpop.f32.mrf.mxu0
    %v546 = vadd.f32 %v475, %v545
    %547 = vdwg.mxu0
    %548 = vmatprep.subr.mxu0 %v246
    %549 = vmatpush1.msra.mxu0 %v245
    %550 = vmatprep.subr.mxu0 %v244
    %551 = vmatpush1.msra.mxu0 %v243
    %552 = vmatprep.subr.mxu0 %v242
    %553 = vmatpush1.msra.mxu0 %v241
    %554 = vmatprep.subr.mxu0 %v240
    %555 = vmatpush1.msra.mxu0 %v239
    %556 = vmatprep.subr.mxu0 %v238
    %557 = vmatpush1.msra.mxu0 %v237
    %558 = vmatprep.subr.mxu0 %v236
    %559 = vmatpush1.msra.mxu0 %v235
    %560 = vmatprep.subr.mxu0 %v234
    %561 = vmatpush1.msra.mxu0 %v233
    %562 = vmatprep.subr.mxu0 %v232
    %563 = vmatpush1.msra.mxu0 %v231
    %564 = vmatprep.subr.mxu0 %v230
    %565 = vmatpush1.msra.mxu0 %v229
    %566 = vmatprep.subr.mxu0 %v228
    %567 = vmatpush1.msra.mxu0 %v227
    %568 = vmatprep.subr.mxu0 %v226
    %569 = vmatpush1.msra.mxu0 %v225
    %570 = vmatprep.subr.mxu0 %v224
    %571 = vmatpush1.msra.mxu0 %v223
    %572 = vmatprep.subr.mxu0 %v222
    %573 = vmatpush1.msra.mxu0 %v221
    %574 = vmatprep.subr.mxu0 %v220
    %575 = vmatpush1.msra.mxu0 %v219
    %576 = vmatprep.subr.mxu0 %v218
    %577 = vmatpush1.msra.mxu0 %v217
    %578 = vmatprep.subr.mxu0 %v216
    %579 = vmatpush1.msra.mxu0 %v215
    %580 = vmatprep.subr.mxu0 %v278
    %581 = vmatpush2.msra.mxu0 %v277
    %582 = vmatprep.subr.mxu0 %v276
    %583 = vmatpush2.msra.mxu0 %v275
    %584 = vmatprep.subr.mxu0 %v274
    %585 = vmatpush2.msra.mxu0 %v273
    %586 = vmatprep.subr.mxu0 %v272
    %587 = vmatpush2.msra.mxu0 %v271
    %588 = vmatprep.subr.mxu0 %v270
    %589 = vmatpush2.msra.mxu0 %v269
    %590 = vmatprep.subr.mxu0 %v268
    %591 = vmatpush2.msra.mxu0 %v267
    %592 = vmatprep.subr.mxu0 %v266
    %593 = vmatpush2.msra.mxu0 %v265
    %594 = vmatprep.subr.mxu0 %v264
    %595 = vmatpush2.msra.mxu0 %v263
    %596 = vmatprep.subr.mxu0 %v262
    %597 = vmatpush2.msra.mxu0 %v261
    %598 = vmatprep.subr.mxu0 %v260
    %599 = vmatpush2.msra.mxu0 %v259
    %600 = vmatprep.subr.mxu0 %v258
    %601 = vmatpush2.msra.mxu0 %v257
    %602 = vmatprep.subr.mxu0 %v256
    %603 = vmatpush2.msra.mxu0 %v255
    %604 = vmatprep.subr.mxu0 %v254
    %605 = vmatpush2.msra.mxu0 %v253
    %606 = vmatprep.subr.mxu0 %v252
    %607 = vmatpush2.msra.mxu0 %v251
    %608 = vmatprep.subr.mxu0 %v250
    %609 = vmatpush2.msra.mxu0 %v249
    %610 = vmatprep.subr.mxu0 %v248
    %611 = vmatpush2.msra.mxu0 %v247
    %612 = vmatprep.mubr.f32.mxu0 %v326
    %613 = vmatmul.mubr.f32.gmra.mxu0 %v324
    %v614 = vpop.f32.mrf.mxu0
    %v615 = vadd.f32 %v544, %v614
    %v616 = vpop.f32.mrf.mxu0
    %v617 = vadd.f32 %v546, %v616
    %618 = vdwg.mxu0
    %v619 = vmax.f32 %v615, 0.0
    %v620 = vmax.f32 %v617, 0.0
    %v621 = vld [vmem:[%s3] sm:$0xff]
    %v622 = vld [vmem:[%s3 + $0x8] sm:$0xff]
    %v623 = vld [vmem:[%s3 + $0x10] sm:$0xff]
    %v624 = vld [vmem:[%s3 + $0x18] sm:$0xff]
    %v625 = vld [vmem:[%s3 + $0x20] sm:$0xff]
    %v626 = vld [vmem:[%s3 + $0x28] sm:$0xff]
    %v627 = vld [vmem:[%s3 + $0x30] sm:$0xff]
    %v628 = vld [vmem:[%s3 + $0x38] sm:$0xff]
    %v629 = vld [vmem:[%s3 + $0x40] sm:$0xff]
    %v630 = vld [vmem:[%s3 + $0x48] sm:$0xff]
    %v631 = vld [vmem:[%s3 + $0x50] sm:$0xff]
    %v632 = vld [vmem:[%s3 + $0x58] sm:$0xff]
    %v633 = vld [vmem:[%s3 + $0x60] sm:$0xff]
    %v634 = vld [vmem:[%s3 + $0x68] sm:$0xff]
    %v635 = vld [vmem:[%s3 + $0x70] sm:$0xff]
    %v636 = vld [vmem:[%s3 + $0x78] sm:$0xff]
    %v637 = vld [vmem:[%s3 + $0x80] sm:$0xff]
    %v638 = vld [vmem:[%s3 + $0x88] sm:$0xff]
    %v639 = vld [vmem:[%s3 + $0x90] sm:$0xff]
    %v640 = vld [vmem:[%s3 + $0x98] sm:$0xff]
    %v641 = vld [vmem:[%s3 + $0xa0] sm:$0xff]
    %v642 = vld [vmem:[%s3 + $0xa8] sm:$0xff]
    %v643 = vld [vmem:[%s3 + $0xb0] sm:$0xff]
    %v644 = vld [vmem:[%s3 + $0xb8] sm:$0xff]
    %v645 = vld [vmem:[%s3 + $0xc0] sm:$0xff]
    %v646 = vld [vmem:[%s4] sm:$0x1]
    %v648 = vlaneseq
    %v649 = vshrl.u32 %v648, 7
    %v650 = vsub.s32 0, %v649
    %v651 = vrot.slane %v646, %v650
    %vm653 = vcmask 588800
    %v655 = vsel %vm653, %v620, 0
    %657 = vmatprep.subr.mxu0 0.0
    %658 = vmatpush1.msra.mxu0 %v636
    %659 = vmatprep.subr.mxu0 0.0
    %660 = vmatpush1.msra.mxu0 %v635
    %661 = vmatprep.subr.mxu0 0.0
    %662 = vmatpush1.msra.mxu0 %v634
    %663 = vmatprep.subr.mxu0 0.0
    %664 = vmatpush1.msra.mxu0 %v633
    %665 = vmatprep.subr.mxu0 0.0
    %666 = vmatpush1.msra.mxu0 %v632
    %667 = vmatprep.subr.mxu0 0.0
    %668 = vmatpush1.msra.mxu0 %v631
    %669 = vmatprep.subr.mxu0 0.0
    %670 = vmatpush1.msra.mxu0 %v630
    %671 = vmatprep.subr.mxu0 0.0
    %672 = vmatpush1.msra.mxu0 %v629
    %673 = vmatprep.subr.mxu0 0.0
    %674 = vmatpush1.msra.mxu0 %v628
    %675 = vmatprep.subr.mxu0 0.0
    %676 = vmatpush1.msra.mxu0 %v627
    %677 = vmatprep.subr.mxu0 0.0
    %678 = vmatpush1.msra.mxu0 %v626
    %679 = vmatprep.subr.mxu0 0.0
    %680 = vmatpush1.msra.mxu0 %v625
    %681 = vmatprep.subr.mxu0 0.0
    %682 = vmatpush1.msra.mxu0 %v624
    %683 = vmatprep.subr.mxu0 0.0
    %684 = vmatpush1.msra.mxu0 %v623
    %685 = vmatprep.subr.mxu0 0.0
    %686 = vmatpush1.msra.mxu0 %v622
    %687 = vmatprep.subr.mxu0 0.0
    %688 = vmatpush1.msra.mxu0 %v621
    %689 = vmatprep.subr.mxu0 0.0
    %690 = vmatpush2.msra.mxu0 0.0
    %691 = vmatprep.subr.mxu0 0.0
    %692 = vmatpush2.msra.mxu0 0.0
    %693 = vmatprep.subr.mxu0 0.0
    %694 = vmatpush2.msra.mxu0 0.0
    %695 = vmatprep.subr.mxu0 0.0
    %696 = vmatpush2.msra.mxu0 0.0
    %697 = vmatprep.subr.mxu0 0.0
    %698 = vmatpush2.msra.mxu0 0.0
    %699 = vmatprep.subr.mxu0 0.0
    %700 = vmatpush2.msra.mxu0 0.0
    %701 = vmatprep.subr.mxu0 0.0
    %702 = vmatpush2.msra.mxu0 0.0
    %703 = vmatprep.subr.mxu0 0.0
    %704 = vmatpush2.msra.mxu0 %v645
    %705 = vmatprep.subr.mxu0 0.0
    %706 = vmatpush2.msra.mxu0 %v644
    %707 = vmatprep.subr.mxu0 0.0
    %708 = vmatpush2.msra.mxu0 %v643
    %709 = vmatprep.subr.mxu0 0.0
    %710 = vmatpush2.msra.mxu0 %v642
    %711 = vmatprep.subr.mxu0 0.0
    %712 = vmatpush2.msra.mxu0 %v641
    %713 = vmatprep.subr.mxu0 0.0
    %714 = vmatpush2.msra.mxu0 %v640
    %715 = vmatprep.subr.mxu0 0.0
    %716 = vmatpush2.msra.mxu0 %v639
    %717 = vmatprep.subr.mxu0 0.0
    %718 = vmatpush2.msra.mxu0 %v638
    %719 = vmatprep.subr.mxu0 0.0
    %720 = vmatpush2.msra.mxu0 %v637
    %721 = vmatprep.mubr.f32.mxu0 %v655
    %722 = vmatmul.mubr.f32.gmra.mxu0 %v619
    %v723 = vpop.f32.mrf.mxu0
    %v724 = vadd.f32 %v651, %v723
    %v725 = vpop.f32.mrf.mxu0
    %726 = vdwg.mxu0
    %v727 = vxor.u32 %v724, 2147483648
    %v728 = vmul.f32 %v727, 1.442695
    %v729 = vpow.pop %v728
    %v730 = vadd.f32 %v729, 1.0
    %v731 = vrcp.pop %v730
    %v732 = vmul.f32 1.0, %v731
    %733 = vst [vmem:[#allocation2] sm:$0x3] %v732
    // Predicated region
    $region22: #{musicnn_forward.7} parent=1 // pred_check
      _
    $region23: #{musicnn_forward.7} parent=1 // pred_check_branch
      %735 = sbr.rel (0) target = $region25
    $region24: #{musicnn_forward.7} parent=1 // pred_region
      %s737 = ssub.s32 32, 32
      %738 = vsyncadd [#allocation3], %s737
      %s740 = sshll.u32 [#allocation2], 4
      %s741 = int_to_ptr.vmem [resolvable:$true] %s740
      %743 = dma.vmem_to_hbm [thread:$0]  %s741, 32, %s5, [#allocation3]
    $region25: #{musicnn_forward.7} parent=1 // pred_fallthru
      _
    // Predicated region
    $region26: #{musicnn_forward.7} parent=1 // pred_check
      _
    $region27: #{musicnn_forward.7} parent=1 // pred_check_branch
      %745 = sbr.rel (0) target = $region29
    $region28: #{musicnn_forward.7} parent=1 // pred_region
      %746 = dma.done [#allocation3], 32
    $region29: #{musicnn_forward.7} parent=1 // pred_fallthru
      _
    %747 = vsyncpa [#allocation3], 1

// kernel: musicnn_forward.6
$region0: #{musicnn_forward.6}
  #allocation0 [shape = 'u32[]', space=smem, size = 0x4, offset = 0x4, fixed_abs, tag = 'smem constant byte address 0x4 - core index']
  #allocation1 [shape = 'u32[144,128]{1,0:T(1,128)}', space=vmem, size = 0x12000, scoped, tag = 'internal scratch']
  %s0 = inlined_call_operand.vmem [shape: f32[2,32,128], index: 0, kind: input, shape index: {}]
  %s1 = inlined_call_operand.vmem [shape: bf16[896,128], index: 1, kind: input, shape index: {}]
  %s2 = inlined_call_operand.vmem [shape: f32[1,128], index: 2, kind: input, shape index: {}]
  %s3 = inlined_call_operand.vmem [shape: f32[1,128], index: 3, kind: input, shape index: {}]
  %s4 = inlined_call_operand.vmem [shape: bf16[896,128], index: 4, kind: input, shape index: {}]
  %s5 = inlined_call_operand.vmem [shape: f32[1,128], index: 5, kind: input, shape index: {}]
  %s6 = inlined_call_operand.vmem [shape: f32[1,128], index: 6, kind: input, shape index: {}]
  %s7 = inlined_call_operand.vmem [shape: f32[1,128], index: 7, kind: input, shape index: {}]
  %s8 = inlined_call_operand.vmem [shape: bf16[896,128], index: 8, kind: input, shape index: {}]
  %s9 = inlined_call_operand.vmem [shape: f32[1,128], index: 9, kind: input, shape index: {}]
  %s10 = inlined_call_operand.vmem [shape: f32[2,8,128], index: 10, kind: output, shape index: {}]
  %s11 = sld [smem:[#allocation0]]
  $region73: #{musicnn_forward.6} parent=0
    _
  %s13 = ssub.s32 1, %s11
  %s14 = scalar_select 0, %s13, %s11
  loop: start=0, step=1, limit=4
  $region2: #{musicnn_forward.6} parent=0 // loop_pre_header
    _
  $region3: #{musicnn_forward.6} parent=0 // loop_header
    %s16 = sphi 0, %s20
    %p17 = scmp.ge.s32.totalorder %s16, 4
    %s26 = sphi 0, %s28
    %s29 = sphi 0, %s26
    %s30 = sphi 0, %s29
    %s46 = sphi 0, %s30
    %s50 = sphi 0, %s50
    %s52 = sphi 0, %s50
    %s53 = sphi 0, %s52
    %s67 = sphi 0, %s53
    %s71 = sphi 0, %s71
    %s73 = sphi 0, %s71
    %s74 = sphi 0, %s73
    %s88 = sphi 0, %s74
    %s92 = sphi 0, %s92
    %s94 = sphi 0, %s92
    %s95 = sphi 0, %s94
    %s109 = sphi 0, %s95
    %s113 = sphi 0, %s113
    %s115 = sphi 0, %s113
    %s116 = sphi 0, %s115
    %s130 = sphi 0, %s116
    %s134 = sphi 0, %s134
    %s136 = sphi 0, %s134
    %s137 = sphi 0, %s136
    %s151 = sphi 0, %s137
    %s155 = sphi 0, %s155
    %s157 = sphi 0, %s155
    %s158 = sphi 0, %s157
    %s172 = sphi 0, %s158
    %s176 = sphi 0, %s176
    %s178 = sphi 0, %s176
    %s179 = sphi 0, %s178
    %s193 = sphi 0, %s179
    %s197 = sphi 0, %s197
    %s199 = sphi 0, %s197
    %s200 = sphi 0, %s199
    %s214 = sphi 0, %s200
    %s218 = sphi 0, %s218
    %s220 = sphi 0, %s218
    %s221 = sphi 0, %s220
    %s235 = sphi 0, %s221
    %s241 = sphi 0, %s243
    %s244 = sphi 0, %s241
    %s245 = sphi 0, %s244
    %s261 = sphi 0, %s245
  $region4: #{musicnn_forward.6} parent=0 // loop_header_branch
    %19 = sbr.rel (%p17) target = $region8
  $region5: #{musicnn_forward.6} parent=0 // loop_body
    %s21 = ssub.s32 %s16, 1
    %s22 = ssub.s32 %s16, 2
    %s23 = sadd.s32 %s16, 1
    %s24 = ssub.s32 %s16, %s23
    %p25 = scmp.eq.s32.totalorder %s24, 0
    %s27 = sadd.s32 %s26, 1
    %s28 = scalar_select %p25, %s26, %s27
    %p31 = pneg %p25
    %p32 = scmp.eq.s32.totalorder %s16, 1
    %p33 = por %p31, %p32
    %p34 = scmp.ne.s32.totalorder %s26, %s29
    %p35 = scmp.eq.s32.totalorder %s16, 0
    %p36 = por %p34, %p35
    %p37 = scmp.ne.s32.totalorder %s26, %s29
    %p38 = scmp.eq.s32.totalorder %s21, 1
    %p39 = por %p37, %p38
    %p40 = scmp.ne.s32.totalorder %s29, %s30
    %p41 = scmp.eq.s32.totalorder %s21, 0
    %p42 = por %p40, %p41
    %p43 = scmp.ne.s32.totalorder %s29, %s30
    %p44 = scmp.eq.s32.totalorder %s22, 1
    %p45 = por %p43, %p44
    %p47 = scmp.ne.s32.totalorder %s30, %s46
    %p48 = scmp.eq.s32.totalorder %s22, 0
    %p49 = por %p47, %p48
    %s51 = sadd.s32 %s50, 1
    %p54 = scmp.eq.s32.totalorder %s16, 1
    %p55 = scmp.ne.s32.totalorder %s50, %s52
    %p56 = scmp.eq.s32.totalorder %s16, 0
    %p57 = por %p55, %p56
    %p58 = scmp.ne.s32.totalorder %s50, %s52
    %p59 = scmp.eq.s32.totalorder %s21, 1
    %p60 = por %p58, %p59
    %p61 = scmp.ne.s32.totalorder %s52, %s53
    %p62 = scmp.eq.s32.totalorder %s21, 0
    %p63 = por %p61, %p62
    %p64 = scmp.ne.s32.totalorder %s52, %s53
    %p65 = scmp.eq.s32.totalorder %s22, 1
    %p66 = por %p64, %p65
    %p68 = scmp.ne.s32.totalorder %s53, %s67
    %p69 = scmp.eq.s32.totalorder %s22, 0
    %p70 = por %p68, %p69
    %s72 = sadd.s32 %s71, 1
    %p75 = scmp.eq.s32.totalorder %s16, 1
    %p76 = scmp.ne.s32.totalorder %s71, %s73
    %p77 = scmp.eq.s32.totalorder %s16, 0
    %p78 = por %p76, %p77
    %p79 = scmp.ne.s32.totalorder %s71, %s73
    %p80 = scmp.eq.s32.totalorder %s21, 1
    %p81 = por %p79, %p80
    %p82 = scmp.ne.s32.totalorder %s73, %s74
    %p83 = scmp.eq.s32.totalorder %s21, 0
    %p84 = por %p82, %p83
    %p85 = scmp.ne.s32.totalorder %s73, %s74
    %p86 = scmp.eq.s32.totalorder %s22, 1
    %p87 = por %p85, %p86
    %p89 = scmp.ne.s32.totalorder %s74, %s88
    %p90 = scmp.eq.s32.totalorder %s22, 0
    %p91 = por %p89, %p90
    %s93 = sadd.s32 %s92, 1
    %p96 = scmp.eq.s32.totalorder %s16, 1
    %p97 = scmp.ne.s32.totalorder %s92, %s94
    %p98 = scmp.eq.s32.totalorder %s16, 0
    %p99 = por %p97, %p98
    %p100 = scmp.ne.s32.totalorder %s92, %s94
    %p101 = scmp.eq.s32.totalorder %s21, 1
    %p102 = por %p100, %p101
    %p103 = scmp.ne.s32.totalorder %s94, %s95
    %p104 = scmp.eq.s32.totalorder %s21, 0
    %p105 = por %p103, %p104
    %p106 = scmp.ne.s32.totalorder %s94, %s95
    %p107 = scmp.eq.s32.totalorder %s22, 1
    %p108 = por %p106, %p107
    %p110 = scmp.ne.s32.totalorder %s95, %s109
    %p111 = scmp.eq.s32.totalorder %s22, 0
    %p112 = por %p110, %p111
    %s114 = sadd.s32 %s113, 1
    %p117 = scmp.eq.s32.totalorder %s16, 1
    %p118 = scmp.ne.s32.totalorder %s113, %s115
    %p119 = scmp.eq.s32.totalorder %s16, 0
    %p120 = por %p118, %p119
    %p121 = scmp.ne.s32.totalorder %s113, %s115
    %p122 = scmp.eq.s32.totalorder %s21, 1
    %p123 = por %p121, %p122
    %p124 = scmp.ne.s32.totalorder %s115, %s116
    %p125 = scmp.eq.s32.totalorder %s21, 0
    %p126 = por %p124, %p125
    %p127 = scmp.ne.s32.totalorder %s115, %s116
    %p128 = scmp.eq.s32.totalorder %s22, 1
    %p129 = por %p127, %p128
    %p131 = scmp.ne.s32.totalorder %s116, %s130
    %p132 = scmp.eq.s32.totalorder %s22, 0
    %p133 = por %p131, %p132
    %s135 = sadd.s32 %s134, 1
    %p138 = scmp.eq.s32.totalorder %s16, 1
    %p139 = scmp.ne.s32.totalorder %s134, %s136
    %p140 = scmp.eq.s32.totalorder %s16, 0
    %p141 = por %p139, %p140
    %p142 = scmp.ne.s32.totalorder %s134, %s136
    %p143 = scmp.eq.s32.totalorder %s21, 1
    %p144 = por %p142, %p143
    %p145 = scmp.ne.s32.totalorder %s136, %s137
    %p146 = scmp.eq.s32.totalorder %s21, 0
    %p147 = por %p145, %p146
    %p148 = scmp.ne.s32.totalorder %s136, %s137
    %p149 = scmp.eq.s32.totalorder %s22, 1
    %p150 = por %p148, %p149
    %p152 = scmp.ne.s32.totalorder %s137, %s151
    %p153 = scmp.eq.s32.totalorder %s22, 0
    %p154 = por %p152, %p153
    %s156 = sadd.s32 %s155, 1
    %p159 = scmp.eq.s32.totalorder %s16, 1
    %p160 = scmp.ne.s32.totalorder %s155, %s157
    %p161 = scmp.eq.s32.totalorder %s16, 0
    %p162 = por %p160, %p161
    %p163 = scmp.ne.s32.totalorder %s155, %s157
    %p164 = scmp.eq.s32.totalorder %s21, 1
    %p165 = por %p163, %p164
    %p166 = scmp.ne.s32.totalorder %s157, %s158
    %p167 = scmp.eq.s32.totalorder %s21, 0
    %p168 = por %p166, %p167
    %p169 = scmp.ne.s32.totalorder %s157, %s158
    %p170 = scmp.eq.s32.totalorder %s22, 1
    %p171 = por %p169, %p170
    %p173 = scmp.ne.s32.totalorder %s158, %s172
    %p174 = scmp.eq.s32.totalorder %s22, 0
    %p175 = por %p173, %p174
    %s177 = sadd.s32 %s176, 1
    %p180 = scmp.eq.s32.totalorder %s16, 1
    %p181 = scmp.ne.s32.totalorder %s176, %s178
    %p182 = scmp.eq.s32.totalorder %s16, 0
    %p183 = por %p181, %p182
    %p184 = scmp.ne.s32.totalorder %s176, %s178
    %p185 = scmp.eq.s32.totalorder %s21, 1
    %p186 = por %p184, %p185
    %p187 = scmp.ne.s32.totalorder %s178, %s179
    %p188 = scmp.eq.s32.totalorder %s21, 0
    %p189 = por %p187, %p188
    %p190 = scmp.ne.s32.totalorder %s178, %s179
    %p191 = scmp.eq.s32.totalorder %s22, 1
    %p192 = por %p190, %p191
    %p194 = scmp.ne.s32.totalorder %s179, %s193
    %p195 = scmp.eq.s32.totalorder %s22, 0
    %p196 = por %p194, %p195
    %s198 = sadd.s32 %s197, 1
    %p201 = scmp.eq.s32.totalorder %s16, 1
    %p202 = scmp.ne.s32.totalorder %s197, %s199
    %p203 = scmp.eq.s32.totalorder %s16, 0
    %p204 = por %p202, %p203
    %p205 = scmp.ne.s32.totalorder %s197, %s199
    %p206 = scmp.eq.s32.totalorder %s21, 1
    %p207 = por %p205, %p206
    %p208 = scmp.ne.s32.totalorder %s199, %s200
    %p209 = scmp.eq.s32.totalorder %s21, 0
    %p210 = por %p208, %p209
    %p211 = scmp.ne.s32.totalorder %s199, %s200
    %p212 = scmp.eq.s32.totalorder %s22, 1
    %p213 = por %p211, %p212
    %p215 = scmp.ne.s32.totalorder %s200, %s214
    %p216 = scmp.eq.s32.totalorder %s22, 0
    %p217 = por %p215, %p216
    %s219 = sadd.s32 %s218, 1
    %p222 = scmp.eq.s32.totalorder %s16, 1
    %p223 = scmp.ne.s32.totalorder %s218, %s220
    %p224 = scmp.eq.s32.totalorder %s16, 0
    %p225 = por %p223, %p224
    %p226 = scmp.ne.s32.totalorder %s218, %s220
    %p227 = scmp.eq.s32.totalorder %s21, 1
    %p228 = por %p226, %p227
    %p229 = scmp.ne.s32.totalorder %s220, %s221
    %p230 = scmp.eq.s32.totalorder %s21, 0
    %p231 = por %p229, %p230
    %p232 = scmp.ne.s32.totalorder %s220, %s221
    %p233 = scmp.eq.s32.totalorder %s22, 1
    %p234 = por %p232, %p233
    %p236 = scmp.ne.s32.totalorder %s221, %s235
    %p237 = scmp.eq.s32.totalorder %s22, 0
    %p238 = por %p236, %p237
    %s239 = ssub.s32 %s16, %s23
    %p240 = scmp.eq.s32.totalorder %s239, 0
    %s242 = sadd.s32 %s241, 1
    %s243 = scalar_select %p240, %s241, %s242
    %p246 = pneg %p240
    %p247 = scmp.eq.s32.totalorder %s16, 1
    %p248 = por %p246, %p247
    %p249 = scmp.ne.s32.totalorder %s241, %s244
    %p250 = scmp.eq.s32.totalorder %s16, 0
    %p251 = por %p249, %p250
    %p252 = scmp.ne.s32.totalorder %s241, %s244
    %p253 = scmp.eq.s32.totalorder %s21, 1
    %p254 = por %p252, %p253
    %p255 = scmp.ne.s32.totalorder %s244, %s245
    %p256 = scmp.eq.s32.totalorder %s21, 0
    %p257 = por %p255, %p256
    %p258 = scmp.ne.s32.totalorder %s244, %s245
    %p259 = scmp.eq.s32.totalorder %s22, 1
    %p260 = por %p258, %p259
    %p262 = scmp.ne.s32.totalorder %s245, %s261
    %p263 = scmp.eq.s32.totalorder %s22, 0
    %p264 = por %p262, %p263
    %p265 = scmp.le.s32.totalorder 1, %s16
    %p266 = scmp.lt.s32.totalorder %s16, 3
    %p267 = pnand %p265, %p266
    %p268 = pneg %p267
    // Predicated region
    $region9: #{musicnn_forward.6} parent=5 // pred_check
      _
    $region10: #{musicnn_forward.6} parent=5 // pred_check_branch
      %270 = sbr.rel (%p267) target = $region12
    $region11: #{musicnn_forward.6} parent=5 // pred_region
      %s271 = ssub.s32 %s16, 1
      // Predicated region
      $region13: #{musicnn_forward.6} parent=11 // pred_check
        %p272 = pneg %p63
      $region14: #{musicnn_forward.6} parent=11 // pred_check_branch
        %274 = sbr.rel (%p272) target = $region16
      $region15: #{musicnn_forward.6} parent=11 // pred_region
        _
      $region16: #{musicnn_forward.6} parent=11 // pred_fallthru
        _
      // Predicated region
      $region17: #{musicnn_forward.6} parent=11 // pred_check
        %p275 = pneg %p84
      $region18: #{musicnn_forward.6} parent=11 // pred_check_branch
        %277 = sbr.rel (%p275) target = $region20
      $region19: #{musicnn_forward.6} parent=11 // pred_region
        _
      $region20: #{musicnn_forward.6} parent=11 // pred_fallthru
        _
      // Predicated region
      $region21: #{musicnn_forward.6} parent=11 // pred_check
        %p278 = pneg %p105
      $region22: #{musicnn_forward.6} parent=11 // pred_check_branch
        %280 = sbr.rel (%p278) target = $region24
      $region23: #{musicnn_forward.6} parent=11 // pred_region
        _
      $region24: #{musicnn_forward.6} parent=11 // pred_fallthru
        _
      // Predicated region
      $region25: #{musicnn_forward.6} parent=11 // pred_check
        %p281 = pneg %p126
      $region26: #{musicnn_forward.6} parent=11 // pred_check_branch
        %283 = sbr.rel (%p281) target = $region28
      $region27: #{musicnn_forward.6} parent=11 // pred_region
        _
      $region28: #{musicnn_forward.6} parent=11 // pred_fallthru
        _
      // Predicated region
      $region29: #{musicnn_forward.6} parent=11 // pred_check
        %p284 = pneg %p147
      $region30: #{musicnn_forward.6} parent=11 // pred_check_branch
        %286 = sbr.rel (%p284) target = $region32
      $region31: #{musicnn_forward.6} parent=11 // pred_region
        _
      $region32: #{musicnn_forward.6} parent=11 // pred_fallthru
        _
      // Predicated region
      $region33: #{musicnn_forward.6} parent=11 // pred_check
        %p287 = pneg %p168
      $region34: #{musicnn_forward.6} parent=11 // pred_check_branch
        %289 = sbr.rel (%p287) target = $region36
      $region35: #{musicnn_forward.6} parent=11 // pred_region
        _
      $region36: #{musicnn_forward.6} parent=11 // pred_fallthru
        _
      // Predicated region
      $region37: #{musicnn_forward.6} parent=11 // pred_check
        %p290 = pneg %p189
      $region38: #{musicnn_forward.6} parent=11 // pred_check_branch
        %292 = sbr.rel (%p290) target = $region40
      $region39: #{musicnn_forward.6} parent=11 // pred_region
        _
      $region40: #{musicnn_forward.6} parent=11 // pred_fallthru
        _
      // Predicated region
      $region41: #{musicnn_forward.6} parent=11 // pred_check
        %p293 = pneg %p210
      $region42: #{musicnn_forward.6} parent=11 // pred_check_branch
        %295 = sbr.rel (%p293) target = $region44
      $region43: #{musicnn_forward.6} parent=11 // pred_region
        _
      $region44: #{musicnn_forward.6} parent=11 // pred_fallthru
        _
      // Predicated region
      $region45: #{musicnn_forward.6} parent=11 // pred_check
        %p296 = pneg %p231
      $region46: #{musicnn_forward.6} parent=11 // pred_check_branch
        %298 = sbr.rel (%p296) target = $region48
      $region47: #{musicnn_forward.6} parent=11 // pred_region
        _
      $region48: #{musicnn_forward.6} parent=11 // pred_fallthru
        _
    $region12: #{musicnn_forward.6} parent=5 // pred_fallthru
      _
    %p299 = scmp.lt.s32.totalorder %s16, 2
    // Predicated region
    $region49: #{musicnn_forward.6} parent=5 // pred_check
      %p300 = pneg %p299
    $region50: #{musicnn_forward.6} parent=5 // pred_check_branch
      %302 = sbr.rel (%p300) target = $region52
    $region51: #{musicnn_forward.6} parent=5 // pred_region
      // Predicated region
      $region53: #{musicnn_forward.6} parent=51 // pred_check
        %p303 = pneg %p36
      $region54: #{musicnn_forward.6} parent=51 // pred_check_branch
        %305 = sbr.rel (%p303) target = $region56
      $region55: #{musicnn_forward.6} parent=51 // pred_region
        %p306 = scmp.lt.s32.totalorder %s16, 1
        %s307 = scalar_select %p306, %s16, 1
        %s308 = smul.addr %s307, 4
        %s309 = smul.addr %s308, 8
        %s310 = scalar_lea.vmem %s0, %s309
      $region56: #{musicnn_forward.6} parent=51 // pred_fallthru
        _
    $region52: #{musicnn_forward.6} parent=5 // pred_fallthru
      _
    %p311 = scmp.le.s32.totalorder 1, %s16
    %p312 = scmp.lt.s32.totalorder %s16, 3
    %p313 = pnand %p311, %p312
    %p314 = pneg %p313
    // Predicated region
    $region57: #{musicnn_forward.6} parent=5 // pred_check
      _
    $region58: #{musicnn_forward.6} parent=5 // pred_check_branch
      %316 = sbr.rel (%p313) target = $region60
    $region59: #{musicnn_forward.6} parent=5 // pred_region
      %s317 = ssub.s32 %s16, 1
      %p318 = scmp.lt.s32.totalorder %s21, 1
      %s319 = scalar_select %p318, %s21, 1
      %s320 = smul.addr %s319, 4
      %s321 = smul.addr %s320, 8
      %s322 = scalar_lea.vmem %s0, %s321
      %p323 = pneg %p42
      %p324 = pneg %p39
      %p325 = pneg %p63
      %p326 = pneg %p60
      %p327 = pneg %p84
      %p328 = pneg %p81
      %p329 = pneg %p105
      %p330 = pneg %p102
      %p331 = pneg %p126
      %p332 = pneg %p123
      %p333 = pneg %p147
      %p334 = pneg %p144
      %p335 = pneg %p168
      %p336 = pneg %p165
      %p337 = pneg %p189
      %p338 = pneg %p186
      %p339 = pneg %p210
      %p340 = pneg %p207
      %p341 = pneg %p231
      %p342 = pneg %p228
      %p343 = pneg %p257
      %p344 = pneg %p254
      %p345 = scmp.lt.s32.totalorder %s21, 1
      %s346 = scalar_select %p345, %s21, 1
      %s347 = smul.addr %s346, 8
      %s348 = scalar_lea.vmem %s10, %s347
      %p349 = scmp.lt.s32.totalorder %s21, 1
      %s350 = scalar_select %p349, %s21, 1
      %s351 = smul.addr %s350, 4
      %s352 = smul.addr %s351, 8
      %s353 = scalar_lea.vmem %s0, %s352
      %p354 = scmp.lt.s32.totalorder %s21, 1
      %s355 = scalar_select %p354, %s21, 1
      %s356 = smul.addr %s355, 8
      %s357 = scalar_lea.vmem %s10, %s356
      %v359 = vlaneseq
      %v360 = vshrl.u32 %v359, 7
      %v361 = vadd.s32 %v360, 8
      %v362 = vadd.s32 %v360, 16
      %v363 = vadd.s32 %v360, 24
      %vm364 = vcmp.ge.s32.totalorder %v360, 3
      %vm365 = vcmp.ge.s32.totalorder %v361, 3
      %vm366 = vcmp.ge.s32.totalorder %v362, 3
      %vm367 = vcmp.ge.s32.totalorder %v363, 3
      %vm368 = vcmp.lt.s32.totalorder %v360, 26
      %vm369 = vcmp.lt.s32.totalorder %v361, 26
      %vm370 = vcmp.lt.s32.totalorder %v362, 26
      %vm371 = vcmp.lt.s32.totalorder %v363, 26
      %vm372 = vmand %vm364, %vm368
      %vm373 = vmand %vm365, %vm369
      %vm374 = vmand %vm366, %vm370
      %vm375 = vmand %vm367, %vm371
      %v376 = vld [vmem:[%s353] sm:$0xff]
      %v377 = vld [vmem:[%s353 + $0x8] sm:$0xff]
      %v378 = vld [vmem:[%s353 + $0x10] sm:$0xff]
      %v379 = vld [vmem:[%s353 + $0x18] sm:$0xff]
      %v380 = vsel %vm372, 1, 0
      %v381 = vsel %vm373, 1, 0
      %v382 = vsel %vm374, 1, 0
      %v383 = vsel %vm375, 1, 0
      %vm384 = vcmp.eq.s32.totalorder %v380, 1
      %vm385 = vcmp.eq.s32.totalorder %v381, 1
      %vm386 = vcmp.eq.s32.totalorder %v382, 1
      %vm387 = vcmp.eq.s32.totalorder %v383, 1
      %v388 = vsel %vm384, %v376, -1e+30
      %v389 = vsel %vm385, %v377, -1e+30
      %v390 = vsel %vm386, %v378, -1e+30
      %v391 = vsel %vm387, %v379, -1e+30
      %v392 = vmax.f32 %v388, %v389
      %v393 = vmax.f32 %v390, %v391
      %v394 = vmax.f32 %v392, %v393
      %v395 = vrot.slane %v394, 4
      %v396 = vmax.f32 %v394, %v395
      %v397 = vrot.slane %v396, 2
      %v398 = vmax.f32 %v396, %v397
      %v399 = vrot.slane %v398, 1
      %v400 = vmax.f32 %v398, %v399
      %401 = vst [vmem:[%s357] sm:$0x1] %v400
      %v402 = vadd.f32 %v376, %v377
      %v403 = vadd.f32 %v402, %v378
      %v404 = vadd.f32 %v403, %v379
      %v405 = vrot.slane %v404, 4
      %v406 = vadd.f32 %v404, %v405
      %v407 = vrot.slane %v406, 2
      %v408 = vadd.f32 %v406, %v407
      %v409 = vrot.slane %v408, 1
      %v410 = vadd.f32 %v408, %v409
      %v411 = vmul.f32 %v410, 0.04347826
      %412 = vst [vmem:[%s357 + $0x4] sm:$0x1] %v411
      %v413 = vld [vmem:[%s2] sm:$0x1]
      %v414 = vrot.slane %v376, 5
      %v415 = vrot.slane %v377, 5
      %v416 = vrot.slane %v378, 5
      %v417 = vrot.slane %v379, 5
      %vm418 = vcmp.lt.s32.totalorder %v360, 3
      %v419 = vsel %vm418, %v416, %v417
      %v420 = vsel %vm418, %v415, %v416
      %v421 = vsel %vm418, %v414, %v415
      %v422 = vsel %vm418, %v417, %v414
      %v423 = vrot.slane %v376, 6
      %v424 = vrot.slane %v377, 6
      %v425 = vrot.slane %v378, 6
      %v426 = vrot.slane %v379, 6
      %vm427 = vcmp.lt.s32.totalorder %v360, 2
      %v428 = vsel %vm427, %v425, %v426
      %v429 = vsel %vm427, %v424, %v425
      %v430 = vsel %vm427, %v423, %v424
      %v431 = vsel %vm427, %v426, %v423
      %v432 = vrot.slane %v376, 7
      %v433 = vrot.slane %v377, 7
      %v434 = vrot.slane %v378, 7
      %v435 = vrot.slane %v379, 7
      %vm436 = vcmp.lt.s32.totalorder %v360, 1
      %v437 = vsel %vm436, %v434, %v435
      %v438 = vsel %vm436, %v433, %v434
      %v439 = vsel %vm436, %v432, %v433
      %v440 = vsel %vm436, %v435, %v432
      %v441 = vrot.slane %v376, 1
      %v442 = vrot.slane %v377, 1
      %v443 = vrot.slane %v378, 1
      %v444 = vrot.slane %v379, 1
      %vm445 = vcmp.lt.s32.totalorder %v360, 7
      %v446 = vsel %vm445, %v443, %v444
      %v447 = vsel %vm445, %v442, %v443
      %v448 = vsel %vm445, %v441, %v442
      %v449 = vsel %vm445, %v444, %v441
      %v450 = vrot.slane %v376, 2
      %v451 = vrot.slane %v377, 2
      %v452 = vrot.slane %v378, 2
      %v453 = vrot.slane %v379, 2
      %vm454 = vcmp.lt.s32.totalorder %v360, 6
      %v455 = vsel %vm454, %v452, %v453
      %v456 = vsel %vm454, %v451, %v452
      %v457 = vsel %vm454, %v450, %v451
      %v458 = vsel %vm454, %v453, %v450
      %v459 = vrot.slane %v376, 3
      %v460 = vrot.slane %v377, 3
      %v461 = vrot.slane %v378, 3
      %v462 = vrot.slane %v379, 3
      %vm463 = vcmp.lt.s32.totalorder %v360, 5
      %v464 = vsel %vm463, %v461, %v462
      %v465 = vsel %vm463, %v460, %v461
      %v466 = vsel %vm463, %v459, %v460
      %v467 = vsel %vm463, %v462, %v459
      %v468 = vpack.c.bf16 %v421, %v422
      %v469 = vpack.c.bf16 %v430, %v431
      %v470 = vpack.c.bf16 %v439, %v440
      %v471 = vpack.c.bf16 %v377, %v376
      %v472 = vpack.c.bf16 %v447, %v448
      %v473 = vpack.c.bf16 %v456, %v457
      %v474 = vpack.c.bf16 %v465, %v466
      %v475 = vpack.c.bf16 %v419, %v420
      %v476 = vpack.c.bf16 %v428, %v429
      %v477 = vpack.c.bf16 %v437, %v438
      %v478 = vpack.c.bf16 %v379, %v378
      %v479 = vpack.c.bf16 %v449, %v446
      %v480 = vpack.c.bf16 %v458, %v455
      %v481 = vpack.c.bf16 %v467, %v464
      %v482 = vld [vmem:[%s1] sm:$0xf]
      %v483 = vld [vmem:[%s1 + $0x4] sm:$0xf]
      %v484 = vld [vmem:[%s1 + $0x8] sm:$0xf]
      %v485 = vld [vmem:[%s1 + $0xc] sm:$0xf]
      %v486 = vld [vmem:[%s1 + $0x10] sm:$0xf]
      %v487 = vld [vmem:[%s1 + $0x14] sm:$0xf]
      %v488 = vld [vmem:[%s1 + $0x18] sm:$0xf]
      %v489 = vld [vmem:[%s1 + $0x1c] sm:$0xf]
      %v490 = vld [vmem:[%s1 + $0x20] sm:$0xf]
      %v491 = vld [vmem:[%s1 + $0x24] sm:$0xf]
      %v492 = vld [vmem:[%s1 + $0x28] sm:$0xf]
      %v493 = vld [vmem:[%s1 + $0x2c] sm:$0xf]
      %v494 = vld [vmem:[%s1 + $0x30] sm:$0xf]
      %v495 = vld [vmem:[%s1 + $0x34] sm:$0xf]
      %v496 = vld [vmem:[%s1 + $0x38] sm:$0xf]
      %v497 = vld [vmem:[%s1 + $0x3c] sm:$0xf]
      %v498 = vld [vmem:[%s1 + $0x40] sm:$0xf]
      %v499 = vld [vmem:[%s1 + $0x44] sm:$0xf]
      %v500 = vld [vmem:[%s1 + $0x48] sm:$0xf]
      %v501 = vld [vmem:[%s1 + $0x4c] sm:$0xf]
      %v502 = vld [vmem:[%s1 + $0x50] sm:$0xf]
      %v503 = vld [vmem:[%s1 + $0x54] sm:$0xf]
      %v504 = vld [vmem:[%s1 + $0x58] sm:$0xf]
      %v505 = vld [vmem:[%s1 + $0x5c] sm:$0xf]
      %v506 = vld [vmem:[%s1 + $0x60] sm:$0xf]
      %v507 = vld [vmem:[%s1 + $0x64] sm:$0xf]
      %v508 = vld [vmem:[%s1 + $0x68] sm:$0xf]
      %v509 = vld [vmem:[%s1 + $0x6c] sm:$0xf]
      %v510 = vld [vmem:[%s1 + $0x70] sm:$0xf]
      %v511 = vld [vmem:[%s1 + $0x74] sm:$0xf]
      %v512 = vld [vmem:[%s1 + $0x78] sm:$0xf]
      %v513 = vld [vmem:[%s1 + $0x7c] sm:$0xf]
      %v514 = vld [vmem:[%s1 + $0x80] sm:$0xf]
      %v515 = vld [vmem:[%s1 + $0x84] sm:$0xf]
      %v516 = vld [vmem:[%s1 + $0x88] sm:$0xf]
      %v517 = vld [vmem:[%s1 + $0x8c] sm:$0xf]
      %v518 = vld [vmem:[%s1 + $0x90] sm:$0xf]
      %v519 = vld [vmem:[%s1 + $0x94] sm:$0xf]
      %v520 = vld [vmem:[%s1 + $0x98] sm:$0xf]
      %v521 = vld [vmem:[%s1 + $0x9c] sm:$0xf]
      %v522 = vld [vmem:[%s1 + $0xa0] sm:$0xf]
      %v523 = vld [vmem:[%s1 + $0xa4] sm:$0xf]
      %v524 = vld [vmem:[%s1 + $0xa8] sm:$0xf]
      %v525 = vld [vmem:[%s1 + $0xac] sm:$0xf]
      %v526 = vld [vmem:[%s1 + $0xb0] sm:$0xf]
      %v527 = vld [vmem:[%s1 + $0xb4] sm:$0xf]
      %v528 = vld [vmem:[%s1 + $0xb8] sm:$0xf]
      %v529 = vld [vmem:[%s1 + $0xbc] sm:$0xf]
      %v530 = vld [vmem:[%s1 + $0xc0] sm:$0xf]
      %v531 = vld [vmem:[%s1 + $0xc4] sm:$0xf]
      %v532 = vld [vmem:[%s1 + $0xc8] sm:$0xf]
      %v533 = vld [vmem:[%s1 + $0xcc] sm:$0xf]
      %v534 = vld [vmem:[%s1 + $0xd0] sm:$0xf]
      %v535 = vld [vmem:[%s1 + $0xd4] sm:$0xf]
      %v536 = vld [vmem:[%s1 + $0xd8] sm:$0xf]
      %v537 = vld [vmem:[%s1 + $0xdc] sm:$0xf]
      %v538 = vld [vmem:[%s1 + $0xe0] sm:$0xf]
      %v539 = vld [vmem:[%s1 + $0xe4] sm:$0xf]
      %v540 = vld [vmem:[%s1 + $0xe8] sm:$0xf]
      %v541 = vld [vmem:[%s1 + $0xec] sm:$0xf]
      %v542 = vld [vmem:[%s1 + $0xf0] sm:$0xf]
      %v543 = vld [vmem:[%s1 + $0xf4] sm:$0xf]
      %v544 = vld [vmem:[%s1 + $0xf8] sm:$0xf]
      %v545 = vld [vmem:[%s1 + $0xfc] sm:$0xf]
      %v546 = vld [vmem:[%s1 + $0x100] sm:$0xf]
      %v547 = vld [vmem:[%s1 + $0x104] sm:$0xf]
      %v548 = vld [vmem:[%s1 + $0x108] sm:$0xf]
      %v549 = vld [vmem:[%s1 + $0x10c] sm:$0xf]
      %v550 = vld [vmem:[%s1 + $0x110] sm:$0xf]
      %v551 = vld [vmem:[%s1 + $0x114] sm:$0xf]
      %v552 = vld [vmem:[%s1 + $0x118] sm:$0xf]
      %v553 = vld [vmem:[%s1 + $0x11c] sm:$0xf]
      %v554 = vld [vmem:[%s1 + $0x120] sm:$0xf]
      %v555 = vld [vmem:[%s1 + $0x124] sm:$0xf]
      %v556 = vld [vmem:[%s1 + $0x128] sm:$0xf]
      %v557 = vld [vmem:[%s1 + $0x12c] sm:$0xf]
      %v558 = vld [vmem:[%s1 + $0x130] sm:$0xf]
      %v559 = vld [vmem:[%s1 + $0x134] sm:$0xf]
      %v560 = vld [vmem:[%s1 + $0x138] sm:$0xf]
      %v561 = vld [vmem:[%s1 + $0x13c] sm:$0xf]
      %v562 = vld [vmem:[%s1 + $0x140] sm:$0xf]
      %v563 = vld [vmem:[%s1 + $0x144] sm:$0xf]
      %v564 = vld [vmem:[%s1 + $0x148] sm:$0xf]
      %v565 = vld [vmem:[%s1 + $0x14c] sm:$0xf]
      %v566 = vld [vmem:[%s1 + $0x150] sm:$0xf]
      %v567 = vld [vmem:[%s1 + $0x154] sm:$0xf]
      %v568 = vld [vmem:[%s1 + $0x158] sm:$0xf]
      %v569 = vld [vmem:[%s1 + $0x15c] sm:$0xf]
      %v570 = vld [vmem:[%s1 + $0x160] sm:$0xf]
      %v571 = vld [vmem:[%s1 + $0x164] sm:$0xf]
      %v572 = vld [vmem:[%s1 + $0x168] sm:$0xf]
      %v573 = vld [vmem:[%s1 + $0x16c] sm:$0xf]
      %v574 = vld [vmem:[%s1 + $0x170] sm:$0xf]
      %v575 = vld [vmem:[%s1 + $0x174] sm:$0xf]
      %v576 = vld [vmem:[%s1 + $0x178] sm:$0xf]
      %v577 = vld [vmem:[%s1 + $0x17c] sm:$0xf]
      %v578 = vld [vmem:[%s1 + $0x180] sm:$0xf]
      %v579 = vld [vmem:[%s1 + $0x184] sm:$0xf]
      %v580 = vld [vmem:[%s1 + $0x188] sm:$0xf]
      %v581 = vld [vmem:[%s1 + $0x18c] sm:$0xf]
      %v582 = vld [vmem:[%s1 + $0x190] sm:$0xf]
      %v583 = vld [vmem:[%s1 + $0x194] sm:$0xf]
      %v584 = vld [vmem:[%s1 + $0x198] sm:$0xf]
      %v585 = vld [vmem:[%s1 + $0x19c] sm:$0xf]
      %v586 = vld [vmem:[%s1 + $0x1a0] sm:$0xf]
      %v587 = vld [vmem:[%s1 + $0x1a4] sm:$0xf]
      %v588 = vld [vmem:[%s1 + $0x1a8] sm:$0xf]
      %v589 = vld [vmem:[%s1 + $0x1ac] sm:$0xf]
      %v590 = vld [vmem:[%s1 + $0x1b0] sm:$0xf]
      %v591 = vld [vmem:[%s1 + $0x1b4] sm:$0xf]
      %v592 = vld [vmem:[%s1 + $0x1b8] sm:$0xf]
      %v593 = vld [vmem:[%s1 + $0x1bc] sm:$0xf]
      %v595 = vlaneseq
      %v596 = vshrl.u32 %v595, 7
      %v597 = vsub.s32 0, %v596
      %v598 = vrot.slane %v413, %v597
      %v712 = vunpack.c.l.b16 %v482
      %v713 = vunpack.c.l.b16 %v483
      %v714 = vunpack.c.l.b16 %v484
      %v715 = vunpack.c.l.b16 %v485
      %v716 = vunpack.c.l.b16 %v486
      %v717 = vunpack.c.l.b16 %v487
      %v718 = vunpack.c.l.b16 %v488
      %v719 = vunpack.c.l.b16 %v489
      %v720 = vunpack.c.l.b16 %v490
      %v721 = vunpack.c.l.b16 %v491
      %v722 = vunpack.c.l.b16 %v492
      %v723 = vunpack.c.l.b16 %v493
      %v724 = vunpack.c.l.b16 %v494
      %v725 = vunpack.c.l.b16 %v495
      %v726 = vunpack.c.l.b16 %v496
      %v727 = vunpack.c.l.b16 %v497
      %v728 = vunpack.c.l.b16 %v498
      %v729 = vunpack.c.l.b16 %v499
      %v730 = vunpack.c.l.b16 %v500
      %v731 = vunpack.c.l.b16 %v501
      %v732 = vunpack.c.l.b16 %v502
      %v733 = vunpack.c.l.b16 %v503
      %v734 = vunpack.c.l.b16 %v504
      %v735 = vunpack.c.l.b16 %v505
      %v736 = vunpack.c.l.b16 %v506
      %v737 = vunpack.c.l.b16 %v507
      %v738 = vunpack.c.l.b16 %v508
      %v739 = vunpack.c.l.b16 %v509
      %v740 = vunpack.c.l.b16 %v510
      %v741 = vunpack.c.l.b16 %v511
      %v742 = vunpack.c.l.b16 %v512
      %v743 = vunpack.c.l.b16 %v513
      %v744 = vunpack.c.l.b16 %v514
      %v745 = vunpack.c.l.b16 %v515
      %v746 = vunpack.c.l.b16 %v516
      %v747 = vunpack.c.l.b16 %v517
      %v748 = vunpack.c.l.b16 %v518
      %v749 = vunpack.c.l.b16 %v519
      %v750 = vunpack.c.l.b16 %v520
      %v751 = vunpack.c.l.b16 %v521
      %v752 = vunpack.c.l.b16 %v522
      %v753 = vunpack.c.l.b16 %v523
      %v754 = vunpack.c.l.b16 %v524
      %v755 = vunpack.c.l.b16 %v525
      %v756 = vunpack.c.l.b16 %v526
      %v757 = vunpack.c.l.b16 %v527
      %v758 = vunpack.c.l.b16 %v528
      %v759 = vunpack.c.l.b16 %v529
      %v760 = vunpack.c.l.b16 %v530
      %v761 = vunpack.c.l.b16 %v531
      %v762 = vunpack.c.l.b16 %v532
      %v763 = vunpack.c.l.b16 %v533
      %v764 = vunpack.c.l.b16 %v534
      %v765 = vunpack.c.l.b16 %v535
      %v766 = vunpack.c.l.b16 %v536
      %v767 = vunpack.c.l.b16 %v537
      %v768 = vunpack.c.l.b16 %v538
      %v769 = vunpack.c.l.b16 %v539
      %v770 = vunpack.c.l.b16 %v540
      %v771 = vunpack.c.l.b16 %v541
      %v772 = vunpack.c.l.b16 %v542
      %v773 = vunpack.c.l.b16 %v543
      %v774 = vunpack.c.l.b16 %v544
      %v775 = vunpack.c.l.b16 %v545
      %v776 = vunpack.c.l.b16 %v546
      %v777 = vunpack.c.l.b16 %v547
      %v778 = vunpack.c.l.b16 %v548
      %v779 = vunpack.c.l.b16 %v549
      %v780 = vunpack.c.l.b16 %v550
      %v781 = vunpack.c.l.b16 %v551
      %v782 = vunpack.c.l.b16 %v552
      %v783 = vunpack.c.l.b16 %v553
      %v784 = vunpack.c.l.b16 %v554
      %v785 = vunpack.c.l.b16 %v555
      %v786 = vunpack.c.l.b16 %v556
      %v787 = vunpack.c.l.b16 %v557
      %v788 = vunpack.c.l.b16 %v558
      %v789 = vunpack.c.l.b16 %v559
      %v790 = vunpack.c.l.b16 %v560
      %v791 = vunpack.c.l.b16 %v561
      %v792 = vunpack.c.l.b16 %v562
      %v793 = vunpack.c.l.b16 %v563
      %v794 = vunpack.c.l.b16 %v564
      %v795 = vunpack.c.l.b16 %v565
      %v796 = vunpack.c.l.b16 %v566
      %v797 = vunpack.c.l.b16 %v567
      %v798 = vunpack.c.l.b16 %v568
      %v799 = vunpack.c.l.b16 %v569
      %v800 = vunpack.c.l.b16 %v570
      %v801 = vunpack.c.l.b16 %v571
      %v802 = vunpack.c.l.b16 %v572
      %v803 = vunpack.c.l.b16 %v573
      %v804 = vunpack.c.l.b16 %v574
      %v805 = vunpack.c.l.b16 %v575
      %v806 = vunpack.c.l.b16 %v576
      %v807 = vunpack.c.l.b16 %v577
      %v808 = vunpack.c.l.b16 %v578
      %v809 = vunpack.c.l.b16 %v579
      %v810 = vunpack.c.l.b16 %v580
      %v811 = vunpack.c.l.b16 %v581
      %v812 = vunpack.c.l.b16 %v582
      %v813 = vunpack.c.l.b16 %v583
      %v814 = vunpack.c.l.b16 %v584
      %v815 = vunpack.c.l.b16 %v585
      %v816 = vunpack.c.l.b16 %v586
      %v817 = vunpack.c.l.b16 %v587
      %v818 = vunpack.c.l.b16 %v588
      %v819 = vunpack.c.l.b16 %v589
      %v820 = vunpack.c.l.b16 %v590
      %v821 = vunpack.c.l.b16 %v591
      %v822 = vunpack.c.l.b16 %v592
      %v823 = vunpack.c.l.b16 %v593
      %v824 = vpack.c.b16 %v713, %v712
      %v825 = vpack.c.b16 %v715, %v714
      %v826 = vpack.c.b16 %v717, %v716
      %v827 = vpack.c.b16 %v719, %v718
      %v828 = vpack.c.b16 %v721, %v720
      %v829 = vpack.c.b16 %v723, %v722
      %v830 = vpack.c.b16 %v725, %v724
      %v831 = vpack.c.b16 %v727, %v726
      %v832 = vpack.c.b16 %v729, %v728
      %v833 = vpack.c.b16 %v731, %v730
      %v834 = vpack.c.b16 %v733, %v732
      %v835 = vpack.c.b16 %v735, %v734
      %v836 = vpack.c.b16 %v737, %v736
      %v837 = vpack.c.b16 %v739, %v738
      %v838 = vpack.c.b16 %v741, %v740
      %v839 = vpack.c.b16 %v743, %v742
      %v840 = vpack.c.b16 %v745, %v744
      %v841 = vpack.c.b16 %v747, %v746
      %v842 = vpack.c.b16 %v749, %v748
      %v843 = vpack.c.b16 %v751, %v750
      %v844 = vpack.c.b16 %v753, %v752
      %v845 = vpack.c.b16 %v755, %v754
      %v846 = vpack.c.b16 %v757, %v756
      %v847 = vpack.c.b16 %v759, %v758
      %v848 = vpack.c.b16 %v761, %v760
      %v849 = vpack.c.b16 %v763, %v762
      %v850 = vpack.c.b16 %v765, %v764
      %v851 = vpack.c.b16 %v767, %v766
      %v852 = vpack.c.b16 %v769, %v768
      %v853 = vpack.c.b16 %v771, %v770
      %v854 = vpack.c.b16 %v773, %v772
      %v855 = vpack.c.b16 %v775, %v774
      %v856 = vpack.c.b16 %v777, %v776
      %v857 = vpack.c.b16 %v779, %v778
      %v858 = vpack.c.b16 %v781, %v780
      %v859 = vpack.c.b16 %v783, %v782
      %v860 = vpack.c.b16 %v785, %v784
      %v861 = vpack.c.b16 %v787, %v786
      %v862 = vpack.c.b16 %v789, %v788
      %v863 = vpack.c.b16 %v791, %v790
      %v864 = vpack.c.b16 %v793, %v792
      %v865 = vpack.c.b16 %v795, %v794
      %v866 = vpack.c.b16 %v797, %v796
      %v867 = vpack.c.b16 %v799, %v798
      %v868 = vpack.c.b16 %v801, %v800
      %v869 = vpack.c.b16 %v803, %v802
      %v870 = vpack.c.b16 %v805, %v804
      %v871 = vpack.c.b16 %v807, %v806
      %v872 = vpack.c.b16 %v809, %v808
      %v873 = vpack.c.b16 %v811, %v810
      %v874 = vpack.c.b16 %v813, %v812
      %v875 = vpack.c.b16 %v815, %v814
      %v876 = vpack.c.b16 %v817, %v816
      %v877 = vpack.c.b16 %v819, %v818
      %v878 = vpack.c.b16 %v821, %v820
      %v879 = vpack.c.b16 %v823, %v822
      %936 = vmatprep.subr.bf16.mxu0 0
      %937 = vmatpush1.bf16.msra.mxu0 %v831
      %938 = vmatprep.subr.bf16.mxu0 0
      %939 = vmatpush1.bf16.msra.mxu0 %v830
      %940 = vmatprep.subr.bf16.mxu0 0
      %941 = vmatpush1.bf16.msra.mxu0 %v829
      %942 = vmatprep.subr.bf16.mxu0 0
      %943 = vmatpush1.bf16.msra.mxu0 %v828
      %944 = vmatprep.subr.bf16.mxu0 0
      %945 = vmatpush1.bf16.msra.mxu0 %v827
      %946 = vmatprep.subr.bf16.mxu0 0
      %947 = vmatpush1.bf16.msra.mxu0 %v826
      %948 = vmatprep.subr.bf16.mxu0 0
      %949 = vmatpush1.bf16.msra.mxu0 %v825
      %950 = vmatprep.subr.bf16.mxu0 0
      %951 = vmatpush1.bf16.msra.mxu0 %v824
      %952 = vmatprep.subr.bf16.mxu0 0
      %953 = vmatpush2.bf16.msra.mxu0 %v839
      %954 = vmatprep.subr.bf16.mxu0 0
      %955 = vmatpush2.bf16.msra.mxu0 %v838
      %956 = vmatprep.subr.bf16.mxu0 0
      %957 = vmatpush2.bf16.msra.mxu0 %v837
      %958 = vmatprep.subr.bf16.mxu0 0
      %959 = vmatpush2.bf16.msra.mxu0 %v836
      %960 = vmatprep.subr.bf16.mxu0 0
      %961 = vmatpush2.bf16.msra.mxu0 %v835
      %962 = vmatprep.subr.bf16.mxu0 0
      %963 = vmatpush2.bf16.msra.mxu0 %v834
      %964 = vmatprep.subr.bf16.mxu0 0
      %965 = vmatpush2.bf16.msra.mxu0 %v833
      %966 = vmatprep.subr.bf16.mxu0 0
      %967 = vmatpush2.bf16.msra.mxu0 %v832
      %968 = vmatprep.mubr.bf16.mxu0 %v469
      %969 = vmatmul.mubr.bf16.gmra.mxu0 %v468
      %v970 = vpop.f32.mrf.mxu0
      %v971 = vadd.f32 %v598, %v970
      %v972 = vpop.f32.mrf.mxu0
      %v973 = vpop.f32.mrf.mxu0
      %v974 = vadd.f32 %v598, %v973
      %v975 = vpop.f32.mrf.mxu0
      %976 = vmatprep.mubr.bf16.mxu0 %v476
      %977 = vmatmul.mubr.bf16.gmra.mxu0 %v475
      %v978 = vpop.f32.mrf.mxu0
      %v979 = vadd.f32 %v598, %v978
      %v980 = vpop.f32.mrf.mxu0
      %v981 = vpop.f32.mrf.mxu0
      %v982 = vadd.f32 %v598, %v981
      %v983 = vpop.f32.mrf.mxu0
      %984 = vdwg.mxu0
      %985 = vmatprep.subr.bf16.mxu0 0
      %986 = vmatpush1.bf16.msra.mxu0 %v847
      %987 = vmatprep.subr.bf16.mxu0 0
      %988 = vmatpush1.bf16.msra.mxu0 %v846
      %989 = vmatprep.subr.bf16.mxu0 0
      %990 = vmatpush1.bf16.msra.mxu0 %v845
      %991 = vmatprep.subr.bf16.mxu0 0
      %992 = vmatpush1.bf16.msra.mxu0 %v844
      %993 = vmatprep.subr.bf16.mxu0 0
      %994 = vmatpush1.bf16.msra.mxu0 %v843
      %995 = vmatprep.subr.bf16.mxu0 0
      %996 = vmatpush1.bf16.msra.mxu0 %v842
      %997 = vmatprep.subr.bf16.mxu0 0
      %998 = vmatpush1.bf16.msra.mxu0 %v841
      %999 = vmatprep.subr.bf16.mxu0 0
      %1000 = vmatpush1.bf16.msra.mxu0 %v840
      %1001 = vmatprep.subr.bf16.mxu0 0
      %1002 = vmatpush2.bf16.msra.mxu0 %v855
      %1003 = vmatprep.subr.bf16.mxu0 0
      %1004 = vmatpush2.bf16.msra.mxu0 %v854
      %1005 = vmatprep.subr.bf16.mxu0 0
      %1006 = vmatpush2.bf16.msra.mxu0 %v853
      %1007 = vmatprep.subr.bf16.mxu0 0
      %1008 = vmatpush2.bf16.msra.mxu0 %v852
      %1009 = vmatprep.subr.bf16.mxu0 0
      %1010 = vmatpush2.bf16.msra.mxu0 %v851
      %1011 = vmatprep.subr.bf16.mxu0 0
      %1012 = vmatpush2.bf16.msra.mxu0 %v850
      %1013 = vmatprep.subr.bf16.mxu0 0
      %1014 = vmatpush2.bf16.msra.mxu0 %v849
      %1015 = vmatprep.subr.bf16.mxu0 0
      %1016 = vmatpush2.bf16.msra.mxu0 %v848
      %1017 = vmatprep.mubr.bf16.mxu0 %v471
      %1018 = vmatmul.mubr.bf16.gmra.mxu0 %v470
      %v1019 = vpop.f32.mrf.mxu0
      %v1020 = vadd.f32 %v971, %v1019
      %v1021 = vpop.f32.mrf.mxu0
      %v1022 = vpop.f32.mrf.mxu0
      %v1023 = vadd.f32 %v974, %v1022
      %v1024 = vpop.f32.mrf.mxu0
      %1025 = vmatprep.mubr.bf16.mxu0 %v478
      %1026 = vmatmul.mubr.bf16.gmra.mxu0 %v477
      %v1027 = vpop.f32.mrf.mxu0
      %v1028 = vadd.f32 %v979, %v1027
      %v1029 = vpop.f32.mrf.mxu0
      %v1030 = vpop.f32.mrf.mxu0
      %v1031 = vadd.f32 %v982, %v1030
      %v1032 = vpop.f32.mrf.mxu0
      %1033 = vdwg.mxu0
      %1034 = vmatprep.subr.bf16.mxu0 0
      %1035 = vmatpush1.bf16.msra.mxu0 %v863
      %1036 = vmatprep.subr.bf16.mxu0 0
      %1037 = vmatpush1.bf16.msra.mxu0 %v862
      %1038 = vmatprep.subr.bf16.mxu0 0
      %1039 = vmatpush1.bf16.msra.mxu0 %v861
      %1040 = vmatprep.subr.bf16.mxu0 0
      %1041 = vmatpush1.bf16.msra.mxu0 %v860
      %1042 = vmatprep.subr.bf16.mxu0 0
      %1043 = vmatpush1.bf16.msra.mxu0 %v859
      %1044 = vmatprep.subr.bf16.mxu0 0
      %1045 = vmatpush1.bf16.msra.mxu0 %v858
      %1046 = vmatprep.subr.bf16.mxu0 0
      %1047 = vmatpush1.bf16.msra.mxu0 %v857
      %1048 = vmatprep.subr.bf16.mxu0 0
      %1049 = vmatpush1.bf16.msra.mxu0 %v856
      %1050 = vmatprep.subr.bf16.mxu0 0
      %1051 = vmatpush2.bf16.msra.mxu0 %v871
      %1052 = vmatprep.subr.bf16.mxu0 0
      %1053 = vmatpush2.bf16.msra.mxu0 %v870
      %1054 = vmatprep.subr.bf16.mxu0 0
      %1055 = vmatpush2.bf16.msra.mxu0 %v869
      %1056 = vmatprep.subr.bf16.mxu0 0
      %1057 = vmatpush2.bf16.msra.mxu0 %v868
      %1058 = vmatprep.subr.bf16.mxu0 0
      %1059 = vmatpush2.bf16.msra.mxu0 %v867
      %1060 = vmatprep.subr.bf16.mxu0 0
      %1061 = vmatpush2.bf16.msra.mxu0 %v866
      %1062 = vmatprep.subr.bf16.mxu0 0
      %1063 = vmatpush2.bf16.msra.mxu0 %v865
      %1064 = vmatprep.subr.bf16.mxu0 0
      %1065 = vmatpush2.bf16.msra.mxu0 %v864
      %1066 = vmatprep.mubr.bf16.mxu0 %v473
      %1067 = vmatmul.mubr.bf16.gmra.mxu0 %v472
      %v1068 = vpop.f32.mrf.mxu0
      %v1069 = vadd.f32 %v1020, %v1068
      %v1070 = vpop.f32.mrf.mxu0
      %v1071 = vpop.f32.mrf.mxu0
      %v1072 = vadd.f32 %v1023, %v1071
      %v1073 = vpop.f32.mrf.mxu0
      %1074 = vmatprep.mubr.bf16.mxu0 %v480
      %1075 = vmatmul.mubr.bf16.gmra.mxu0 %v479
      %v1076 = vpop.f32.mrf.mxu0
      %v1077 = vadd.f32 %v1028, %v1076
      %v1078 = vpop.f32.mrf.mxu0
      %v1079 = vpop.f32.mrf.mxu0
      %v1080 = vadd.f32 %v1031, %v1079
      %v1081 = vpop.f32.mrf.mxu0
      %1082 = vdwg.mxu0
      %1083 = vmatprep.subr.bf16.mxu0 0
      %1084 = vmatpush1.bf16.msra.mxu0 %v879
      %1085 = vmatprep.subr.bf16.mxu0 0
      %1086 = vmatpush1.bf16.msra.mxu0 %v878
      %1087 = vmatprep.subr.bf16.mxu0 0
      %1088 = vmatpush1.bf16.msra.mxu0 %v877
      %1089 = vmatprep.subr.bf16.mxu0 0
      %1090 = vmatpush1.bf16.msra.mxu0 %v876
      %1091 = vmatprep.subr.bf16.mxu0 0
      %1092 = vmatpush1.bf16.msra.mxu0 %v875
      %1093 = vmatprep.subr.bf16.mxu0 0
      %1094 = vmatpush1.bf16.msra.mxu0 %v874
      %1095 = vmatprep.subr.bf16.mxu0 0
      %1096 = vmatpush1.bf16.msra.mxu0 %v873
      %1097 = vmatprep.subr.bf16.mxu0 0
      %1098 = vmatpush1.bf16.msra.mxu0 %v872
      %1099 = vmatprep.subr.bf16.mxu0 0
      %1100 = vmatpush2.bf16.msra.mxu0 0
      %1101 = vmatprep.subr.bf16.mxu0 0
      %1102 = vmatpush2.bf16.msra.mxu0 0
      %1103 = vmatprep.subr.bf16.mxu0 0
      %1104 = vmatpush2.bf16.msra.mxu0 0
      %1105 = vmatprep.subr.bf16.mxu0 0
      %1106 = vmatpush2.bf16.msra.mxu0 0
      %1107 = vmatprep.subr.bf16.mxu0 0
      %1108 = vmatpush2.bf16.msra.mxu0 0
      %1109 = vmatprep.subr.bf16.mxu0 0
      %1110 = vmatpush2.bf16.msra.mxu0 0
      %1111 = vmatprep.subr.bf16.mxu0 0
      %1112 = vmatpush2.bf16.msra.mxu0 0
      %1113 = vmatprep.subr.bf16.mxu0 0
      %1114 = vmatpush2.bf16.msra.mxu0 0
      %1115 = vmatprep.mubr.bf16.mxu0 0
      %1116 = vmatmul.mubr.bf16.gmra.mxu0 %v474
      %v1117 = vpop.f32.mrf.mxu0
      %v1118 = vadd.f32 %v1069, %v1117
      %v1119 = vpop.f32.mrf.mxu0
      %v1120 = vpop.f32.mrf.mxu0
      %v1121 = vadd.f32 %v1072, %v1120
      %v1122 = vpop.f32.mrf.mxu0
      %1123 = vmatprep.mubr.bf16.mxu0 0
      %1124 = vmatmul.mubr.bf16.gmra.mxu0 %v481
      %v1125 = vpop.f32.mrf.mxu0
      %v1126 = vadd.f32 %v1077, %v1125
      %v1127 = vpop.f32.mrf.mxu0
      %v1128 = vpop.f32.mrf.mxu0
      %v1129 = vadd.f32 %v1080, %v1128
      %v1130 = vpop.f32.mrf.mxu0
      %1131 = vdwg.mxu0
      %v1132 = vmax.f32 %v1118, 0.0
      %v1133 = vmax.f32 %v1121, 0.0
      %v1134 = vmax.f32 %v1126, 0.0
      %v1135 = vmax.f32 %v1129, 0.0
      %v1136 = vld [vmem:[%s3] sm:$0x1]
      %v1138 = vlaneseq
      %v1139 = vshrl.u32 %v1138, 7
      %v1140 = vsub.s32 0, %v1139
      %v1141 = vrot.slane %v1136, %v1140
      %v1143 = vadd.f32 %v1132, %v1141
      %v1144 = vadd.f32 %v1133, %v1141
      %v1145 = vadd.f32 %v1134, %v1141
      %v1146 = vadd.f32 %v1135, %v1141
      %v1147 = vsel %vm384, %v1143, 0.0
      %v1148 = vsel %vm385, %v1144, 0.0
      %v1149 = vsel %vm386, %v1145, 0.0
      %v1150 = vsel %vm387, %v1146, 0.0
      %v1151 = vsel %vm384, %v1143, -1e+30
      %v1152 = vsel %vm385, %v1144, -1e+30
      %v1153 = vsel %vm386, %v1145, -1e+30
      %v1154 = vsel %vm387, %v1146, -1e+30
      %v1155 = vmax.f32 %v1151, %v1152
      %v1156 = vmax.f32 %v1153, %v1154
      %v1157 = vmax.f32 %v1155, %v1156
      %v1158 = vrot.slane %v1157, 4
      %v1159 = vmax.f32 %v1157, %v1158
      %v1160 = vrot.slane %v1159, 2
      %v1161 = vmax.f32 %v1159, %v1160
      %v1162 = vrot.slane %v1161, 1
      %v1163 = vmax.f32 %v1161, %v1162
      %1164 = vst [vmem:[%s357 + $0x1] sm:$0x1] %v1163
      %v1165 = vadd.f32 %v1147, %v1148
      %v1166 = vadd.f32 %v1165, %v1149
      %v1167 = vadd.f32 %v1166, %v1150
      %v1168 = vrot.slane %v1167, 4
      %v1169 = vadd.f32 %v1167, %v1168
      %v1170 = vrot.slane %v1169, 2
      %v1171 = vadd.f32 %v1169, %v1170
      %v1172 = vrot.slane %v1171, 1
      %v1173 = vadd.f32 %v1171, %v1172
      %v1174 = vmul.f32 %v1173, 0.04347826
      %1175 = vst [vmem:[%s357 + $0x5] sm:$0x1] %v1174
      %v1176 = vld [vmem:[%s5] sm:$0x1]
      %v1177 = vrot.slane %v1147, 5
      %v1178 = vrot.slane %v1148, 5
      %v1179 = vrot.slane %v1149, 5
      %v1180 = vrot.slane %v1150, 5
      %v1181 = vsel %vm418, %v1179, %v1180
      %v1182 = vsel %vm418, %v1178, %v1179
      %v1183 = vsel %vm418, %v1177, %v1178
      %v1184 = vsel %vm418, %v1180, %v1177
      %v1185 = vrot.slane %v1147, 6
      %v1186 = vrot.slane %v1148, 6
      %v1187 = vrot.slane %v1149, 6
      %v1188 = vrot.slane %v1150, 6
      %v1189 = vsel %vm427, %v1187, %v1188
      %v1190 = vsel %vm427, %v1186, %v1187
      %v1191 = vsel %vm427, %v1185, %v1186
      %v1192 = vsel %vm427, %v1188, %v1185
      %v1193 = vrot.slane %v1147, 7
      %v1194 = vrot.slane %v1148, 7
      %v1195 = vrot.slane %v1149, 7
      %v1196 = vrot.slane %v1150, 7
      %v1197 = vsel %vm436, %v1195, %v1196
      %v1198 = vsel %vm436, %v1194, %v1195
      %v1199 = vsel %vm436, %v1193, %v1194
      %v1200 = vsel %vm436, %v1196, %v1193
      %v1201 = vrot.slane %v1147, 1
      %v1202 = vrot.slane %v1148, 1
      %v1203 = vrot.slane %v1149, 1
      %v1204 = vrot.slane %v1150, 1
      %v1205 = vsel %vm445, %v1203, %v1204
      %v1206 = vsel %vm445, %v1202, %v1203
      %v1207 = vsel %vm445, %v1201, %v1202
      %v1208 = vsel %vm445, %v1204, %v1201
      %v1209 = vrot.slane %v1147, 2
      %v1210 = vrot.slane %v1148, 2
      %v1211 = vrot.slane %v1149, 2
      %v1212 = vrot.slane %v1150, 2
      %v1213 = vsel %vm454, %v1211, %v1212
      %v1214 = vsel %vm454, %v1210, %v1211
      %v1215 = vsel %vm454, %v1209, %v1210
      %v1216 = vsel %vm454, %v1212, %v1209
      %v1217 = vrot.slane %v1147, 3
      %v1218 = vrot.slane %v1148, 3
      %v1219 = vrot.slane %v1149, 3
      %v1220 = vrot.slane %v1150, 3
      %v1221 = vsel %vm463, %v1219, %v1220
      %v1222 = vsel %vm463, %v1218, %v1219
      %v1223 = vsel %vm463, %v1217, %v1218
      %v1224 = vsel %vm463, %v1220, %v1217
      %v1225 = vpack.c.bf16 %v1183, %v1184
      %v1226 = vpack.c.bf16 %v1191, %v1192
      %v1227 = vpack.c.bf16 %v1199, %v1200
      %v1228 = vpack.c.bf16 %v1148, %v1147
      %v1229 = vpack.c.bf16 %v1206, %v1207
      %v1230 = vpack.c.bf16 %v1214, %v1215
      %v1231 = vpack.c.bf16 %v1222, %v1223
      %v1232 = vpack.c.bf16 %v1181, %v1182
      %v1233 = vpack.c.bf16 %v1189, %v1190
      %v1234 = vpack.c.bf16 %v1197, %v1198
      %v1235 = vpack.c.bf16 %v1150, %v1149
      %v1236 = vpack.c.bf16 %v1208, %v1205
      %v1237 = vpack.c.bf16 %v1216, %v1213
      %v1238 = vpack.c.bf16 %v1224, %v1221
      %v1239 = vld [vmem:[%s4] sm:$0xf]
      %v1240 = vld [vmem:[%s4 + $0x4] sm:$0xf]
      %v1241 = vld [vmem:[%s4 + $0x8] sm:$0xf]
      %v1242 = vld [vmem:[%s4 + $0xc] sm:$0xf]
      %v1243 = vld [vmem:[%s4 + $0x10] sm:$0xf]
      %v1244 = vld [vmem:[%s4 + $0x14] sm:$0xf]
      %v1245 = vld [vmem:[%s4 + $0x18] sm:$0xf]
      %v1246 = vld [vmem:[%s4 + $0x1c] sm:$0xf]
      %v1247 = vld [vmem:[%s4 + $0x20] sm:$0xf]
      %v1248 = vld [vmem:[%s4 + $0x24] sm:$0xf]
      %v1249 = vld [vmem:[%s4 + $0x28] sm:$0xf]
      %v1250 = vld [vmem:[%s4 + $0x2c] sm:$0xf]
      %v1251 = vld [vmem:[%s4 + $0x30] sm:$0xf]
      %v1252 = vld [vmem:[%s4 + $0x34] sm:$0xf]
      %v1253 = vld [vmem:[%s4 + $0x38] sm:$0xf]
      %v1254 = vld [vmem:[%s4 + $0x3c] sm:$0xf]
      %v1255 = vld [vmem:[%s4 + $0x40] sm:$0xf]
      %v1256 = vld [vmem:[%s4 + $0x44] sm:$0xf]
      %v1257 = vld [vmem:[%s4 + $0x48] sm:$0xf]
      %v1258 = vld [vmem:[%s4 + $0x4c] sm:$0xf]
      %v1259 = vld [vmem:[%s4 + $0x50] sm:$0xf]
      %v1260 = vld [vmem:[%s4 + $0x54] sm:$0xf]
      %v1261 = vld [vmem:[%s4 + $0x58] sm:$0xf]
      %v1262 = vld [vmem:[%s4 + $0x5c] sm:$0xf]
      %v1263 = vld [vmem:[%s4 + $0x60] sm:$0xf]
      %v1264 = vld [vmem:[%s4 + $0x64] sm:$0xf]
      %v1265 = vld [vmem:[%s4 + $0x68] sm:$0xf]
      %v1266 = vld [vmem:[%s4 + $0x6c] sm:$0xf]
      %v1267 = vld [vmem:[%s4 + $0x70] sm:$0xf]
      %v1268 = vld [vmem:[%s4 + $0x74] sm:$0xf]
      %v1269 = vld [vmem:[%s4 + $0x78] sm:$0xf]
      %v1270 = vld [vmem:[%s4 + $0x7c] sm:$0xf]
      %v1271 = vld [vmem:[%s4 + $0x80] sm:$0xf]
      %v1272 = vld [vmem:[%s4 + $0x84] sm:$0xf]
      %v1273 = vld [vmem:[%s4 + $0x88] sm:$0xf]
      %v1274 = vld [vmem:[%s4 + $0x8c] sm:$0xf]
      %v1275 = vld [vmem:[%s4 + $0x90] sm:$0xf]
      %v1276 = vld [vmem:[%s4 + $0x94] sm:$0xf]
      %v1277 = vld [vmem:[%s4 + $0x98] sm:$0xf]
      %v1278 = vld [vmem:[%s4 + $0x9c] sm:$0xf]
      %v1279 = vld [vmem:[%s4 + $0xa0] sm:$0xf]
      %v1280 = vld [vmem:[%s4 + $0xa4] sm:$0xf]
      %v1281 = vld [vmem:[%s4 + $0xa8] sm:$0xf]
      %v1282 = vld [vmem:[%s4 + $0xac] sm:$0xf]
      %v1283 = vld [vmem:[%s4 + $0xb0] sm:$0xf]
      %v1284 = vld [vmem:[%s4 + $0xb4] sm:$0xf]
      %v1285 = vld [vmem:[%s4 + $0xb8] sm:$0xf]
      %v1286 = vld [vmem:[%s4 + $0xbc] sm:$0xf]
      %v1287 = vld [vmem:[%s4 + $0xc0] sm:$0xf]
      %v1288 = vld [vmem:[%s4 + $0xc4] sm:$0xf]
      %v1289 = vld [vmem:[%s4 + $0xc8] sm:$0xf]
      %v1290 = vld [vmem:[%s4 + $0xcc] sm:$0xf]
      %v1291 = vld [vmem:[%s4 + $0xd0] sm:$0xf]
      %v1292 = vld [vmem:[%s4 + $0xd4] sm:$0xf]
      %v1293 = vld [vmem:[%s4 + $0xd8] sm:$0xf]
      %v1294 = vld [vmem:[%s4 + $0xdc] sm:$0xf]
      %v1295 = vld [vmem:[%s4 + $0xe0] sm:$0xf]
      %v1296 = vld [vmem:[%s4 + $0xe4] sm:$0xf]
      %v1297 = vld [vmem:[%s4 + $0xe8] sm:$0xf]
      %v1298 = vld [vmem:[%s4 + $0xec] sm:$0xf]
      %v1299 = vld [vmem:[%s4 + $0xf0] sm:$0xf]
      %v1300 = vld [vmem:[%s4 + $0xf4] sm:$0xf]
      %v1301 = vld [vmem:[%s4 + $0xf8] sm:$0xf]
      %v1302 = vld [vmem:[%s4 + $0xfc] sm:$0xf]
      %v1303 = vld [vmem:[%s4 + $0x100] sm:$0xf]
      %v1304 = vld [vmem:[%s4 + $0x104] sm:$0xf]
      %v1305 = vld [vmem:[%s4 + $0x108] sm:$0xf]
      %v1306 = vld [vmem:[%s4 + $0x10c] sm:$0xf]
      %v1307 = vld [vmem:[%s4 + $0x110] sm:$0xf]
      %v1308 = vld [vmem:[%s4 + $0x114] sm:$0xf]
      %v1309 = vld [vmem:[%s4 + $0x118] sm:$0xf]
      %v1310 = vld [vmem:[%s4 + $0x11c] sm:$0xf]
      %v1311 = vld [vmem:[%s4 + $0x120] sm:$0xf]
      %v1312 = vld [vmem:[%s4 + $0x124] sm:$0xf]
      %v1313 = vld [vmem:[%s4 + $0x128] sm:$0xf]
      %v1314 = vld [vmem:[%s4 + $0x12c] sm:$0xf]
      %v1315 = vld [vmem:[%s4 + $0x130] sm:$0xf]
      %v1316 = vld [vmem:[%s4 + $0x134] sm:$0xf]
      %v1317 = vld [vmem:[%s4 + $0x138] sm:$0xf]
      %v1318 = vld [vmem:[%s4 + $0x13c] sm:$0xf]
      %v1319 = vld [vmem:[%s4 + $0x140] sm:$0xf]
      %v1320 = vld [vmem:[%s4 + $0x144] sm:$0xf]
      %v1321 = vld [vmem:[%s4 + $0x148] sm:$0xf]
      %v1322 = vld [vmem:[%s4 + $0x14c] sm:$0xf]
      %v1323 = vld [vmem:[%s4 + $0x150] sm:$0xf]
      %v1324 = vld [vmem:[%s4 + $0x154] sm:$0xf]
      %v1325 = vld [vmem:[%s4 + $0x158] sm:$0xf]
      %v1326 = vld [vmem:[%s4 + $0x15c] sm:$0xf]
      %v1327 = vld [vmem:[%s4 + $0x160] sm:$0xf]
      %v1328 = vld [vmem:[%s4 + $0x164] sm:$0xf]
      %v1329 = vld [vmem:[%s4 + $0x168] sm:$0xf]
      %v1330 = vld [vmem:[%s4 + $0x16c] sm:$0xf]
      %v1331 = vld [vmem:[%s4 + $0x170] sm:$0xf]
      %v1332 = vld [vmem:[%s4 + $0x174] sm:$0xf]
      %v1333 = vld [vmem:[%s4 + $0x178] sm:$0xf]
      %v1334 = vld [vmem:[%s4 + $0x17c] sm:$0xf]
      %v1335 = vld [vmem:[%s4 + $0x180] sm:$0xf]
      %v1336 = vld [vmem:[%s4 + $0x184] sm:$0xf]
      %v1337 = vld [vmem:[%s4 + $0x188] sm:$0xf]
      %v1338 = vld [vmem:[%s4 + $0x18c] sm:$0xf]
      %v1339 = vld [vmem:[%s4 + $0x190] sm:$0xf]
      %v1340 = vld [vmem:[%s4 + $0x194] sm:$0xf]
      %v1341 = vld [vmem:[%s4 + $0x198] sm:$0xf]
      %v1342 = vld [vmem:[%s4 + $0x19c] sm:$0xf]
      %v1343 = vld [vmem:[%s4 + $0x1a0] sm:$0xf]
      %v1344 = vld [vmem:[%s4 + $0x1a4] sm:$0xf]
      %v1345 = vld [vmem:[%s4 + $0x1a8] sm:$0xf]
      %v1346 = vld [vmem:[%s4 + $0x1ac] sm:$0xf]
      %v1347 = vld [vmem:[%s4 + $0x1b0] sm:$0xf]
      %v1348 = vld [vmem:[%s4 + $0x1b4] sm:$0xf]
      %v1349 = vld [vmem:[%s4 + $0x1b8] sm:$0xf]
      %v1350 = vld [vmem:[%s4 + $0x1bc] sm:$0xf]
      %v1352 = vlaneseq
      %v1353 = vshrl.u32 %v1352, 7
      %v1354 = vsub.s32 0, %v1353
      %v1355 = vrot.slane %v1176, %v1354
      %v1469 = vunpack.c.l.b16 %v1239
      %v1470 = vunpack.c.l.b16 %v1240
      %v1471 = vunpack.c.l.b16 %v1241
      %v1472 = vunpack.c.l.b16 %v1242
      %v1473 = vunpack.c.l.b16 %v1243
      %v1474 = vunpack.c.l.b16 %v1244
      %v1475 = vunpack.c.l.b16 %v1245
      %v1476 = vunpack.c.l.b16 %v1246
      %v1477 = vunpack.c.l.b16 %v1247
      %v1478 = vunpack.c.l.b16 %v1248
      %v1479 = vunpack.c.l.b16 %v1249
      %v1480 = vunpack.c.l.b16 %v1250
      %v1481 = vunpack.c.l.b16 %v1251
      %v1482 = vunpack.c.l.b16 %v1252
      %v1483 = vunpack.c.l.b16 %v1253
      %v1484 = vunpack.c.l.b16 %v1254
      %v1485 = vunpack.c.l.b16 %v1255
      %v1486 = vunpack.c.l.b16 %v1256
      %v1487 = vunpack.c.l.b16 %v1257
      %v1488 = vunpack.c.l.b16 %v1258
      %v1489 = vunpack.c.l.b16 %v1259
      %v1490 = vunpack.c.l.b16 %v1260
      %v1491 = vunpack.c.l.b16 %v1261
      %v1492 = vunpack.c.l.b16 %v1262
      %v1493 = vunpack.c.l.b16 %v1263
      %v1494 = vunpack.c.l.b16 %v1264
      %v1495 = vunpack.c.l.b16 %v1265
      %v1496 = vunpack.c.l.b16 %v1266
      %v1497 = vunpack.c.l.b16 %v1267
      %v1498 = vunpack.c.l.b16 %v1268
      %v1499 = vunpack.c.l.b16 %v1269
      %v1500 = vunpack.c.l.b16 %v1270
      %v1501 = vunpack.c.l.b16 %v1271
      %v1502 = vunpack.c.l.b16 %v1272
      %v1503 = vunpack.c.l.b16 %v1273
      %v1504 = vunpack.c.l.b16 %v1274
      %v1505 = vunpack.c.l.b16 %v1275
      %v1506 = vunpack.c.l.b16 %v1276
      %v1507 = vunpack.c.l.b16 %v1277
      %v1508 = vunpack.c.l.b16 %v1278
      %v1509 = vunpack.c.l.b16 %v1279
      %v1510 = vunpack.c.l.b16 %v1280
      %v1511 = vunpack.c.l.b16 %v1281
      %v1512 = vunpack.c.l.b16 %v1282
      %v1513 = vunpack.c.l.b16 %v1283
      %v1514 = vunpack.c.l.b16 %v1284
      %v1515 = vunpack.c.l.b16 %v1285
      %v1516 = vunpack.c.l.b16 %v1286
      %v1517 = vunpack.c.l.b16 %v1287
      %v1518 = vunpack.c.l.b16 %v1288
      %v1519 = vunpack.c.l.b16 %v1289
      %v1520 = vunpack.c.l.b16 %v1290
      %v1521 = vunpack.c.l.b16 %v1291
      %v1522 = vunpack.c.l.b16 %v1292
      %v1523 = vunpack.c.l.b16 %v1293
      %v1524 = vunpack.c.l.b16 %v1294
      %v1525 = vunpack.c.l.b16 %v1295
      %v1526 = vunpack.c.l.b16 %v1296
      %v1527 = vunpack.c.l.b16 %v1297
      %v1528 = vunpack.c.l.b16 %v1298
      %v1529 = vunpack.c.l.b16 %v1299
      %v1530 = vunpack.c.l.b16 %v1300
      %v1531 = vunpack.c.l.b16 %v1301
      %v1532 = vunpack.c.l.b16 %v1302
      %v1533 = vunpack.c.l.b16 %v1303
      %v1534 = vunpack.c.l.b16 %v1304
      %v1535 = vunpack.c.l.b16 %v1305
      %v1536 = vunpack.c.l.b16 %v1306
      %v1537 = vunpack.c.l.b16 %v1307
      %v1538 = vunpack.c.l.b16 %v1308
      %v1539 = vunpack.c.l.b16 %v1309
      %v1540 = vunpack.c.l.b16 %v1310
      %v1541 = vunpack.c.l.b16 %v1311
      %v1542 = vunpack.c.l.b16 %v1312
      %v1543 = vunpack.c.l.b16 %v1313
      %v1544 = vunpack.c.l.b16 %v1314
      %v1545 = vunpack.c.l.b16 %v1315
      %v1546 = vunpack.c.l.b16 %v1316
      %v1547 = vunpack.c.l.b16 %v1317
      %v1548 = vunpack.c.l.b16 %v1318
      %v1549 = vunpack.c.l.b16 %v1319
      %v1550 = vunpack.c.l.b16 %v1320
      %v1551 = vunpack.c.l.b16 %v1321
      %v1552 = vunpack.c.l.b16 %v1322
      %v1553 = vunpack.c.l.b16 %v1323
      %v1554 = vunpack.c.l.b16 %v1324
      %v1555 = vunpack.c.l.b16 %v1325
      %v1556 = vunpack.c.l.b16 %v1326
      %v1557 = vunpack.c.l.b16 %v1327
      %v1558 = vunpack.c.l.b16 %v1328
      %v1559 = vunpack.c.l.b16 %v1329
      %v1560 = vunpack.c.l.b16 %v1330
      %v1561 = vunpack.c.l.b16 %v1331
      %v1562 = vunpack.c.l.b16 %v1332
      %v1563 = vunpack.c.l.b16 %v1333
      %v1564 = vunpack.c.l.b16 %v1334
      %v1565 = vunpack.c.l.b16 %v1335
      %v1566 = vunpack.c.l.b16 %v1336
      %v1567 = vunpack.c.l.b16 %v1337
      %v1568 = vunpack.c.l.b16 %v1338
      %v1569 = vunpack.c.l.b16 %v1339
      %v1570 = vunpack.c.l.b16 %v1340
      %v1571 = vunpack.c.l.b16 %v1341
      %v1572 = vunpack.c.l.b16 %v1342
      %v1573 = vunpack.c.l.b16 %v1343
      %v1574 = vunpack.c.l.b16 %v1344
      %v1575 = vunpack.c.l.b16 %v1345
      %v1576 = vunpack.c.l.b16 %v1346
      %v1577 = vunpack.c.l.b16 %v1347
      %v1578 = vunpack.c.l.b16 %v1348
      %v1579 = vunpack.c.l.b16 %v1349
      %v1580 = vunpack.c.l.b16 %v1350
      %v1581 = vpack.c.b16 %v1470, %v1469
      %v1582 = vpack.c.b16 %v1472, %v1471
      %v1583 = vpack.c.b16 %v1474, %v1473
      %v1584 = vpack.c.b16 %v1476, %v1475
      %v1585 = vpack.c.b16 %v1478, %v1477
      %v1586 = vpack.c.b16 %v1480, %v1479
      %v1587 = vpack.c.b16 %v1482, %v1481
      %v1588 = vpack.c.b16 %v1484, %v1483
      %v1589 = vpack.c.b16 %v1486, %v1485
      %v1590 = vpack.c.b16 %v1488, %v1487
      %v1591 = vpack.c.b16 %v1490, %v1489
      %v1592 = vpack.c.b16 %v1492, %v1491
      %v1593 = vpack.c.b16 %v1494, %v1493
      %v1594 = vpack.c.b16 %v1496, %v1495
      %v1595 = vpack.c.b16 %v1498, %v1497
      %v1596 = vpack.c.b16 %v1500, %v1499
      %v1597 = vpack.c.b16 %v1502, %v1501
      %v1598 = vpack.c.b16 %v1504, %v1503
      %v1599 = vpack.c.b16 %v1506, %v1505
      %v1600 = vpack.c.b16 %v1508, %v1507
      %v1601 = vpack.c.b16 %v1510, %v1509
      %v1602 = vpack.c.b16 %v1512, %v1511
      %v1603 = vpack.c.b16 %v1514, %v1513
      %v1604 = vpack.c.b16 %v1516, %v1515
      %v1605 = vpack.c.b16 %v1518, %v1517
      %v1606 = vpack.c.b16 %v1520, %v1519
      %v1607 = vpack.c.b16 %v1522, %v1521
      %v1608 = vpack.c.b16 %v1524, %v1523
      %v1609 = vpack.c.b16 %v1526, %v1525
      %v1610 = vpack.c.b16 %v1528, %v1527
      %v1611 = vpack.c.b16 %v1530, %v1529
      %v1612 = vpack.c.b16 %v1532, %v1531
      %v1613 = vpack.c.b16 %v1534, %v1533
      %v1614 = vpack.c.b16 %v1536, %v1535
      %v1615 = vpack.c.b16 %v1538, %v1537
      %v1616 = vpack.c.b16 %v1540, %v1539
      %v1617 = vpack.c.b16 %v1542, %v1541
      %v1618 = vpack.c.b16 %v1544, %v1543
      %v1619 = vpack.c.b16 %v1546, %v1545
      %v1620 = vpack.c.b16 %v1548, %v1547
      %v1621 = vpack.c.b16 %v1550, %v1549
      %v1622 = vpack.c.b16 %v1552, %v1551
      %v1623 = vpack.c.b16 %v1554, %v1553
      %v1624 = vpack.c.b16 %v1556, %v1555
      %v1625 = vpack.c.b16 %v1558, %v1557
      %v1626 = vpack.c.b16 %v1560, %v1559
      %v1627 = vpack.c.b16 %v1562, %v1561
      %v1628 = vpack.c.b16 %v1564, %v1563
      %v1629 = vpack.c.b16 %v1566, %v1565
      %v1630 = vpack.c.b16 %v1568, %v1567
      %v1631 = vpack.c.b16 %v1570, %v1569
      %v1632 = vpack.c.b16 %v1572, %v1571
      %v1633 = vpack.c.b16 %v1574, %v1573
      %v1634 = vpack.c.b16 %v1576, %v1575
      %v1635 = vpack.c.b16 %v1578, %v1577
      %v1636 = vpack.c.b16 %v1580, %v1579
      %1693 = vmatprep.subr.bf16.mxu0 0
      %1694 = vmatpush1.bf16.msra.mxu0 %v1588
      %1695 = vmatprep.subr.bf16.mxu0 0
      %1696 = vmatpush1.bf16.msra.mxu0 %v1587
      %1697 = vmatprep.subr.bf16.mxu0 0
      %1698 = vmatpush1.bf16.msra.mxu0 %v1586
      %1699 = vmatprep.subr.bf16.mxu0 0
      %1700 = vmatpush1.bf16.msra.mxu0 %v1585
      %1701 = vmatprep.subr.bf16.mxu0 0
      %1702 = vmatpush1.bf16.msra.mxu0 %v1584
      %1703 = vmatprep.subr.bf16.mxu0 0
      %1704 = vmatpush1.bf16.msra.mxu0 %v1583
      %1705 = vmatprep.subr.bf16.mxu0 0
      %1706 = vmatpush1.bf16.msra.mxu0 %v1582
      %1707 = vmatprep.subr.bf16.mxu0 0
      %1708 = vmatpush1.bf16.msra.mxu0 %v1581
      %1709 = vmatprep.subr.bf16.mxu0 0
      %1710 = vmatpush2.bf16.msra.mxu0 %v1596
      %1711 = vmatprep.subr.bf16.mxu0 0
      %1712 = vmatpush2.bf16.msra.mxu0 %v1595
      %1713 = vmatprep.subr.bf16.mxu0 0
      %1714 = vmatpush2.bf16.msra.mxu0 %v1594
      %1715 = vmatprep.subr.bf16.mxu0 0
      %1716 = vmatpush2.bf16.msra.mxu0 %v1593
      %1717 = vmatprep.subr.bf16.mxu0 0
      %1718 = vmatpush2.bf16.msra.mxu0 %v1592
      %1719 = vmatprep.subr.bf16.mxu0 0
      %1720 = vmatpush2.bf16.msra.mxu0 %v1591
      %1721 = vmatprep.subr.bf16.mxu0 0
      %1722 = vmatpush2.bf16.msra.mxu0 %v1590
      %1723 = vmatprep.subr.bf16.mxu0 0
      %1724 = vmatpush2.bf16.msra.mxu0 %v1589
      %1725 = vmatprep.mubr.bf16.mxu0 %v1226
      %1726 = vmatmul.mubr.bf16.gmra.mxu0 %v1225
      %v1727 = vpop.f32.mrf.mxu0
      %v1728 = vadd.f32 %v1355, %v1727
      %v1729 = vpop.f32.mrf.mxu0
      %v1730 = vpop.f32.mrf.mxu0
      %v1731 = vadd.f32 %v1355, %v1730
      %v1732 = vpop.f32.mrf.mxu0
      %1733 = vmatprep.mubr.bf16.mxu0 %v1233
      %1734 = vmatmul.mubr.bf16.gmra.mxu0 %v1232
      %v1735 = vpop.f32.mrf.mxu0
      %v1736 = vadd.f32 %v1355, %v1735
      %v1737 = vpop.f32.mrf.mxu0
      %v1738 = vpop.f32.mrf.mxu0
      %v1739 = vadd.f32 %v1355, %v1738
      %v1740 = vpop.f32.mrf.mxu0
      %1741 = vdwg.mxu0
      %1742 = vmatprep.subr.bf16.mxu0 0
      %1743 = vmatpush1.bf16.msra.mxu0 %v1604
      %1744 = vmatprep.subr.bf16.mxu0 0
      %1745 = vmatpush1.bf16.msra.mxu0 %v1603
      %1746 = vmatprep.subr.bf16.mxu0 0
      %1747 = vmatpush1.bf16.msra.mxu0 %v1602
      %1748 = vmatprep.subr.bf16.mxu0 0
      %1749 = vmatpush1.bf16.msra.mxu0 %v1601
      %1750 = vmatprep.subr.bf16.mxu0 0
      %1751 = vmatpush1.bf16.msra.mxu0 %v1600
      %1752 = vmatprep.subr.bf16.mxu0 0
      %1753 = vmatpush1.bf16.msra.mxu0 %v1599
      %1754 = vmatprep.subr.bf16.mxu0 0
      %1755 = vmatpush1.bf16.msra.mxu0 %v1598
      %1756 = vmatprep.subr.bf16.mxu0 0
      %1757 = vmatpush1.bf16.msra.mxu0 %v1597
      %1758 = vmatprep.subr.bf16.mxu0 0
      %1759 = vmatpush2.bf16.msra.mxu0 %v1612
      %1760 = vmatprep.subr.bf16.mxu0 0
      %1761 = vmatpush2.bf16.msra.mxu0 %v1611
      %1762 = vmatprep.subr.bf16.mxu0 0
      %1763 = vmatpush2.bf16.msra.mxu0 %v1610
      %1764 = vmatprep.subr.bf16.mxu0 0
      %1765 = vmatpush2.bf16.msra.mxu0 %v1609
      %1766 = vmatprep.subr.bf16.mxu0 0
      %1767 = vmatpush2.bf16.msra.mxu0 %v1608
      %1768 = vmatprep.subr.bf16.mxu0 0
      %1769 = vmatpush2.bf16.msra.mxu0 %v1607
      %1770 = vmatprep.subr.bf16.mxu0 0
      %1771 = vmatpush2.bf16.msra.mxu0 %v1606
      %1772 = vmatprep.subr.bf16.mxu0 0
      %1773 = vmatpush2.bf16.msra.mxu0 %v1605
      %1774 = vmatprep.mubr.bf16.mxu0 %v1228
      %1775 = vmatmul.mubr.bf16.gmra.mxu0 %v1227
      %v1776 = vpop.f32.mrf.mxu0
      %v1777 = vadd.f32 %v1728, %v1776
      %v1778 = vpop.f32.mrf.mxu0
      %v1779 = vpop.f32.mrf.mxu0
      %v1780 = vadd.f32 %v1731, %v1779
      %v1781 = vpop.f32.mrf.mxu0
      %1782 = vmatprep.mubr.bf16.mxu0 %v1235
      %1783 = vmatmul.mubr.bf16.gmra.mxu0 %v1234
      %v1784 = vpop.f32.mrf.mxu0
      %v1785 = vadd.f32 %v1736, %v1784
      %v1786 = vpop.f32.mrf.mxu0
      %v1787 = vpop.f32.mrf.mxu0
      %v1788 = vadd.f32 %v1739, %v1787
      %v1789 = vpop.f32.mrf.mxu0
      %1790 = vdwg.mxu0
      %1791 = vmatprep.subr.bf16.mxu0 0
      %1792 = vmatpush1.bf16.msra.mxu0 %v1620
      %1793 = vmatprep.subr.bf16.mxu0 0
      %1794 = vmatpush1.bf16.msra.mxu0 %v1619
      %1795 = vmatprep.subr.bf16.mxu0 0
      %1796 = vmatpush1.bf16.msra.mxu0 %v1618
      %1797 = vmatprep.subr.bf16.mxu0 0
      %1798 = vmatpush1.bf16.msra.mxu0 %v1617
      %1799 = vmatprep.subr.bf16.mxu0 0
      %1800 = vmatpush1.bf16.msra.mxu0 %v1616
      %1801 = vmatprep.subr.bf16.mxu0 0
      %1802 = vmatpush1.bf16.msra.mxu0 %v1615
      %1803 = vmatprep.subr.bf16.mxu0 0
      %1804 = vmatpush1.bf16.msra.mxu0 %v1614
      %1805 = vmatprep.subr.bf16.mxu0 0
      %1806 = vmatpush1.bf16.msra.mxu0 %v1613
      %1807 = vmatprep.subr.bf16.mxu0 0
      %1808 = vmatpush2.bf16.msra.mxu0 %v1628
      %1809 = vmatprep.subr.bf16.mxu0 0
      %1810 = vmatpush2.bf16.msra.mxu0 %v1627
      %1811 = vmatprep.subr.bf16.mxu0 0
      %1812 = vmatpush2.bf16.msra.mxu0 %v1626
      %1813 = vmatprep.subr.bf16.mxu0 0
      %1814 = vmatpush2.bf16.msra.mxu0 %v1625
      %1815 = vmatprep.subr.bf16.mxu0 0
      %1816 = vmatpush2.bf16.msra.mxu0 %v1624
      %1817 = vmatprep.subr.bf16.mxu0 0
      %1818 = vmatpush2.bf16.msra.mxu0 %v1623
      %1819 = vmatprep.subr.bf16.mxu0 0
      %1820 = vmatpush2.bf16.msra.mxu0 %v1622
      %1821 = vmatprep.subr.bf16.mxu0 0
      %1822 = vmatpush2.bf16.msra.mxu0 %v1621
      %1823 = vmatprep.mubr.bf16.mxu0 %v1230
      %1824 = vmatmul.mubr.bf16.gmra.mxu0 %v1229
      %v1825 = vpop.f32.mrf.mxu0
      %v1826 = vadd.f32 %v1777, %v1825
      %v1827 = vpop.f32.mrf.mxu0
      %v1828 = vpop.f32.mrf.mxu0
      %v1829 = vadd.f32 %v1780, %v1828
      %v1830 = vpop.f32.mrf.mxu0
      %1831 = vmatprep.mubr.bf16.mxu0 %v1237
      %1832 = vmatmul.mubr.bf16.gmra.mxu0 %v1236
      %v1833 = vpop.f32.mrf.mxu0
      %v1834 = vadd.f32 %v1785, %v1833
      %v1835 = vpop.f32.mrf.mxu0
      %v1836 = vpop.f32.mrf.mxu0
      %v1837 = vadd.f32 %v1788, %v1836
      %v1838 = vpop.f32.mrf.mxu0
      %1839 = vdwg.mxu0
      %1840 = vmatprep.subr.bf16.mxu0 0
      %1841 = vmatpush1.bf16.msra.mxu0 %v1636
      %1842 = vmatprep.subr.bf16.mxu0 0
      %1843 = vmatpush1.bf16.msra.mxu0 %v1635
      %1844 = vmatprep.subr.bf16.mxu0 0
      %1845 = vmatpush1.bf16.msra.mxu0 %v1634
      %1846 = vmatprep.subr.bf16.mxu0 0
      %1847 = vmatpush1.bf16.msra.mxu0 %v1633
      %1848 = vmatprep.subr.bf16.mxu0 0
      %1849 = vmatpush1.bf16.msra.mxu0 %v1632
      %1850 = vmatprep.subr.bf16.mxu0 0
      %1851 = vmatpush1.bf16.msra.mxu0 %v1631
      %1852 = vmatprep.subr.bf16.mxu0 0
      %1853 = vmatpush1.bf16.msra.mxu0 %v1630
      %1854 = vmatprep.subr.bf16.mxu0 0
      %1855 = vmatpush1.bf16.msra.mxu0 %v1629
      %1856 = vmatprep.subr.bf16.mxu0 0
      %1857 = vmatpush2.bf16.msra.mxu0 0
      %1858 = vmatprep.subr.bf16.mxu0 0
      %1859 = vmatpush2.bf16.msra.mxu0 0
      %1860 = vmatprep.subr.bf16.mxu0 0
      %1861 = vmatpush2.bf16.msra.mxu0 0
      %1862 = vmatprep.subr.bf16.mxu0 0
      %1863 = vmatpush2.bf16.msra.mxu0 0
      %1864 = vmatprep.subr.bf16.mxu0 0
      %1865 = vmatpush2.bf16.msra.mxu0 0
      %1866 = vmatprep.subr.bf16.mxu0 0
      %1867 = vmatpush2.bf16.msra.mxu0 0
      %1868 = vmatprep.subr.bf16.mxu0 0
      %1869 = vmatpush2.bf16.msra.mxu0 0
      %1870 = vmatprep.subr.bf16.mxu0 0
      %1871 = vmatpush2.bf16.msra.mxu0 0
      %1872 = vmatprep.mubr.bf16.mxu0 0
      %1873 = vmatmul.mubr.bf16.gmra.mxu0 %v1231
      %v1874 = vpop.f32.mrf.mxu0
      %v1875 = vadd.f32 %v1826, %v1874
      %v1876 = vpop.f32.mrf.mxu0
      %v1877 = vpop.f32.mrf.mxu0
      %v1878 = vadd.f32 %v1829, %v1877
      %v1879 = vpop.f32.mrf.mxu0
      %1880 = vmatprep.mubr.bf16.mxu0 0
      %1881 = vmatmul.mubr.bf16.gmra.mxu0 %v1238
      %v1882 = vpop.f32.mrf.mxu0
      %v1883 = vadd.f32 %v1834, %v1882
      %v1884 = vpop.f32.mrf.mxu0
      %v1885 = vpop.f32.mrf.mxu0
      %v1886 = vadd.f32 %v1837, %v1885
      %v1887 = vpop.f32.mrf.mxu0
      %1888 = vdwg.mxu0
      %v1889 = vmax.f32 %v1875, 0.0
      %v1890 = vmax.f32 %v1878, 0.0
      %v1891 = vmax.f32 %v1883, 0.0
      %v1892 = vmax.f32 %v1886, 0.0
      %v1893 = vsel %vm384, %v1889, 0.0
      %v1894 = vsel %vm385, %v1890, 0.0
      %v1895 = vsel %vm386, %v1891, 0.0
      %v1896 = vsel %vm387, %v1892, 0.0
      %v1897 = vld [vmem:[%s6] sm:$0x1]
      %v1899 = vlaneseq
      %v1900 = vshrl.u32 %v1899, 7
      %v1901 = vsub.s32 0, %v1900
      %v1902 = vrot.slane %v1897, %v1901
      %v1904 = vmul.f32 %v1893, %v1902
      %v1905 = vmul.f32 %v1894, %v1902
      %v1906 = vmul.f32 %v1895, %v1902
      %v1907 = vmul.f32 %v1896, %v1902
      %v1908 = vld [vmem:[%s7] sm:$0x1]
      %v1910 = vlaneseq
      %v1911 = vshrl.u32 %v1910, 7
      %v1912 = vsub.s32 0, %v1911
      %v1913 = vrot.slane %v1908, %v1912
      %v1915 = vadd.f32 %v1904, %v1913
      %v1916 = vadd.f32 %v1905, %v1913
      %v1917 = vadd.f32 %v1906, %v1913
      %v1918 = vadd.f32 %v1907, %v1913
      %v1919 = vsel %vm384, %v1915, 0.0
      %v1920 = vsel %vm385, %v1916, 0.0
      %v1921 = vsel %vm386, %v1917, 0.0
      %v1922 = vsel %vm387, %v1918, 0.0
      %v1923 = vadd.f32 %v1893, %v1147
      %v1924 = vadd.f32 %v1894, %v1148
      %v1925 = vadd.f32 %v1895, %v1149
      %v1926 = vadd.f32 %v1896, %v1150
      %v1927 = vsel %vm384, %v1923, -1e+30
      %v1928 = vsel %vm385, %v1924, -1e+30
      %v1929 = vsel %vm386, %v1925, -1e+30
      %v1930 = vsel %vm387, %v1926, -1e+30
      %v1931 = vmax.f32 %v1927, %v1928
      %v1932 = vmax.f32 %v1929, %v1930
      %v1933 = vmax.f32 %v1931, %v1932
      %v1934 = vrot.slane %v1933, 4
      %v1935 = vmax.f32 %v1933, %v1934
      %v1936 = vrot.slane %v1935, 2
      %v1937 = vmax.f32 %v1935, %v1936
      %v1938 = vrot.slane %v1937, 1
      %v1939 = vmax.f32 %v1937, %v1938
      %1940 = vst [vmem:[%s357 + $0x2] sm:$0x1] %v1939
      %v1941 = vadd.f32 %v1923, %v1924
      %v1942 = vadd.f32 %v1941, %v1925
      %v1943 = vadd.f32 %v1942, %v1926
      %v1944 = vrot.slane %v1943, 4
      %v1945 = vadd.f32 %v1943, %v1944
      %v1946 = vrot.slane %v1945, 2
      %v1947 = vadd.f32 %v1945, %v1946
      %v1948 = vrot.slane %v1947, 1
      %v1949 = vadd.f32 %v1947, %v1948
      %v1950 = vmul.f32 %v1949, 0.04347826
      %1951 = vst [vmem:[%s357 + $0x6] sm:$0x1] %v1950
      %v1952 = vld [vmem:[%s9] sm:$0x1]
      %v1953 = vrot.slane %v1919, 5
      %v1954 = vrot.slane %v1920, 5
      %v1955 = vrot.slane %v1921, 5
      %v1956 = vrot.slane %v1922, 5
      %v1957 = vsel %vm418, %v1955, %v1956
      %v1958 = vsel %vm418, %v1954, %v1955
      %v1959 = vsel %vm418, %v1953, %v1954
      %v1960 = vsel %vm418, %v1956, %v1953
      %v1961 = vrot.slane %v1919, 6
      %v1962 = vrot.slane %v1920, 6
      %v1963 = vrot.slane %v1921, 6
      %v1964 = vrot.slane %v1922, 6
      %v1965 = vsel %vm427, %v1963, %v1964
      %v1966 = vsel %vm427, %v1962, %v1963
      %v1967 = vsel %vm427, %v1961, %v1962
      %v1968 = vsel %vm427, %v1964, %v1961
      %v1969 = vrot.slane %v1919, 7
      %v1970 = vrot.slane %v1920, 7
      %v1971 = vrot.slane %v1921, 7
      %v1972 = vrot.slane %v1922, 7
      %v1973 = vsel %vm436, %v1971, %v1972
      %v1974 = vsel %vm436, %v1970, %v1971
      %v1975 = vsel %vm436, %v1969, %v1970
      %v1976 = vsel %vm436, %v1972, %v1969
      %v1977 = vrot.slane %v1919, 1
      %v1978 = vrot.slane %v1920, 1
      %v1979 = vrot.slane %v1921, 1
      %v1980 = vrot.slane %v1922, 1
      %v1981 = vsel %vm445, %v1979, %v1980
      %v1982 = vsel %vm445, %v1978, %v1979
      %v1983 = vsel %vm445, %v1977, %v1978
      %v1984 = vsel %vm445, %v1980, %v1977
      %v1985 = vrot.slane %v1919, 2
      %v1986 = vrot.slane %v1920, 2
      %v1987 = vrot.slane %v1921, 2
      %v1988 = vrot.slane %v1922, 2
      %v1989 = vsel %vm454, %v1987, %v1988
      %v1990 = vsel %vm454, %v1986, %v1987
      %v1991 = vsel %vm454, %v1985, %v1986
      %v1992 = vsel %vm454, %v1988, %v1985
      %v1993 = vrot.slane %v1919, 3
      %v1994 = vrot.slane %v1920, 3
      %v1995 = vrot.slane %v1921, 3
      %v1996 = vrot.slane %v1922, 3
      %v1997 = vsel %vm463, %v1995, %v1996
      %v1998 = vsel %vm463, %v1994, %v1995
      %v1999 = vsel %vm463, %v1993, %v1994
      %v2000 = vsel %vm463, %v1996, %v1993
      %v2001 = vpack.c.bf16 %v1959, %v1960
      %v2002 = vpack.c.bf16 %v1967, %v1968
      %v2003 = vpack.c.bf16 %v1975, %v1976
      %v2004 = vpack.c.bf16 %v1920, %v1919
      %v2005 = vpack.c.bf16 %v1982, %v1983
      %v2006 = vpack.c.bf16 %v1990, %v1991
      %v2007 = vpack.c.bf16 %v1998, %v1999
      %v2008 = vpack.c.bf16 %v1957, %v1958
      %v2009 = vpack.c.bf16 %v1965, %v1966
      %v2010 = vpack.c.bf16 %v1973, %v1974
      %v2011 = vpack.c.bf16 %v1922, %v1921
      %v2012 = vpack.c.bf16 %v1984, %v1981
      %v2013 = vpack.c.bf16 %v1992, %v1989
      %v2014 = vpack.c.bf16 %v2000, %v1997
      %v2015 = vld [vmem:[%s8] sm:$0xf]
      %v2016 = vld [vmem:[%s8 + $0x4] sm:$0xf]
      %v2017 = vld [vmem:[%s8 + $0x8] sm:$0xf]
      %v2018 = vld [vmem:[%s8 + $0xc] sm:$0xf]
      %v2019 = vld [vmem:[%s8 + $0x10] sm:$0xf]
      %v2020 = vld [vmem:[%s8 + $0x14] sm:$0xf]
      %v2021 = vld [vmem:[%s8 + $0x18] sm:$0xf]
      %v2022 = vld [vmem:[%s8 + $0x1c] sm:$0xf]
      %v2023 = vld [vmem:[%s8 + $0x20] sm:$0xf]
      %v2024 = vld [vmem:[%s8 + $0x24] sm:$0xf]
      %v2025 = vld [vmem:[%s8 + $0x28] sm:$0xf]
      %v2026 = vld [vmem:[%s8 + $0x2c] sm:$0xf]
      %v2027 = vld [vmem:[%s8 + $0x30] sm:$0xf]
      %v2028 = vld [vmem:[%s8 + $0x34] sm:$0xf]
      %v2029 = vld [vmem:[%s8 + $0x38] sm:$0xf]
      %v2030 = vld [vmem:[%s8 + $0x3c] sm:$0xf]
      %v2031 = vld [vmem:[%s8 + $0x40] sm:$0xf]
      %v2032 = vld [vmem:[%s8 + $0x44] sm:$0xf]
      %v2033 = vld [vmem:[%s8 + $0x48] sm:$0xf]
      %v2034 = vld [vmem:[%s8 + $0x4c] sm:$0xf]
      %v2035 = vld [vmem:[%s8 + $0x50] sm:$0xf]
      %v2036 = vld [vmem:[%s8 + $0x54] sm:$0xf]
      %v2037 = vld [vmem:[%s8 + $0x58] sm:$0xf]
      %v2038 = vld [vmem:[%s8 + $0x5c] sm:$0xf]
      %v2039 = vld [vmem:[%s8 + $0x60] sm:$0xf]
      %v2040 = vld [vmem:[%s8 + $0x64] sm:$0xf]
      %v2041 = vld [vmem:[%s8 + $0x68] sm:$0xf]
      %v2042 = vld [vmem:[%s8 + $0x6c] sm:$0xf]
      %v2043 = vld [vmem:[%s8 + $0x70] sm:$0xf]
      %v2044 = vld [vmem:[%s8 + $0x74] sm:$0xf]
      %v2045 = vld [vmem:[%s8 + $0x78] sm:$0xf]
      %v2046 = vld [vmem:[%s8 + $0x7c] sm:$0xf]
      %v2047 = vld [vmem:[%s8 + $0x80] sm:$0xf]
      %v2048 = vld [vmem:[%s8 + $0x84] sm:$0xf]
      %v2049 = vld [vmem:[%s8 + $0x88] sm:$0xf]
      %v2050 = vld [vmem:[%s8 + $0x8c] sm:$0xf]
      %v2051 = vld [vmem:[%s8 + $0x90] sm:$0xf]
      %v2052 = vld [vmem:[%s8 + $0x94] sm:$0xf]
      %v2053 = vld [vmem:[%s8 + $0x98] sm:$0xf]
      %v2054 = vld [vmem:[%s8 + $0x9c] sm:$0xf]
      %v2055 = vld [vmem:[%s8 + $0xa0] sm:$0xf]
      %v2056 = vld [vmem:[%s8 + $0xa4] sm:$0xf]
      %v2057 = vld [vmem:[%s8 + $0xa8] sm:$0xf]
      %v2058 = vld [vmem:[%s8 + $0xac] sm:$0xf]
      %v2059 = vld [vmem:[%s8 + $0xb0] sm:$0xf]
      %v2060 = vld [vmem:[%s8 + $0xb4] sm:$0xf]
      %v2061 = vld [vmem:[%s8 + $0xb8] sm:$0xf]
      %v2062 = vld [vmem:[%s8 + $0xbc] sm:$0xf]
      %v2063 = vld [vmem:[%s8 + $0xc0] sm:$0xf]
      %v2064 = vld [vmem:[%s8 + $0xc4] sm:$0xf]
      %v2065 = vld [vmem:[%s8 + $0xc8] sm:$0xf]
      %v2066 = vld [vmem:[%s8 + $0xcc] sm:$0xf]
      %v2067 = vld [vmem:[%s8 + $0xd0] sm:$0xf]
      %v2068 = vld [vmem:[%s8 + $0xd4] sm:$0xf]
      %v2069 = vld [vmem:[%s8 + $0xd8] sm:$0xf]
      %v2070 = vld [vmem:[%s8 + $0xdc] sm:$0xf]
      %v2071 = vld [vmem:[%s8 + $0xe0] sm:$0xf]
      %v2072 = vld [vmem:[%s8 + $0xe4] sm:$0xf]
      %v2073 = vld [vmem:[%s8 + $0xe8] sm:$0xf]
      %v2074 = vld [vmem:[%s8 + $0xec] sm:$0xf]
      %v2075 = vld [vmem:[%s8 + $0xf0] sm:$0xf]
      %v2076 = vld [vmem:[%s8 + $0xf4] sm:$0xf]
      %v2077 = vld [vmem:[%s8 + $0xf8] sm:$0xf]
      %v2078 = vld [vmem:[%s8 + $0xfc] sm:$0xf]
      %v2079 = vld [vmem:[%s8 + $0x100] sm:$0xf]
      %v2080 = vld [vmem:[%s8 + $0x104] sm:$0xf]
      %v2081 = vld [vmem:[%s8 + $0x108] sm:$0xf]
      %v2082 = vld [vmem:[%s8 + $0x10c] sm:$0xf]
      %v2083 = vld [vmem:[%s8 + $0x110] sm:$0xf]
      %v2084 = vld [vmem:[%s8 + $0x114] sm:$0xf]
      %v2085 = vld [vmem:[%s8 + $0x118] sm:$0xf]
      %v2086 = vld [vmem:[%s8 + $0x11c] sm:$0xf]
      %v2087 = vld [vmem:[%s8 + $0x120] sm:$0xf]
      %v2088 = vld [vmem:[%s8 + $0x124] sm:$0xf]
      %v2089 = vld [vmem:[%s8 + $0x128] sm:$0xf]
      %v2090 = vld [vmem:[%s8 + $0x12c] sm:$0xf]
      %v2091 = vld [vmem:[%s8 + $0x130] sm:$0xf]
      %v2092 = vld [vmem:[%s8 + $0x134] sm:$0xf]
      %v2093 = vld [vmem:[%s8 + $0x138] sm:$0xf]
      %v2094 = vld [vmem:[%s8 + $0x13c] sm:$0xf]
      %v2095 = vld [vmem:[%s8 + $0x140] sm:$0xf]
      %v2096 = vld [vmem:[%s8 + $0x144] sm:$0xf]
      %v2097 = vld [vmem:[%s8 + $0x148] sm:$0xf]
      %v2098 = vld [vmem:[%s8 + $0x14c] sm:$0xf]
      %v2099 = vld [vmem:[%s8 + $0x150] sm:$0xf]
      %v2100 = vld [vmem:[%s8 + $0x154] sm:$0xf]
      %v2101 = vld [vmem:[%s8 + $0x158] sm:$0xf]
      %v2102 = vld [vmem:[%s8 + $0x15c] sm:$0xf]
      %v2103 = vld [vmem:[%s8 + $0x160] sm:$0xf]
      %v2104 = vld [vmem:[%s8 + $0x164] sm:$0xf]
      %v2105 = vld [vmem:[%s8 + $0x168] sm:$0xf]
      %v2106 = vld [vmem:[%s8 + $0x16c] sm:$0xf]
      %v2107 = vld [vmem:[%s8 + $0x170] sm:$0xf]
      %v2108 = vld [vmem:[%s8 + $0x174] sm:$0xf]
      %v2109 = vld [vmem:[%s8 + $0x178] sm:$0xf]
      %v2110 = vld [vmem:[%s8 + $0x17c] sm:$0xf]
      %v2111 = vld [vmem:[%s8 + $0x180] sm:$0xf]
      %v2112 = vld [vmem:[%s8 + $0x184] sm:$0xf]
      %v2113 = vld [vmem:[%s8 + $0x188] sm:$0xf]
      %v2114 = vld [vmem:[%s8 + $0x18c] sm:$0xf]
      %v2115 = vld [vmem:[%s8 + $0x190] sm:$0xf]
      %v2116 = vld [vmem:[%s8 + $0x194] sm:$0xf]
      %v2117 = vld [vmem:[%s8 + $0x198] sm:$0xf]
      %v2118 = vld [vmem:[%s8 + $0x19c] sm:$0xf]
      %v2119 = vld [vmem:[%s8 + $0x1a0] sm:$0xf]
      %v2120 = vld [vmem:[%s8 + $0x1a4] sm:$0xf]
      %v2121 = vld [vmem:[%s8 + $0x1a8] sm:$0xf]
      %v2122 = vld [vmem:[%s8 + $0x1ac] sm:$0xf]
      %v2123 = vld [vmem:[%s8 + $0x1b0] sm:$0xf]
      %v2124 = vld [vmem:[%s8 + $0x1b4] sm:$0xf]
      %v2125 = vld [vmem:[%s8 + $0x1b8] sm:$0xf]
      %v2126 = vld [vmem:[%s8 + $0x1bc] sm:$0xf]
      %v2128 = vlaneseq
      %v2129 = vshrl.u32 %v2128, 7
      %v2130 = vsub.s32 0, %v2129
      %v2131 = vrot.slane %v1952, %v2130
      %v2245 = vunpack.c.l.b16 %v2015
      %v2246 = vunpack.c.l.b16 %v2016
      %v2247 = vunpack.c.l.b16 %v2017
      %v2248 = vunpack.c.l.b16 %v2018
      %v2249 = vunpack.c.l.b16 %v2019
      %v2250 = vunpack.c.l.b16 %v2020
      %v2251 = vunpack.c.l.b16 %v2021
      %v2252 = vunpack.c.l.b16 %v2022
      %v2253 = vunpack.c.l.b16 %v2023
      %v2254 = vunpack.c.l.b16 %v2024
      %v2255 = vunpack.c.l.b16 %v2025
      %v2256 = vunpack.c.l.b16 %v2026
      %v2257 = vunpack.c.l.b16 %v2027
      %v2258 = vunpack.c.l.b16 %v2028
      %v2259 = vunpack.c.l.b16 %v2029
      %v2260 = vunpack.c.l.b16 %v2030
      %v2261 = vunpack.c.l.b16 %v2031
      %v2262 = vunpack.c.l.b16 %v2032
      %v2263 = vunpack.c.l.b16 %v2033
      %v2264 = vunpack.c.l.b16 %v2034
      %v2265 = vunpack.c.l.b16 %v2035
      %v2266 = vunpack.c.l.b16 %v2036
      %v2267 = vunpack.c.l.b16 %v2037
      %v2268 = vunpack.c.l.b16 %v2038
      %v2269 = vunpack.c.l.b16 %v2039
      %v2270 = vunpack.c.l.b16 %v2040
      %v2271 = vunpack.c.l.b16 %v2041
      %v2272 = vunpack.c.l.b16 %v2042
      %v2273 = vunpack.c.l.b16 %v2043
      %v2274 = vunpack.c.l.b16 %v2044
      %v2275 = vunpack.c.l.b16 %v2045
      %v2276 = vunpack.c.l.b16 %v2046
      %v2277 = vunpack.c.l.b16 %v2047
      %v2278 = vunpack.c.l.b16 %v2048
      %v2279 = vunpack.c.l.b16 %v2049
      %v2280 = vunpack.c.l.b16 %v2050
      %v2281 = vunpack.c.l.b16 %v2051
      %v2282 = vunpack.c.l.b16 %v2052
      %v2283 = vunpack.c.l.b16 %v2053
      %v2284 = vunpack.c.l.b16 %v2054
      %v2285 = vunpack.c.l.b16 %v2055
      %v2286 = vunpack.c.l.b16 %v2056
      %v2287 = vunpack.c.l.b16 %v2057
      %v2288 = vunpack.c.l.b16 %v2058
      %v2289 = vunpack.c.l.b16 %v2059
      %v2290 = vunpack.c.l.b16 %v2060
      %v2291 = vunpack.c.l.b16 %v2061
      %v2292 = vunpack.c.l.b16 %v2062
      %v2293 = vunpack.c.l.b16 %v2063
      %v2294 = vunpack.c.l.b16 %v2064
      %v2295 = vunpack.c.l.b16 %v2065
      %v2296 = vunpack.c.l.b16 %v2066
      %v2297 = vunpack.c.l.b16 %v2067
      %v2298 = vunpack.c.l.b16 %v2068
      %v2299 = vunpack.c.l.b16 %v2069
      %v2300 = vunpack.c.l.b16 %v2070
      %v2301 = vunpack.c.l.b16 %v2071
      %v2302 = vunpack.c.l.b16 %v2072
      %v2303 = vunpack.c.l.b16 %v2073
      %v2304 = vunpack.c.l.b16 %v2074
      %v2305 = vunpack.c.l.b16 %v2075
      %v2306 = vunpack.c.l.b16 %v2076
      %v2307 = vunpack.c.l.b16 %v2077
      %v2308 = vunpack.c.l.b16 %v2078
      %v2309 = vunpack.c.l.b16 %v2079
      %v2310 = vunpack.c.l.b16 %v2080
      %v2311 = vunpack.c.l.b16 %v2081
      %v2312 = vunpack.c.l.b16 %v2082
      %v2313 = vunpack.c.l.b16 %v2083
      %v2314 = vunpack.c.l.b16 %v2084
      %v2315 = vunpack.c.l.b16 %v2085
      %v2316 = vunpack.c.l.b16 %v2086
      %v2317 = vunpack.c.l.b16 %v2087
      %v2318 = vunpack.c.l.b16 %v2088
      %v2319 = vunpack.c.l.b16 %v2089
      %v2320 = vunpack.c.l.b16 %v2090
      %v2321 = vunpack.c.l.b16 %v2091
      %v2322 = vunpack.c.l.b16 %v2092
      %v2323 = vunpack.c.l.b16 %v2093
      %v2324 = vunpack.c.l.b16 %v2094
      %v2325 = vunpack.c.l.b16 %v2095
      %v2326 = vunpack.c.l.b16 %v2096
      %v2327 = vunpack.c.l.b16 %v2097
      %v2328 = vunpack.c.l.b16 %v2098
      %v2329 = vunpack.c.l.b16 %v2099
      %v2330 = vunpack.c.l.b16 %v2100
      %v2331 = vunpack.c.l.b16 %v2101
      %v2332 = vunpack.c.l.b16 %v2102
      %v2333 = vunpack.c.l.b16 %v2103
      %v2334 = vunpack.c.l.b16 %v2104
      %v2335 = vunpack.c.l.b16 %v2105
      %v2336 = vunpack.c.l.b16 %v2106
      %v2337 = vunpack.c.l.b16 %v2107
      %v2338 = vunpack.c.l.b16 %v2108
      %v2339 = vunpack.c.l.b16 %v2109
      %v2340 = vunpack.c.l.b16 %v2110
      %v2341 = vunpack.c.l.b16 %v2111
      %v2342 = vunpack.c.l.b16 %v2112
      %v2343 = vunpack.c.l.b16 %v2113
      %v2344 = vunpack.c.l.b16 %v2114
      %v2345 = vunpack.c.l.b16 %v2115
      %v2346 = vunpack.c.l.b16 %v2116
      %v2347 = vunpack.c.l.b16 %v2117
      %v2348 = vunpack.c.l.b16 %v2118
      %v2349 = vunpack.c.l.b16 %v2119
      %v2350 = vunpack.c.l.b16 %v2120
      %v2351 = vunpack.c.l.b16 %v2121
      %v2352 = vunpack.c.l.b16 %v2122
      %v2353 = vunpack.c.l.b16 %v2123
      %v2354 = vunpack.c.l.b16 %v2124
      %v2355 = vunpack.c.l.b16 %v2125
      %v2356 = vunpack.c.l.b16 %v2126
      %v2357 = vpack.c.b16 %v2246, %v2245
      %v2358 = vpack.c.b16 %v2248, %v2247
      %v2359 = vpack.c.b16 %v2250, %v2249
      %v2360 = vpack.c.b16 %v2252, %v2251
      %v2361 = vpack.c.b16 %v2254, %v2253
      %v2362 = vpack.c.b16 %v2256, %v2255
      %v2363 = vpack.c.b16 %v2258, %v2257
      %v2364 = vpack.c.b16 %v2260, %v2259
      %v2365 = vpack.c.b16 %v2262, %v2261
      %v2366 = vpack.c.b16 %v2264, %v2263
      %v2367 = vpack.c.b16 %v2266, %v2265
      %v2368 = vpack.c.b16 %v2268, %v2267
      %v2369 = vpack.c.b16 %v2270, %v2269
      %v2370 = vpack.c.b16 %v2272, %v2271
      %v2371 = vpack.c.b16 %v2274, %v2273
      %v2372 = vpack.c.b16 %v2276, %v2275
      %v2373 = vpack.c.b16 %v2278, %v2277
      %v2374 = vpack.c.b16 %v2280, %v2279
      %v2375 = vpack.c.b16 %v2282, %v2281
      %v2376 = vpack.c.b16 %v2284, %v2283
      %v2377 = vpack.c.b16 %v2286, %v2285
      %v2378 = vpack.c.b16 %v2288, %v2287
      %v2379 = vpack.c.b16 %v2290, %v2289
      %v2380 = vpack.c.b16 %v2292, %v2291
      %v2381 = vpack.c.b16 %v2294, %v2293
      %v2382 = vpack.c.b16 %v2296, %v2295
      %v2383 = vpack.c.b16 %v2298, %v2297
      %v2384 = vpack.c.b16 %v2300, %v2299
      %v2385 = vpack.c.b16 %v2302, %v2301
      %v2386 = vpack.c.b16 %v2304, %v2303
      %v2387 = vpack.c.b16 %v2306, %v2305
      %v2388 = vpack.c.b16 %v2308, %v2307
      %v2389 = vpack.c.b16 %v2310, %v2309
      %v2390 = vpack.c.b16 %v2312, %v2311
      %v2391 = vpack.c.b16 %v2314, %v2313
      %v2392 = vpack.c.b16 %v2316, %v2315
      %v2393 = vpack.c.b16 %v2318, %v2317
      %v2394 = vpack.c.b16 %v2320, %v2319
      %v2395 = vpack.c.b16 %v2322, %v2321
      %v2396 = vpack.c.b16 %v2324, %v2323
      %v2397 = vpack.c.b16 %v2326, %v2325
      %v2398 = vpack.c.b16 %v2328, %v2327
      %v2399 = vpack.c.b16 %v2330, %v2329
      %v2400 = vpack.c.b16 %v2332, %v2331
      %v2401 = vpack.c.b16 %v2334, %v2333
      %v2402 = vpack.c.b16 %v2336, %v2335
      %v2403 = vpack.c.b16 %v2338, %v2337
      %v2404 = vpack.c.b16 %v2340, %v2339
      %v2405 = vpack.c.b16 %v2342, %v2341
      %v2406 = vpack.c.b16 %v2344, %v2343
      %v2407 = vpack.c.b16 %v2346, %v2345
      %v2408 = vpack.c.b16 %v2348, %v2347
      %v2409 = vpack.c.b16 %v2350, %v2349
      %v2410 = vpack.c.b16 %v2352, %v2351
      %v2411 = vpack.c.b16 %v2354, %v2353
      %v2412 = vpack.c.b16 %v2356, %v2355
      %2469 = vmatprep.subr.bf16.mxu0 0
      %2470 = vmatpush1.bf16.msra.mxu0 %v2364
      %2471 = vmatprep.subr.bf16.mxu0 0
      %2472 = vmatpush1.bf16.msra.mxu0 %v2363
      %2473 = vmatprep.subr.bf16.mxu0 0
      %2474 = vmatpush1.bf16.msra.mxu0 %v2362
      %2475 = vmatprep.subr.bf16.mxu0 0
      %2476 = vmatpush1.bf16.msra.mxu0 %v2361
      %2477 = vmatprep.subr.bf16.mxu0 0
      %2478 = vmatpush1.bf16.msra.mxu0 %v2360
      %2479 = vmatprep.subr.bf16.mxu0 0
      %2480 = vmatpush1.bf16.msra.mxu0 %v2359
      %2481 = vmatprep.subr.bf16.mxu0 0
      %2482 = vmatpush1.bf16.msra.mxu0 %v2358
      %2483 = vmatprep.subr.bf16.mxu0 0
      %2484 = vmatpush1.bf16.msra.mxu0 %v2357
      %2485 = vmatprep.subr.bf16.mxu0 0
      %2486 = vmatpush2.bf16.msra.mxu0 %v2372
      %2487 = vmatprep.subr.bf16.mxu0 0
      %2488 = vmatpush2.bf16.msra.mxu0 %v2371
      %2489 = vmatprep.subr.bf16.mxu0 0
      %2490 = vmatpush2.bf16.msra.mxu0 %v2370
      %2491 = vmatprep.subr.bf16.mxu0 0
      %2492 = vmatpush2.bf16.msra.mxu0 %v2369
      %2493 = vmatprep.subr.bf16.mxu0 0
      %2494 = vmatpush2.bf16.msra.mxu0 %v2368
      %2495 = vmatprep.subr.bf16.mxu0 0
      %2496 = vmatpush2.bf16.msra.mxu0 %v2367
      %2497 = vmatprep.subr.bf16.mxu0 0
      %2498 = vmatpush2.bf16.msra.mxu0 %v2366
      %2499 = vmatprep.subr.bf16.mxu0 0
      %2500 = vmatpush2.bf16.msra.mxu0 %v2365
      %2501 = vmatprep.mubr.bf16.mxu0 %v2002
      %2502 = vmatmul.mubr.bf16.gmra.mxu0 %v2001
      %v2503 = vpop.f32.mrf.mxu0
      %v2504 = vadd.f32 %v2131, %v2503
      %v2505 = vpop.f32.mrf.mxu0
      %v2506 = vpop.f32.mrf.mxu0
      %v2507 = vadd.f32 %v2131, %v2506
      %v2508 = vpop.f32.mrf.mxu0
      %2509 = vmatprep.mubr.bf16.mxu0 %v2009
      %2510 = vmatmul.mubr.bf16.gmra.mxu0 %v2008
      %v2511 = vpop.f32.mrf.mxu0
      %v2512 = vadd.f32 %v2131, %v2511
      %v2513 = vpop.f32.mrf.mxu0
      %v2514 = vpop.f32.mrf.mxu0
      %v2515 = vadd.f32 %v2131, %v2514
      %v2516 = vpop.f32.mrf.mxu0
      %2517 = vdwg.mxu0
      %2518 = vmatprep.subr.bf16.mxu0 0
      %2519 = vmatpush1.bf16.msra.mxu0 %v2380
      %2520 = vmatprep.subr.bf16.mxu0 0
      %2521 = vmatpush1.bf16.msra.mxu0 %v2379
      %2522 = vmatprep.subr.bf16.mxu0 0
      %2523 = vmatpush1.bf16.msra.mxu0 %v2378
      %2524 = vmatprep.subr.bf16.mxu0 0
      %2525 = vmatpush1.bf16.msra.mxu0 %v2377
      %2526 = vmatprep.subr.bf16.mxu0 0
      %2527 = vmatpush1.bf16.msra.mxu0 %v2376
      %2528 = vmatprep.subr.bf16.mxu0 0
      %2529 = vmatpush1.bf16.msra.mxu0 %v2375
      %2530 = vmatprep.subr.bf16.mxu0 0
      %2531 = vmatpush1.bf16.msra.mxu0 %v2374
      %2532 = vmatprep.subr.bf16.mxu0 0
      %2533 = vmatpush1.bf16.msra.mxu0 %v2373
      %2534 = vmatprep.subr.bf16.mxu0 0
      %2535 = vmatpush2.bf16.msra.mxu0 %v2388
      %2536 = vmatprep.subr.bf16.mxu0 0
      %2537 = vmatpush2.bf16.msra.mxu0 %v2387
      %2538 = vmatprep.subr.bf16.mxu0 0
      %2539 = vmatpush2.bf16.msra.mxu0 %v2386
      %2540 = vmatprep.subr.bf16.mxu0 0
      %2541 = vmatpush2.bf16.msra.mxu0 %v2385
      %2542 = vmatprep.subr.bf16.mxu0 0
      %2543 = vmatpush2.bf16.msra.mxu0 %v2384
      %2544 = vmatprep.subr.bf16.mxu0 0
      %2545 = vmatpush2.bf16.msra.mxu0 %v2383
      %2546 = vmatprep.subr.bf16.mxu0 0
      %2547 = vmatpush2.bf16.msra.mxu0 %v2382
      %2548 = vmatprep.subr.bf16.mxu0 0
      %2549 = vmatpush2.bf16.msra.mxu0 %v2381
      %2550 = vmatprep.mubr.bf16.mxu0 %v2004
      %2551 = vmatmul.mubr.bf16.gmra.mxu0 %v2003
      %v2552 = vpop.f32.mrf.mxu0
      %v2553 = vadd.f32 %v2504, %v2552
      %v2554 = vpop.f32.mrf.mxu0
      %v2555 = vpop.f32.mrf.mxu0
      %v2556 = vadd.f32 %v2507, %v2555
      %v2557 = vpop.f32.mrf.mxu0
      %2558 = vmatprep.mubr.bf16.mxu0 %v2011
      %2559 = vmatmul.mubr.bf16.gmra.mxu0 %v2010
      %v2560 = vpop.f32.mrf.mxu0
      %v2561 = vadd.f32 %v2512, %v2560
      %v2562 = vpop.f32.mrf.mxu0
      %v2563 = vpop.f32.mrf.mxu0
      %v2564 = vadd.f32 %v2515, %v2563
      %v2565 = vpop.f32.mrf.mxu0
      %2566 = vdwg.mxu0
      %2567 = vmatprep.subr.bf16.mxu0 0
      %2568 = vmatpush1.bf16.msra.mxu0 %v2396
      %2569 = vmatprep.subr.bf16.mxu0 0
      %2570 = vmatpush1.bf16.msra.mxu0 %v2395
      %2571 = vmatprep.subr.bf16.mxu0 0
      %2572 = vmatpush1.bf16.msra.mxu0 %v2394
      %2573 = vmatprep.subr.bf16.mxu0 0
      %2574 = vmatpush1.bf16.msra.mxu0 %v2393
      %2575 = vmatprep.subr.bf16.mxu0 0
      %2576 = vmatpush1.bf16.msra.mxu0 %v2392
      %2577 = vmatprep.subr.bf16.mxu0 0
      %2578 = vmatpush1.bf16.msra.mxu0 %v2391
      %2579 = vmatprep.subr.bf16.mxu0 0
      %2580 = vmatpush1.bf16.msra.mxu0 %v2390
      %2581 = vmatprep.subr.bf16.mxu0 0
      %2582 = vmatpush1.bf16.msra.mxu0 %v2389
      %2583 = vmatprep.subr.bf16.mxu0 0
      %2584 = vmatpush2.bf16.msra.mxu0 %v2404
      %2585 = vmatprep.subr.bf16.mxu0 0
      %2586 = vmatpush2.bf16.msra.mxu0 %v2403
      %2587 = vmatprep.subr.bf16.mxu0 0
      %2588 = vmatpush2.bf16.msra.mxu0 %v2402
      %2589 = vmatprep.subr.bf16.mxu0 0
      %2590 = vmatpush2.bf16.msra.mxu0 %v2401
      %2591 = vmatprep.subr.bf16.mxu0 0
      %2592 = vmatpush2.bf16.msra.mxu0 %v2400
      %2593 = vmatprep.subr.bf16.mxu0 0
      %2594 = vmatpush2.bf16.msra.mxu0 %v2399
      %2595 = vmatprep.subr.bf16.mxu0 0
      %2596 = vmatpush2.bf16.msra.mxu0 %v2398
      %2597 = vmatprep.subr.bf16.mxu0 0
      %2598 = vmatpush2.bf16.msra.mxu0 %v2397
      %2599 = vmatprep.mubr.bf16.mxu0 %v2006
      %2600 = vmatmul.mubr.bf16.gmra.mxu0 %v2005
      %v2601 = vpop.f32.mrf.mxu0
      %v2602 = vadd.f32 %v2553, %v2601
      %v2603 = vpop.f32.mrf.mxu0
      %v2604 = vpop.f32.mrf.mxu0
      %v2605 = vadd.f32 %v2556, %v2604
      %v2606 = vpop.f32.mrf.mxu0
      %2607 = vmatprep.mubr.bf16.mxu0 %v2013
      %2608 = vmatmul.mubr.bf16.gmra.mxu0 %v2012
      %v2609 = vpop.f32.mrf.mxu0
      %v2610 = vadd.f32 %v2561, %v2609
      %v2611 = vpop.f32.mrf.mxu0
      %v2612 = vpop.f32.mrf.mxu0
      %v2613 = vadd.f32 %v2564, %v2612
      %v2614 = vpop.f32.mrf.mxu0
      %2615 = vdwg.mxu0
      %2616 = vmatprep.subr.bf16.mxu0 0
      %2617 = vmatpush1.bf16.msra.mxu0 %v2412
      %2618 = vmatprep.subr.bf16.mxu0 0
      %2619 = vmatpush1.bf16.msra.mxu0 %v2411
      %2620 = vmatprep.subr.bf16.mxu0 0
      %2621 = vmatpush1.bf16.msra.mxu0 %v2410
      %2622 = vmatprep.subr.bf16.mxu0 0
      %2623 = vmatpush1.bf16.msra.mxu0 %v2409
      %2624 = vmatprep.subr.bf16.mxu0 0
      %2625 = vmatpush1.bf16.msra.mxu0 %v2408
      %2626 = vmatprep.subr.bf16.mxu0 0
      %2627 = vmatpush1.bf16.msra.mxu0 %v2407
      %2628 = vmatprep.subr.bf16.mxu0 0
      %2629 = vmatpush1.bf16.msra.mxu0 %v2406
      %2630 = vmatprep.subr.bf16.mxu0 0
      %2631 = vmatpush1.bf16.msra.mxu0 %v2405
      %2632 = vmatprep.subr.bf16.mxu0 0
      %2633 = vmatpush2.bf16.msra.mxu0 0
      %2634 = vmatprep.subr.bf16.mxu0 0
      %2635 = vmatpush2.bf16.msra.mxu0 0
      %2636 = vmatprep.subr.bf16.mxu0 0
      %2637 = vmatpush2.bf16.msra.mxu0 0
      %2638 = vmatprep.subr.bf16.mxu0 0
      %2639 = vmatpush2.bf16.msra.mxu0 0
      %2640 = vmatprep.subr.bf16.mxu0 0
      %2641 = vmatpush2.bf16.msra.mxu0 0
      %2642 = vmatprep.subr.bf16.mxu0 0
      %2643 = vmatpush2.bf16.msra.mxu0 0
      %2644 = vmatprep.subr.bf16.mxu0 0
      %2645 = vmatpush2.bf16.msra.mxu0 0
      %2646 = vmatprep.subr.bf16.mxu0 0
      %2647 = vmatpush2.bf16.msra.mxu0 0
      %2648 = vmatprep.mubr.bf16.mxu0 0
      %2649 = vmatmul.mubr.bf16.gmra.mxu0 %v2007
      %v2650 = vpop.f32.mrf.mxu0
      %v2651 = vadd.f32 %v2602, %v2650
      %v2652 = vpop.f32.mrf.mxu0
      %v2653 = vpop.f32.mrf.mxu0
      %v2654 = vadd.f32 %v2605, %v2653
      %v2655 = vpop.f32.mrf.mxu0
      %2656 = vmatprep.mubr.bf16.mxu0 0
      %2657 = vmatmul.mubr.bf16.gmra.mxu0 %v2014
      %v2658 = vpop.f32.mrf.mxu0
      %v2659 = vadd.f32 %v2610, %v2658
      %v2660 = vpop.f32.mrf.mxu0
      %v2661 = vpop.f32.mrf.mxu0
      %v2662 = vadd.f32 %v2613, %v2661
      %v2663 = vpop.f32.mrf.mxu0
      %2664 = vdwg.mxu0
      %v2665 = vmax.f32 %v2651, 0.0
      %v2666 = vmax.f32 %v2654, 0.0
      %v2667 = vmax.f32 %v2659, 0.0
      %v2668 = vmax.f32 %v2662, 0.0
      %v2669 = vsel %vm384, %v2665, 0.0
      %v2670 = vsel %vm385, %v2666, 0.0
      %v2671 = vsel %vm386, %v2667, 0.0
      %v2672 = vsel %vm387, %v2668, 0.0
      %v2673 = vadd.f32 %v1923, %v2669
      %v2674 = vadd.f32 %v1924, %v2670
      %v2675 = vadd.f32 %v1925, %v2671
      %v2676 = vadd.f32 %v1926, %v2672
      %v2677 = vsel %vm384, %v2673, -1e+30
      %v2678 = vsel %vm385, %v2674, -1e+30
      %v2679 = vsel %vm386, %v2675, -1e+30
      %v2680 = vsel %vm387, %v2676, -1e+30
      %v2681 = vmax.f32 %v2677, %v2678
      %v2682 = vmax.f32 %v2679, %v2680
      %v2683 = vmax.f32 %v2681, %v2682
      %v2684 = vrot.slane %v2683, 4
      %v2685 = vmax.f32 %v2683, %v2684
      %v2686 = vrot.slane %v2685, 2
      %v2687 = vmax.f32 %v2685, %v2686
      %v2688 = vrot.slane %v2687, 1
      %v2689 = vmax.f32 %v2687, %v2688
      %2690 = vst [vmem:[%s357 + $0x3] sm:$0x1] %v2689
      %v2691 = vadd.f32 %v2673, %v2674
      %v2692 = vadd.f32 %v2691, %v2675
      %v2693 = vadd.f32 %v2692, %v2676
      %v2694 = vrot.slane %v2693, 4
      %v2695 = vadd.f32 %v2693, %v2694
      %v2696 = vrot.slane %v2695, 2
      %v2697 = vadd.f32 %v2695, %v2696
      %v2698 = vrot.slane %v2697, 1
      %v2699 = vadd.f32 %v2697, %v2698
      %v2700 = vmul.f32 %v2699, 0.04347826
      %2701 = vst [vmem:[%s357 + $0x7] sm:$0x1] %v2700
      %p2702 = scmp.lt.s32.totalorder %s21, 1
      %s2703 = scalar_select %p2702, %s21, 1
      %s2704 = smul.addr %s2703, 8
      %s2705 = scalar_lea.vmem %s10, %s2704
      // Predicated region
      $region61: #{musicnn_forward.6} parent=59 // pred_check
        %p2706 = pneg %p254
      $region62: #{musicnn_forward.6} parent=59 // pred_check_branch
        %2708 = sbr.rel (%p2706) target = $region64
      $region63: #{musicnn_forward.6} parent=59 // pred_region
        _
      $region64: #{musicnn_forward.6} parent=59 // pred_fallthru
        _
    $region60: #{musicnn_forward.6} parent=5 // pred_fallthru
      _
    %p2709 = scmp.le.s32.totalorder 2, %s16
    // Predicated region
    $region65: #{musicnn_forward.6} parent=5 // pred_check
      %p2710 = pneg %p2709
    $region66: #{musicnn_forward.6} parent=5 // pred_check_branch
      %2712 = sbr.rel (%p2710) target = $region68
    $region67: #{musicnn_forward.6} parent=5 // pred_region
      %s2713 = ssub.s32 %s16, 2
      // Predicated region
      $region69: #{musicnn_forward.6} parent=67 // pred_check
        %p2714 = pneg %p260
      $region70: #{musicnn_forward.6} parent=67 // pred_check_branch
        %2716 = sbr.rel (%p2714) target = $region72
      $region71: #{musicnn_forward.6} parent=67 // pred_region
        %p2717 = scmp.lt.s32.totalorder %s22, 1
        %s2718 = scalar_select %p2717, %s22, 1
        %s2719 = smul.addr %s2718, 8
        %s2720 = scalar_lea.vmem %s10, %s2719
      $region72: #{musicnn_forward.6} parent=67 // pred_fallthru
        _
    $region68: #{musicnn_forward.6} parent=5 // pred_fallthru
      _
  $region6: #{musicnn_forward.6} parent=0 // loop_footer
    %s20 = sadd.s32 1, %s16
  $region7: #{musicnn_forward.6} parent=0 // loop_footer_branch
    %15 = sbr.rel target = $region3
  $region8: #{musicnn_forward.6} parent=0 // loop_exit
    _

</llo_original>
